<compile_context>
chip_gen: v5e
topology: v5e:2x2
jax: 0.10.0
libtpu: 0.0.40
codegen_flags: <defaults>
</compile_context>

<pallas_src>
import functools
from dataclasses import dataclass, field
from typing import List

import jax
import jax.numpy as jnp
from jax.experimental import pallas as pl
from jax.experimental.pallas import tpu as pltpu

BN_EPS = 1e-5


# ---------------------------------------------------------------------------
# Fused kernel building blocks (operate on register values inside the kernel)
# ---------------------------------------------------------------------------

def _conv_chain(h, layers):
    """Conv1d(k=1)/Linear layers (BN folded into W, b) + ReLU; one lane-dense
    MXU matmul per layer, shared across the whole batch."""
    for w_ref, b_ref in layers:
        h = jnp.maximum(
            jnp.dot(w_ref[...], h, preferred_element_type=jnp.float32) + b_ref[...],
            0.0)
    return h


def _max_pool(h, batch, npts):
    """MaxPool1d(num_points) on point-major columns (col = n*B + b).

    Vectorized as a running max over N contiguous (C, B) lane slices; the result
    stays in vregs (no per-batch width-1 stores, no scratch round trip)."""
    g = h[:, 0:batch]
    for n in range(1, npts):
        g = jnp.maximum(g, h[:, n * batch:(n + 1) * batch])
    return g                                                 # (C, B)


def _tnet(h, conv, lin, fc_w_ref, fc_b_ref, batch, npts):
    """T-net: conv chain -> max pool -> linear chain -> fc_out.

    fc_b already contains the "+ identity" fold.  Returns T flattened row-major
    per batch column: t_cols[i*d + j, b] = T_b[i, j]."""
    e = _conv_chain(h, conv)
    g = _max_pool(e, batch, npts)
    g = _conv_chain(g, lin)
    return jnp.dot(fc_w_ref[...], g, preferred_element_type=jnp.float32) + fc_b_ref[...]


def _apply_transform(t_cols, h, d, sel):
    """Per-batch transform x' = T_b^T @ x_b  (== torch.bmm(x^T, T).transpose(2,1)).

    sel[b, n*B + b'] = [b == b'] expands the (d*d, B) coefficients along the N*B
    lane axis with a single tiny matmul; then the transform is d VPU FMA steps.
    Consuming rows j*d:(j+1)*d of the row-major T gives column j of T^T, so the
    transpose is free (no permute/reshape anywhere)."""
    t_lanes = jnp.dot(t_cols, sel, preferred_element_type=jnp.float32)  # (d*d, N*B)
    acc = None
    for j in range(d):
        coeff = t_lanes[j * d:(j + 1) * d, :]     # (d, N*B): coeff[i, col] = T_b[j, i]
        term = coeff * h[j:j + 1, :]              # broadcast row j of x over output rows
        acc = term if acc is None else acc + term
    return acc                                    # (d, N*B)


def _make_fused_kernel(*, n_it_conv, n_it_lin, n_ft_conv, n_ft_lin,
                       n_inp, n_feat, d_in, d_feat, batch, npts, use_tnet):
    """Build the single fused PointNetEncoder kernel for a static layer layout.

    Ref order (use_tnet=True):
      sel, x,
      input_tnet  [conv (w,b)*], [lin (w,b)*], fc_w, fc_b,
      post_inp    [(w,b)*],
      feature_tnet[conv (w,b)*], [lin (w,b)*], fc_w, fc_b,
      post_feat   [(w,b)*],
      out (C_last, B)
    """

    def take_pairs(refs, pos, n):
        return [(refs[pos + 2 * i], refs[pos + 2 * i + 1]) for i in range(n)], pos + 2 * n

    def kernel(*refs):
        pos = 0
        if use_tnet:
            sel_ref = refs[pos]; pos += 1
        x_ref = refs[pos]; pos += 1
        if use_tnet:
            it_conv, pos = take_pairs(refs, pos, n_it_conv)
            it_lin, pos = take_pairs(refs, pos, n_it_lin)
            it_fcw, it_fcb = refs[pos], refs[pos + 1]; pos += 2
        post_inp, pos = take_pairs(refs, pos, n_inp)
        if use_tnet:
            ft_conv, pos = take_pairs(refs, pos, n_ft_conv)
            ft_lin, pos = take_pairs(refs, pos, n_ft_lin)
            ft_fcw, ft_fcb = refs[pos], refs[pos + 1]; pos += 2
        post_feat, pos = take_pairs(refs, pos, n_feat)
        out_ref = refs[pos]

        h = x_ref[...]                                       # (C0, N*B) point-major
        if use_tnet:
            sel = sel_ref[...]                               # (B, N*B)
            t_in = _tnet(h, it_conv, it_lin, it_fcw, it_fcb, batch, npts)
            h = _apply_transform(t_in, h, d_in, sel)
        h = _conv_chain(h, post_inp)
        if use_tnet:
            t_ft = _tnet(h, ft_conv, ft_lin, ft_fcw, ft_fcb, batch, npts)
            h = _apply_transform(t_ft, h, d_feat, sel)
        h = _conv_chain(h, post_feat)
        out_ref[...] = _max_pool(h, batch, npts)             # fused MaxPool1d -> (C_last, B)

    return kernel


# ---------------------------------------------------------------------------
# Config + deterministic parameter initialization (BN folded at setup time)
# ---------------------------------------------------------------------------

@dataclass
class PointNetConfig:
    num_points: int = 16
    input_dim: int = 3
    use_tnet: bool = True
    encoder_post_inp_dims: List[int] = field(default_factory=lambda: [3, 16, 16])
    encoder_post_feat_dims: List[int] = field(default_factory=lambda: [16, 32, 64])
    encoder_dims: List[int] = field(default_factory=lambda: [3, 32, 64])   # [0] replaced per T-net
    linear_dims: List[int] = field(default_factory=lambda: [64, 32, 16])


def _fold_bn(w, b, gamma, beta, mean, var):
    scale = gamma / jnp.sqrt(var + BN_EPS)
    return w * scale[:, None], (b - mean) * scale + beta


def init_block(key, c_in, c_out):
    """Conv1d(k=1)/Linear + BatchNorm1d (inference running stats) folded to (W, b)."""
    ks = jax.random.split(key, 6)
    w = jax.random.normal(ks[0], (c_out, c_in), jnp.float32) * 0.2
    b = jax.random.normal(ks[1], (c_out,), jnp.float32) * 0.1
    gamma = jax.random.uniform(ks[2], (c_out,), jnp.float32, minval=0.5, maxval=1.5)
    beta = jax.random.normal(ks[3], (c_out,), jnp.float32) * 0.1
    mean = jax.random.normal(ks[4], (c_out,), jnp.float32) * 0.1
    var = jax.random.uniform(ks[5], (c_out,), jnp.float32, minval=0.5, maxval=1.5)
    w_eff, b_eff = _fold_bn(w, b, gamma, beta, mean, var)
    return w_eff, b_eff.reshape(c_out, 1)


def _chain_init(key, dims):
    ks = jax.random.split(key, len(dims) - 1)
    return [init_block(ks[i], dims[i], dims[i + 1]) for i in range(len(dims) - 1)]


def init_tnet(key, enc_dims, linear_dims, d):
    k_conv, k_lin, k_fc = jax.random.split(key, 3)
    conv = _chain_init(k_conv, enc_dims)
    lin = _chain_init(k_lin, linear_dims)
    k1, k2 = jax.random.split(k_fc)
    d2 = d * d
    fc_w = jax.random.normal(k1, (d2, linear_dims[-1]), jnp.float32) * 0.1
    fc_b = jax.random.normal(k2, (d2,), jnp.float32) * 0.05
    # "x = x + identity" folded into the fc_out bias (constant per batch row).
    fc_b = fc_b + jnp.eye(d, dtype=jnp.float32).reshape(-1)
    return {"conv": conv, "lin": lin, "fc_w": fc_w, "fc_b": fc_b.reshape(d2, 1)}


def init_pointnet_encoder(key, cfg: PointNetConfig):
    # Dims computed locally -- cfg is NOT mutated (review correctness note).
    post_inp_dims = [cfg.input_dim] + list(cfg.encoder_post_inp_dims[1:])
    post_feat_dims = list(cfg.encoder_post_feat_dims)
    assert post_feat_dims[0] == post_inp_dims[-1]
    assert cfg.linear_dims[0] == cfg.encoder_dims[-1]

    k_inp, k_feat, k_tin, k_tfeat = jax.random.split(key, 4)
    params = {
        "post_inp": _chain_init(k_inp, post_inp_dims),
        "post_feat": _chain_init(k_feat, post_feat_dims),
    }
    if cfg.use_tnet:
        inp_enc_dims = [post_inp_dims[0]] + list(cfg.encoder_dims[1:])
        feat_enc_dims = [post_feat_dims[0]] + list(cfg.encoder_dims[1:])
        params["input_tnet"] = init_tnet(k_tin, inp_enc_dims, cfg.linear_dims,
                                         post_inp_dims[0])
        params["feature_tnet"] = init_tnet(k_tfeat, feat_enc_dims, cfg.linear_dims,
                                           post_feat_dims[0])
    return params


# ---------------------------------------------------------------------------
# Forward pass: one pallas_call
# ---------------------------------------------------------------------------

def _vmem_spec():
    return pl.BlockSpec(memory_space=pltpu.MemorySpace.VMEM)


def _cost_estimate(params, use_tnet, batch, npts):
    nb = batch * npts

    def chain_flops(layers, cols):
        return sum(2 * w.shape[0] * w.shape[1] * cols for w, _ in layers)

    flops = chain_flops(params["post_inp"], nb) + chain_flops(params["post_feat"], nb)
    if use_tnet:
        for name in ("input_tnet", "feature_tnet"):
            t = params[name]
            d2, f = t["fc_w"].shape
            flops += chain_flops(t["conv"], nb) + chain_flops(t["lin"], batch)
            flops += 2 * d2 * f * batch        # fc_out
            flops += 2 * d2 * batch * nb       # selector lane expansion
            flops += 2 * d2 * nb               # transform FMAs
    return int(flops)


def pointnet_encoder_forward(params, x):
    """x: (B, input_dim, num_points) -> (B, encoder_post_feat_dims[-1])."""
    B, C0, N = x.shape
    use_tnet = "input_tnet" in params

    # Point-major column layout: column n*B + b holds x[b, :, n].  Every layer is
    # then one lane-dense matmul and the max-pool is a running max over N
    # contiguous (C, B) lane slices.
    x2 = jnp.transpose(x, (1, 2, 0)).reshape(C0, N * B).astype(jnp.float32)

    args = []
    if use_tnet:
        # Selector expanding per-batch T coefficients along the N*B lane axis.
        sel = jnp.tile(jnp.eye(B, dtype=jnp.float32), (1, N))   # (B, N*B)
        args.append(sel)
    args.append(x2)

    def add_pairs(layers):
        for w, b in layers:
            args.append(w)
            args.append(b)

    if use_tnet:
        it = params["input_tnet"]
        add_pairs(it["conv"]); add_pairs(it["lin"]); args += [it["fc_w"], it["fc_b"]]
    add_pairs(params["post_inp"])
    if use_tnet:
        ft = params["feature_tnet"]
        add_pairs(ft["conv"]); add_pairs(ft["lin"]); args += [ft["fc_w"], ft["fc_b"]]
    add_pairs(params["post_feat"])

    c_last = params["post_feat"][-1][0].shape[0]
    d_in = C0
    d_feat = params["post_inp"][-1][0].shape[0]

    kernel = _make_fused_kernel(
        n_it_conv=len(params["input_tnet"]["conv"]) if use_tnet else 0,
        n_it_lin=len(params["input_tnet"]["lin"]) if use_tnet else 0,
        n_ft_conv=len(params["feature_tnet"]["conv"]) if use_tnet else 0,
        n_ft_lin=len(params["feature_tnet"]["lin"]) if use_tnet else 0,
        n_inp=len(params["post_inp"]),
        n_feat=len(params["post_feat"]),
        d_in=d_in, d_feat=d_feat, batch=B, npts=N, use_tnet=use_tnet)

    flops = _cost_estimate(params, use_tnet, B, N)
    bytes_accessed = int(sum(a.size for a in args) * 4 + c_last * B * 4)

    out_cols = pl.pallas_call(
        kernel,
        out_shape=jax.ShapeDtypeStruct((c_last, B), jnp.float32),
        in_specs=[_vmem_spec()] * len(args),
        out_specs=_vmem_spec(),
        cost_estimate=pl.CostEstimate(flops=flops, transcendentals=0,
                                      bytes_accessed=bytes_accessed),
    )(*args)

    return out_cols.T                                          # (B, C_last)


# ---------------------------------------------------------------------------

if __name__ == "__main__":
    cfg = PointNetConfig()
    key = jax.random.PRNGKey(0)
    k_params, k_x = jax.random.split(key)

    params = init_pointnet_encoder(k_params, cfg)

    batch = 2
    x = jax.random.normal(k_x, (batch, cfg.input_dim, cfg.num_points), jnp.float32)

    fwd = jax.jit(pointnet_encoder_forward)
    out = jax.block_until_ready(fwd(params, x))

    assert out.shape == (batch, cfg.encoder_post_feat_dims[-1]), out.shape
    assert out.dtype == jnp.float32
    assert bool(jnp.all(jnp.isfinite(out)))
    print("KERNEL_OK")
</pallas_src>

<mosaic_0001>
module attributes {stable_mosaic.version = 11 : i64} {
  func.func @kernel(%arg0: memref<2x32xf32, #tpu.memory_space<vmem>>, %arg1: memref<3x32xf32, #tpu.memory_space<vmem>>, %arg2: memref<32x3xf32, #tpu.memory_space<vmem>>, %arg3: memref<32x1xf32, #tpu.memory_space<vmem>>, %arg4: memref<64x32xf32, #tpu.memory_space<vmem>>, %arg5: memref<64x1xf32, #tpu.memory_space<vmem>>, %arg6: memref<32x64xf32, #tpu.memory_space<vmem>>, %arg7: memref<32x1xf32, #tpu.memory_space<vmem>>, %arg8: memref<16x32xf32, #tpu.memory_space<vmem>>, %arg9: memref<16x1xf32, #tpu.memory_space<vmem>>, %arg10: memref<9x16xf32, #tpu.memory_space<vmem>>, %arg11: memref<9x1xf32, #tpu.memory_space<vmem>>, %arg12: memref<16x3xf32, #tpu.memory_space<vmem>>, %arg13: memref<16x1xf32, #tpu.memory_space<vmem>>, %arg14: memref<16x16xf32, #tpu.memory_space<vmem>>, %arg15: memref<16x1xf32, #tpu.memory_space<vmem>>, %arg16: memref<32x16xf32, #tpu.memory_space<vmem>>, %arg17: memref<32x1xf32, #tpu.memory_space<vmem>>, %arg18: memref<64x32xf32, #tpu.memory_space<vmem>>, %arg19: memref<64x1xf32, #tpu.memory_space<vmem>>, %arg20: memref<32x64xf32, #tpu.memory_space<vmem>>, %arg21: memref<32x1xf32, #tpu.memory_space<vmem>>, %arg22: memref<16x32xf32, #tpu.memory_space<vmem>>, %arg23: memref<16x1xf32, #tpu.memory_space<vmem>>, %arg24: memref<256x16xf32, #tpu.memory_space<vmem>>, %arg25: memref<256x1xf32, #tpu.memory_space<vmem>>, %arg26: memref<32x16xf32, #tpu.memory_space<vmem>>, %arg27: memref<32x1xf32, #tpu.memory_space<vmem>>, %arg28: memref<64x32xf32, #tpu.memory_space<vmem>>, %arg29: memref<64x1xf32, #tpu.memory_space<vmem>>, %arg30: memref<64x2xf32, #tpu.memory_space<vmem>>) attributes {dimension_semantics = [], scalar_prefetch = 0 : i64, scratch_operands = 0 : i64, tpu.core_type = #tpu.core_type<tc>} {
    %c0 = arith.constant 0 : index
    %c0_0 = arith.constant 0 : index
    %0 = vector.load %arg1[%c0, %c0_0] : memref<3x32xf32, #tpu.memory_space<vmem>>, vector<3x32xf32>
    %c0_1 = arith.constant 0 : index
    %c0_2 = arith.constant 0 : index
    %1 = vector.load %arg0[%c0_1, %c0_2] : memref<2x32xf32, #tpu.memory_space<vmem>>, vector<2x32xf32>
    %c0_3 = arith.constant 0 : index
    %c0_4 = arith.constant 0 : index
    %2 = vector.load %arg2[%c0_3, %c0_4] : memref<32x3xf32, #tpu.memory_space<vmem>>, vector<32x3xf32>
    %cst = arith.constant dense<0.000000e+00> : vector<32x32xf32>
    %3 = tpu.matmul %2, %0, %cst {dimension_numbers = #tpu.dot_dimension_numbers<[1], [0], [0], [1], [0, 0, 1, 1], [], []>} : vector<32x3xf32>, vector<3x32xf32>, vector<32x32xf32> -> vector<32x32xf32>
    %c0_5 = arith.constant 0 : index
    %c0_6 = arith.constant 0 : index
    %4 = vector.load %arg3[%c0_5, %c0_6] : memref<32x1xf32, #tpu.memory_space<vmem>>, vector<32x1xf32>
    %5 = vector.broadcast %4 : vector<32x1xf32> to vector<32x32xf32>
    %6 = arith.addf %3, %5 : vector<32x32xf32>
    %cst_7 = arith.constant 0.000000e+00 : f32
    %7 = vector.broadcast %cst_7 : f32 to vector<32x32xf32>
    %8 = arith.maximumf %6, %7 : vector<32x32xf32>
    %c0_8 = arith.constant 0 : index
    %c0_9 = arith.constant 0 : index
    %9 = vector.load %arg4[%c0_8, %c0_9] : memref<64x32xf32, #tpu.memory_space<vmem>>, vector<64x32xf32>
    %cst_10 = arith.constant dense<0.000000e+00> : vector<64x32xf32>
    %10 = tpu.matmul %9, %8, %cst_10 {dimension_numbers = #tpu.dot_dimension_numbers<[1], [0], [0], [1], [0, 0, 1, 1], [], []>} : vector<64x32xf32>, vector<32x32xf32>, vector<64x32xf32> -> vector<64x32xf32>
    %c0_11 = arith.constant 0 : index
    %c0_12 = arith.constant 0 : index
    %11 = vector.load %arg5[%c0_11, %c0_12] : memref<64x1xf32, #tpu.memory_space<vmem>>, vector<64x1xf32>
    %12 = vector.broadcast %11 : vector<64x1xf32> to vector<64x32xf32>
    %13 = arith.addf %10, %12 : vector<64x32xf32>
    %cst_13 = arith.constant 0.000000e+00 : f32
    %14 = vector.broadcast %cst_13 : f32 to vector<64x32xf32>
    %15 = arith.maximumf %13, %14 : vector<64x32xf32>
    %16 = vector.extract_strided_slice %15 {offsets = [0, 0], sizes = [64, 2], strides = [1, 1]} : vector<64x32xf32> to vector<64x2xf32>
    %17 = vector.extract_strided_slice %15 {offsets = [0, 2], sizes = [64, 2], strides = [1, 1]} : vector<64x32xf32> to vector<64x2xf32>
    %18 = arith.maximumf %16, %17 : vector<64x2xf32>
    %19 = vector.extract_strided_slice %15 {offsets = [0, 4], sizes = [64, 2], strides = [1, 1]} : vector<64x32xf32> to vector<64x2xf32>
    %20 = arith.maximumf %18, %19 : vector<64x2xf32>
    %21 = vector.extract_strided_slice %15 {offsets = [0, 6], sizes = [64, 2], strides = [1, 1]} : vector<64x32xf32> to vector<64x2xf32>
    %22 = arith.maximumf %20, %21 : vector<64x2xf32>
    %23 = vector.extract_strided_slice %15 {offsets = [0, 8], sizes = [64, 2], strides = [1, 1]} : vector<64x32xf32> to vector<64x2xf32>
    %24 = arith.maximumf %22, %23 : vector<64x2xf32>
    %25 = vector.extract_strided_slice %15 {offsets = [0, 10], sizes = [64, 2], strides = [1, 1]} : vector<64x32xf32> to vector<64x2xf32>
    %26 = arith.maximumf %24, %25 : vector<64x2xf32>
    %27 = vector.extract_strided_slice %15 {offsets = [0, 12], sizes = [64, 2], strides = [1, 1]} : vector<64x32xf32> to vector<64x2xf32>
    %28 = arith.maximumf %26, %27 : vector<64x2xf32>
    %29 = vector.extract_strided_slice %15 {offsets = [0, 14], sizes = [64, 2], strides = [1, 1]} : vector<64x32xf32> to vector<64x2xf32>
    %30 = arith.maximumf %28, %29 : vector<64x2xf32>
    %31 = vector.extract_strided_slice %15 {offsets = [0, 16], sizes = [64, 2], strides = [1, 1]} : vector<64x32xf32> to vector<64x2xf32>
    %32 = arith.maximumf %30, %31 : vector<64x2xf32>
    %33 = vector.extract_strided_slice %15 {offsets = [0, 18], sizes = [64, 2], strides = [1, 1]} : vector<64x32xf32> to vector<64x2xf32>
    %34 = arith.maximumf %32, %33 : vector<64x2xf32>
    %35 = vector.extract_strided_slice %15 {offsets = [0, 20], sizes = [64, 2], strides = [1, 1]} : vector<64x32xf32> to vector<64x2xf32>
    %36 = arith.maximumf %34, %35 : vector<64x2xf32>
    %37 = vector.extract_strided_slice %15 {offsets = [0, 22], sizes = [64, 2], strides = [1, 1]} : vector<64x32xf32> to vector<64x2xf32>
    %38 = arith.maximumf %36, %37 : vector<64x2xf32>
    %39 = vector.extract_strided_slice %15 {offsets = [0, 24], sizes = [64, 2], strides = [1, 1]} : vector<64x32xf32> to vector<64x2xf32>
    %40 = arith.maximumf %38, %39 : vector<64x2xf32>
    %41 = vector.extract_strided_slice %15 {offsets = [0, 26], sizes = [64, 2], strides = [1, 1]} : vector<64x32xf32> to vector<64x2xf32>
    %42 = arith.maximumf %40, %41 : vector<64x2xf32>
    %43 = vector.extract_strided_slice %15 {offsets = [0, 28], sizes = [64, 2], strides = [1, 1]} : vector<64x32xf32> to vector<64x2xf32>
    %44 = arith.maximumf %42, %43 : vector<64x2xf32>
    %45 = vector.extract_strided_slice %15 {offsets = [0, 30], sizes = [64, 2], strides = [1, 1]} : vector<64x32xf32> to vector<64x2xf32>
    %46 = arith.maximumf %44, %45 : vector<64x2xf32>
    %c0_14 = arith.constant 0 : index
    %c0_15 = arith.constant 0 : index
    %47 = vector.load %arg6[%c0_14, %c0_15] : memref<32x64xf32, #tpu.memory_space<vmem>>, vector<32x64xf32>
    %cst_16 = arith.constant dense<0.000000e+00> : vector<32x2xf32>
    %48 = tpu.matmul %47, %46, %cst_16 {dimension_numbers = #tpu.dot_dimension_numbers<[1], [0], [0], [1], [0, 0, 1, 1], [], []>} : vector<32x64xf32>, vector<64x2xf32>, vector<32x2xf32> -> vector<32x2xf32>
    %c0_17 = arith.constant 0 : index
    %c0_18 = arith.constant 0 : index
    %49 = vector.load %arg7[%c0_17, %c0_18] : memref<32x1xf32, #tpu.memory_space<vmem>>, vector<32x1xf32>
    %50 = vector.broadcast %49 : vector<32x1xf32> to vector<32x2xf32>
    %51 = arith.addf %48, %50 : vector<32x2xf32>
    %cst_19 = arith.constant 0.000000e+00 : f32
    %52 = vector.broadcast %cst_19 : f32 to vector<32x2xf32>
    %53 = arith.maximumf %51, %52 : vector<32x2xf32>
    %c0_20 = arith.constant 0 : index
    %c0_21 = arith.constant 0 : index
    %54 = vector.load %arg8[%c0_20, %c0_21] : memref<16x32xf32, #tpu.memory_space<vmem>>, vector<16x32xf32>
    %cst_22 = arith.constant dense<0.000000e+00> : vector<16x2xf32>
    %55 = tpu.matmul %54, %53, %cst_22 {dimension_numbers = #tpu.dot_dimension_numbers<[1], [0], [0], [1], [0, 0, 1, 1], [], []>} : vector<16x32xf32>, vector<32x2xf32>, vector<16x2xf32> -> vector<16x2xf32>
    %c0_23 = arith.constant 0 : index
    %c0_24 = arith.constant 0 : index
    %56 = vector.load %arg9[%c0_23, %c0_24] : memref<16x1xf32, #tpu.memory_space<vmem>>, vector<16x1xf32>
    %57 = vector.broadcast %56 : vector<16x1xf32> to vector<16x2xf32>
    %58 = arith.addf %55, %57 : vector<16x2xf32>
    %cst_25 = arith.constant 0.000000e+00 : f32
    %59 = vector.broadcast %cst_25 : f32 to vector<16x2xf32>
    %60 = arith.maximumf %58, %59 : vector<16x2xf32>
    %c0_26 = arith.constant 0 : index
    %c0_27 = arith.constant 0 : index
    %61 = vector.load %arg10[%c0_26, %c0_27] : memref<9x16xf32, #tpu.memory_space<vmem>>, vector<9x16xf32>
    %cst_28 = arith.constant dense<0.000000e+00> : vector<9x2xf32>
    %62 = tpu.matmul %61, %60, %cst_28 {dimension_numbers = #tpu.dot_dimension_numbers<[1], [0], [0], [1], [0, 0, 1, 1], [], []>} : vector<9x16xf32>, vector<16x2xf32>, vector<9x2xf32> -> vector<9x2xf32>
    %c0_29 = arith.constant 0 : index
    %c0_30 = arith.constant 0 : index
    %63 = vector.load %arg11[%c0_29, %c0_30] : memref<9x1xf32, #tpu.memory_space<vmem>>, vector<9x1xf32>
    %64 = vector.broadcast %63 : vector<9x1xf32> to vector<9x2xf32>
    %65 = arith.addf %62, %64 : vector<9x2xf32>
    %cst_31 = arith.constant dense<0.000000e+00> : vector<9x32xf32>
    %66 = tpu.matmul %65, %1, %cst_31 {dimension_numbers = #tpu.dot_dimension_numbers<[1], [0], [0], [1], [0, 0, 1, 1], [], []>} : vector<9x2xf32>, vector<2x32xf32>, vector<9x32xf32> -> vector<9x32xf32>
    %67 = vector.extract_strided_slice %66 {offsets = [0, 0], sizes = [3, 32], strides = [1, 1]} : vector<9x32xf32> to vector<3x32xf32>
    %68 = vector.extract_strided_slice %0 {offsets = [0, 0], sizes = [1, 32], strides = [1, 1]} : vector<3x32xf32> to vector<1x32xf32>
    %69 = vector.broadcast %68 : vector<1x32xf32> to vector<3x32xf32>
    %70 = arith.mulf %67, %69 : vector<3x32xf32>
    %71 = vector.extract_strided_slice %66 {offsets = [3, 0], sizes = [3, 32], strides = [1, 1]} : vector<9x32xf32> to vector<3x32xf32>
    %72 = vector.extract_strided_slice %0 {offsets = [1, 0], sizes = [1, 32], strides = [1, 1]} : vector<3x32xf32> to vector<1x32xf32>
    %73 = vector.broadcast %72 : vector<1x32xf32> to vector<3x32xf32>
    %74 = arith.mulf %71, %73 : vector<3x32xf32>
    %75 = arith.addf %70, %74 : vector<3x32xf32>
    %76 = vector.extract_strided_slice %66 {offsets = [6, 0], sizes = [3, 32], strides = [1, 1]} : vector<9x32xf32> to vector<3x32xf32>
    %77 = vector.extract_strided_slice %0 {offsets = [2, 0], sizes = [1, 32], strides = [1, 1]} : vector<3x32xf32> to vector<1x32xf32>
    %78 = vector.broadcast %77 : vector<1x32xf32> to vector<3x32xf32>
    %79 = arith.mulf %76, %78 : vector<3x32xf32>
    %80 = arith.addf %75, %79 : vector<3x32xf32>
    %c0_32 = arith.constant 0 : index
    %c0_33 = arith.constant 0 : index
    %81 = vector.load %arg12[%c0_32, %c0_33] : memref<16x3xf32, #tpu.memory_space<vmem>>, vector<16x3xf32>
    %cst_34 = arith.constant dense<0.000000e+00> : vector<16x32xf32>
    %82 = tpu.matmul %81, %80, %cst_34 {dimension_numbers = #tpu.dot_dimension_numbers<[1], [0], [0], [1], [0, 0, 1, 1], [], []>} : vector<16x3xf32>, vector<3x32xf32>, vector<16x32xf32> -> vector<16x32xf32>
    %c0_35 = arith.constant 0 : index
    %c0_36 = arith.constant 0 : index
    %83 = vector.load %arg13[%c0_35, %c0_36] : memref<16x1xf32, #tpu.memory_space<vmem>>, vector<16x1xf32>
    %84 = vector.broadcast %83 : vector<16x1xf32> to vector<16x32xf32>
    %85 = arith.addf %82, %84 : vector<16x32xf32>
    %cst_37 = arith.constant 0.000000e+00 : f32
    %86 = vector.broadcast %cst_37 : f32 to vector<16x32xf32>
    %87 = arith.maximumf %85, %86 : vector<16x32xf32>
    %c0_38 = arith.constant 0 : index
    %c0_39 = arith.constant 0 : index
    %88 = vector.load %arg14[%c0_38, %c0_39] : memref<16x16xf32, #tpu.memory_space<vmem>>, vector<16x16xf32>
    %cst_40 = arith.constant dense<0.000000e+00> : vector<16x32xf32>
    %89 = tpu.matmul %88, %87, %cst_40 {dimension_numbers = #tpu.dot_dimension_numbers<[1], [0], [0], [1], [0, 0, 1, 1], [], []>} : vector<16x16xf32>, vector<16x32xf32>, vector<16x32xf32> -> vector<16x32xf32>
    %c0_41 = arith.constant 0 : index
    %c0_42 = arith.constant 0 : index
    %90 = vector.load %arg15[%c0_41, %c0_42] : memref<16x1xf32, #tpu.memory_space<vmem>>, vector<16x1xf32>
    %91 = vector.broadcast %90 : vector<16x1xf32> to vector<16x32xf32>
    %92 = arith.addf %89, %91 : vector<16x32xf32>
    %cst_43 = arith.constant 0.000000e+00 : f32
    %93 = vector.broadcast %cst_43 : f32 to vector<16x32xf32>
    %94 = arith.maximumf %92, %93 : vector<16x32xf32>
    %c0_44 = arith.constant 0 : index
    %c0_45 = arith.constant 0 : index
    %95 = vector.load %arg16[%c0_44, %c0_45] : memref<32x16xf32, #tpu.memory_space<vmem>>, vector<32x16xf32>
    %cst_46 = arith.constant dense<0.000000e+00> : vector<32x32xf32>
    %96 = tpu.matmul %95, %94, %cst_46 {dimension_numbers = #tpu.dot_dimension_numbers<[1], [0], [0], [1], [0, 0, 1, 1], [], []>} : vector<32x16xf32>, vector<16x32xf32>, vector<32x32xf32> -> vector<32x32xf32>
    %c0_47 = arith.constant 0 : index
    %c0_48 = arith.constant 0 : index
    %97 = vector.load %arg17[%c0_47, %c0_48] : memref<32x1xf32, #tpu.memory_space<vmem>>, vector<32x1xf32>
    %98 = vector.broadcast %97 : vector<32x1xf32> to vector<32x32xf32>
    %99 = arith.addf %96, %98 : vector<32x32xf32>
    %cst_49 = arith.constant 0.000000e+00 : f32
    %100 = vector.broadcast %cst_49 : f32 to vector<32x32xf32>
    %101 = arith.maximumf %99, %100 : vector<32x32xf32>
    %c0_50 = arith.constant 0 : index
    %c0_51 = arith.constant 0 : index
    %102 = vector.load %arg18[%c0_50, %c0_51] : memref<64x32xf32, #tpu.memory_space<vmem>>, vector<64x32xf32>
    %cst_52 = arith.constant dense<0.000000e+00> : vector<64x32xf32>
    %103 = tpu.matmul %102, %101, %cst_52 {dimension_numbers = #tpu.dot_dimension_numbers<[1], [0], [0], [1], [0, 0, 1, 1], [], []>} : vector<64x32xf32>, vector<32x32xf32>, vector<64x32xf32> -> vector<64x32xf32>
    %c0_53 = arith.constant 0 : index
    %c0_54 = arith.constant 0 : index
    %104 = vector.load %arg19[%c0_53, %c0_54] : memref<64x1xf32, #tpu.memory_space<vmem>>, vector<64x1xf32>
    %105 = vector.broadcast %104 : vector<64x1xf32> to vector<64x32xf32>
    %106 = arith.addf %103, %105 : vector<64x32xf32>
    %cst_55 = arith.constant 0.000000e+00 : f32
    %107 = vector.broadcast %cst_55 : f32 to vector<64x32xf32>
    %108 = arith.maximumf %106, %107 : vector<64x32xf32>
    %109 = vector.extract_strided_slice %108 {offsets = [0, 0], sizes = [64, 2], strides = [1, 1]} : vector<64x32xf32> to vector<64x2xf32>
    %110 = vector.extract_strided_slice %108 {offsets = [0, 2], sizes = [64, 2], strides = [1, 1]} : vector<64x32xf32> to vector<64x2xf32>
    %111 = arith.maximumf %109, %110 : vector<64x2xf32>
    %112 = vector.extract_strided_slice %108 {offsets = [0, 4], sizes = [64, 2], strides = [1, 1]} : vector<64x32xf32> to vector<64x2xf32>
    %113 = arith.maximumf %111, %112 : vector<64x2xf32>
    %114 = vector.extract_strided_slice %108 {offsets = [0, 6], sizes = [64, 2], strides = [1, 1]} : vector<64x32xf32> to vector<64x2xf32>
    %115 = arith.maximumf %113, %114 : vector<64x2xf32>
    %116 = vector.extract_strided_slice %108 {offsets = [0, 8], sizes = [64, 2], strides = [1, 1]} : vector<64x32xf32> to vector<64x2xf32>
    %117 = arith.maximumf %115, %116 : vector<64x2xf32>
    %118 = vector.extract_strided_slice %108 {offsets = [0, 10], sizes = [64, 2], strides = [1, 1]} : vector<64x32xf32> to vector<64x2xf32>
    %119 = arith.maximumf %117, %118 : vector<64x2xf32>
    %120 = vector.extract_strided_slice %108 {offsets = [0, 12], sizes = [64, 2], strides = [1, 1]} : vector<64x32xf32> to vector<64x2xf32>
    %121 = arith.maximumf %119, %120 : vector<64x2xf32>
    %122 = vector.extract_strided_slice %108 {offsets = [0, 14], sizes = [64, 2], strides = [1, 1]} : vector<64x32xf32> to vector<64x2xf32>
    %123 = arith.maximumf %121, %122 : vector<64x2xf32>
    %124 = vector.extract_strided_slice %108 {offsets = [0, 16], sizes = [64, 2], strides = [1, 1]} : vector<64x32xf32> to vector<64x2xf32>
    %125 = arith.maximumf %123, %124 : vector<64x2xf32>
    %126 = vector.extract_strided_slice %108 {offsets = [0, 18], sizes = [64, 2], strides = [1, 1]} : vector<64x32xf32> to vector<64x2xf32>
    %127 = arith.maximumf %125, %126 : vector<64x2xf32>
    %128 = vector.extract_strided_slice %108 {offsets = [0, 20], sizes = [64, 2], strides = [1, 1]} : vector<64x32xf32> to vector<64x2xf32>
    %129 = arith.maximumf %127, %128 : vector<64x2xf32>
    %130 = vector.extract_strided_slice %108 {offsets = [0, 22], sizes = [64, 2], strides = [1, 1]} : vector<64x32xf32> to vector<64x2xf32>
    %131 = arith.maximumf %129, %130 : vector<64x2xf32>
    %132 = vector.extract_strided_slice %108 {offsets = [0, 24], sizes = [64, 2], strides = [1, 1]} : vector<64x32xf32> to vector<64x2xf32>
    %133 = arith.maximumf %131, %132 : vector<64x2xf32>
    %134 = vector.extract_strided_slice %108 {offsets = [0, 26], sizes = [64, 2], strides = [1, 1]} : vector<64x32xf32> to vector<64x2xf32>
    %135 = arith.maximumf %133, %134 : vector<64x2xf32>
    %136 = vector.extract_strided_slice %108 {offsets = [0, 28], sizes = [64, 2], strides = [1, 1]} : vector<64x32xf32> to vector<64x2xf32>
    %137 = arith.maximumf %135, %136 : vector<64x2xf32>
    %138 = vector.extract_strided_slice %108 {offsets = [0, 30], sizes = [64, 2], strides = [1, 1]} : vector<64x32xf32> to vector<64x2xf32>
    %139 = arith.maximumf %137, %138 : vector<64x2xf32>
    %c0_56 = arith.constant 0 : index
    %c0_57 = arith.constant 0 : index
    %140 = vector.load %arg20[%c0_56, %c0_57] : memref<32x64xf32, #tpu.memory_space<vmem>>, vector<32x64xf32>
    %cst_58 = arith.constant dense<0.000000e+00> : vector<32x2xf32>
    %141 = tpu.matmul %140, %139, %cst_58 {dimension_numbers = #tpu.dot_dimension_numbers<[1], [0], [0], [1], [0, 0, 1, 1], [], []>} : vector<32x64xf32>, vector<64x2xf32>, vector<32x2xf32> -> vector<32x2xf32>
    %c0_59 = arith.constant 0 : index
    %c0_60 = arith.constant 0 : index
    %142 = vector.load %arg21[%c0_59, %c0_60] : memref<32x1xf32, #tpu.memory_space<vmem>>, vector<32x1xf32>
    %143 = vector.broadcast %142 : vector<32x1xf32> to vector<32x2xf32>
    %144 = arith.addf %141, %143 : vector<32x2xf32>
    %cst_61 = arith.constant 0.000000e+00 : f32
    %145 = vector.broadcast %cst_61 : f32 to vector<32x2xf32>
    %146 = arith.maximumf %144, %145 : vector<32x2xf32>
    %c0_62 = arith.constant 0 : index
    %c0_63 = arith.constant 0 : index
    %147 = vector.load %arg22[%c0_62, %c0_63] : memref<16x32xf32, #tpu.memory_space<vmem>>, vector<16x32xf32>
    %cst_64 = arith.constant dense<0.000000e+00> : vector<16x2xf32>
    %148 = tpu.matmul %147, %146, %cst_64 {dimension_numbers = #tpu.dot_dimension_numbers<[1], [0], [0], [1], [0, 0, 1, 1], [], []>} : vector<16x32xf32>, vector<32x2xf32>, vector<16x2xf32> -> vector<16x2xf32>
    %c0_65 = arith.constant 0 : index
    %c0_66 = arith.constant 0 : index
    %149 = vector.load %arg23[%c0_65, %c0_66] : memref<16x1xf32, #tpu.memory_space<vmem>>, vector<16x1xf32>
    %150 = vector.broadcast %149 : vector<16x1xf32> to vector<16x2xf32>
    %151 = arith.addf %148, %150 : vector<16x2xf32>
    %cst_67 = arith.constant 0.000000e+00 : f32
    %152 = vector.broadcast %cst_67 : f32 to vector<16x2xf32>
    %153 = arith.maximumf %151, %152 : vector<16x2xf32>
    %c0_68 = arith.constant 0 : index
    %c0_69 = arith.constant 0 : index
    %154 = vector.load %arg24[%c0_68, %c0_69] : memref<256x16xf32, #tpu.memory_space<vmem>>, vector<256x16xf32>
    %cst_70 = arith.constant dense<0.000000e+00> : vector<256x2xf32>
    %155 = tpu.matmul %154, %153, %cst_70 {dimension_numbers = #tpu.dot_dimension_numbers<[1], [0], [0], [1], [0, 0, 1, 1], [], []>} : vector<256x16xf32>, vector<16x2xf32>, vector<256x2xf32> -> vector<256x2xf32>
    %c0_71 = arith.constant 0 : index
    %c0_72 = arith.constant 0 : index
    %156 = vector.load %arg25[%c0_71, %c0_72] : memref<256x1xf32, #tpu.memory_space<vmem>>, vector<256x1xf32>
    %157 = vector.broadcast %156 : vector<256x1xf32> to vector<256x2xf32>
    %158 = arith.addf %155, %157 : vector<256x2xf32>
    %cst_73 = arith.constant dense<0.000000e+00> : vector<256x32xf32>
    %159 = tpu.matmul %158, %1, %cst_73 {dimension_numbers = #tpu.dot_dimension_numbers<[1], [0], [0], [1], [0, 0, 1, 1], [], []>} : vector<256x2xf32>, vector<2x32xf32>, vector<256x32xf32> -> vector<256x32xf32>
    %160 = vector.extract_strided_slice %159 {offsets = [0, 0], sizes = [16, 32], strides = [1, 1]} : vector<256x32xf32> to vector<16x32xf32>
    %161 = vector.extract_strided_slice %94 {offsets = [0, 0], sizes = [1, 32], strides = [1, 1]} : vector<16x32xf32> to vector<1x32xf32>
    %162 = vector.broadcast %161 : vector<1x32xf32> to vector<16x32xf32>
    %163 = arith.mulf %160, %162 : vector<16x32xf32>
    %164 = vector.extract_strided_slice %159 {offsets = [16, 0], sizes = [16, 32], strides = [1, 1]} : vector<256x32xf32> to vector<16x32xf32>
    %165 = vector.extract_strided_slice %94 {offsets = [1, 0], sizes = [1, 32], strides = [1, 1]} : vector<16x32xf32> to vector<1x32xf32>
    %166 = vector.broadcast %165 : vector<1x32xf32> to vector<16x32xf32>
    %167 = arith.mulf %164, %166 : vector<16x32xf32>
    %168 = arith.addf %163, %167 : vector<16x32xf32>
    %169 = vector.extract_strided_slice %159 {offsets = [32, 0], sizes = [16, 32], strides = [1, 1]} : vector<256x32xf32> to vector<16x32xf32>
    %170 = vector.extract_strided_slice %94 {offsets = [2, 0], sizes = [1, 32], strides = [1, 1]} : vector<16x32xf32> to vector<1x32xf32>
    %171 = vector.broadcast %170 : vector<1x32xf32> to vector<16x32xf32>
    %172 = arith.mulf %169, %171 : vector<16x32xf32>
    %173 = arith.addf %168, %172 : vector<16x32xf32>
    %174 = vector.extract_strided_slice %159 {offsets = [48, 0], sizes = [16, 32], strides = [1, 1]} : vector<256x32xf32> to vector<16x32xf32>
    %175 = vector.extract_strided_slice %94 {offsets = [3, 0], sizes = [1, 32], strides = [1, 1]} : vector<16x32xf32> to vector<1x32xf32>
    %176 = vector.broadcast %175 : vector<1x32xf32> to vector<16x32xf32>
    %177 = arith.mulf %174, %176 : vector<16x32xf32>
    %178 = arith.addf %173, %177 : vector<16x32xf32>
    %179 = vector.extract_strided_slice %159 {offsets = [64, 0], sizes = [16, 32], strides = [1, 1]} : vector<256x32xf32> to vector<16x32xf32>
    %180 = vector.extract_strided_slice %94 {offsets = [4, 0], sizes = [1, 32], strides = [1, 1]} : vector<16x32xf32> to vector<1x32xf32>
    %181 = vector.broadcast %180 : vector<1x32xf32> to vector<16x32xf32>
    %182 = arith.mulf %179, %181 : vector<16x32xf32>
    %183 = arith.addf %178, %182 : vector<16x32xf32>
    %184 = vector.extract_strided_slice %159 {offsets = [80, 0], sizes = [16, 32], strides = [1, 1]} : vector<256x32xf32> to vector<16x32xf32>
    %185 = vector.extract_strided_slice %94 {offsets = [5, 0], sizes = [1, 32], strides = [1, 1]} : vector<16x32xf32> to vector<1x32xf32>
    %186 = vector.broadcast %185 : vector<1x32xf32> to vector<16x32xf32>
    %187 = arith.mulf %184, %186 : vector<16x32xf32>
    %188 = arith.addf %183, %187 : vector<16x32xf32>
    %189 = vector.extract_strided_slice %159 {offsets = [96, 0], sizes = [16, 32], strides = [1, 1]} : vector<256x32xf32> to vector<16x32xf32>
    %190 = vector.extract_strided_slice %94 {offsets = [6, 0], sizes = [1, 32], strides = [1, 1]} : vector<16x32xf32> to vector<1x32xf32>
    %191 = vector.broadcast %190 : vector<1x32xf32> to vector<16x32xf32>
    %192 = arith.mulf %189, %191 : vector<16x32xf32>
    %193 = arith.addf %188, %192 : vector<16x32xf32>
    %194 = vector.extract_strided_slice %159 {offsets = [112, 0], sizes = [16, 32], strides = [1, 1]} : vector<256x32xf32> to vector<16x32xf32>
    %195 = vector.extract_strided_slice %94 {offsets = [7, 0], sizes = [1, 32], strides = [1, 1]} : vector<16x32xf32> to vector<1x32xf32>
    %196 = vector.broadcast %195 : vector<1x32xf32> to vector<16x32xf32>
    %197 = arith.mulf %194, %196 : vector<16x32xf32>
    %198 = arith.addf %193, %197 : vector<16x32xf32>
    %199 = vector.extract_strided_slice %159 {offsets = [128, 0], sizes = [16, 32], strides = [1, 1]} : vector<256x32xf32> to vector<16x32xf32>
    %200 = vector.extract_strided_slice %94 {offsets = [8, 0], sizes = [1, 32], strides = [1, 1]} : vector<16x32xf32> to vector<1x32xf32>
    %201 = vector.broadcast %200 : vector<1x32xf32> to vector<16x32xf32>
    %202 = arith.mulf %199, %201 : vector<16x32xf32>
    %203 = arith.addf %198, %202 : vector<16x32xf32>
    %204 = vector.extract_strided_slice %159 {offsets = [144, 0], sizes = [16, 32], strides = [1, 1]} : vector<256x32xf32> to vector<16x32xf32>
    %205 = vector.extract_strided_slice %94 {offsets = [9, 0], sizes = [1, 32], strides = [1, 1]} : vector<16x32xf32> to vector<1x32xf32>
    %206 = vector.broadcast %205 : vector<1x32xf32> to vector<16x32xf32>
    %207 = arith.mulf %204, %206 : vector<16x32xf32>
    %208 = arith.addf %203, %207 : vector<16x32xf32>
    %209 = vector.extract_strided_slice %159 {offsets = [160, 0], sizes = [16, 32], strides = [1, 1]} : vector<256x32xf32> to vector<16x32xf32>
    %210 = vector.extract_strided_slice %94 {offsets = [10, 0], sizes = [1, 32], strides = [1, 1]} : vector<16x32xf32> to vector<1x32xf32>
    %211 = vector.broadcast %210 : vector<1x32xf32> to vector<16x32xf32>
    %212 = arith.mulf %209, %211 : vector<16x32xf32>
    %213 = arith.addf %208, %212 : vector<16x32xf32>
    %214 = vector.extract_strided_slice %159 {offsets = [176, 0], sizes = [16, 32], strides = [1, 1]} : vector<256x32xf32> to vector<16x32xf32>
    %215 = vector.extract_strided_slice %94 {offsets = [11, 0], sizes = [1, 32], strides = [1, 1]} : vector<16x32xf32> to vector<1x32xf32>
    %216 = vector.broadcast %215 : vector<1x32xf32> to vector<16x32xf32>
    %217 = arith.mulf %214, %216 : vector<16x32xf32>
    %218 = arith.addf %213, %217 : vector<16x32xf32>
    %219 = vector.extract_strided_slice %159 {offsets = [192, 0], sizes = [16, 32], strides = [1, 1]} : vector<256x32xf32> to vector<16x32xf32>
    %220 = vector.extract_strided_slice %94 {offsets = [12, 0], sizes = [1, 32], strides = [1, 1]} : vector<16x32xf32> to vector<1x32xf32>
    %221 = vector.broadcast %220 : vector<1x32xf32> to vector<16x32xf32>
    %222 = arith.mulf %219, %221 : vector<16x32xf32>
    %223 = arith.addf %218, %222 : vector<16x32xf32>
    %224 = vector.extract_strided_slice %159 {offsets = [208, 0], sizes = [16, 32], strides = [1, 1]} : vector<256x32xf32> to vector<16x32xf32>
    %225 = vector.extract_strided_slice %94 {offsets = [13, 0], sizes = [1, 32], strides = [1, 1]} : vector<16x32xf32> to vector<1x32xf32>
    %226 = vector.broadcast %225 : vector<1x32xf32> to vector<16x32xf32>
    %227 = arith.mulf %224, %226 : vector<16x32xf32>
    %228 = arith.addf %223, %227 : vector<16x32xf32>
    %229 = vector.extract_strided_slice %159 {offsets = [224, 0], sizes = [16, 32], strides = [1, 1]} : vector<256x32xf32> to vector<16x32xf32>
    %230 = vector.extract_strided_slice %94 {offsets = [14, 0], sizes = [1, 32], strides = [1, 1]} : vector<16x32xf32> to vector<1x32xf32>
    %231 = vector.broadcast %230 : vector<1x32xf32> to vector<16x32xf32>
    %232 = arith.mulf %229, %231 : vector<16x32xf32>
    %233 = arith.addf %228, %232 : vector<16x32xf32>
    %234 = vector.extract_strided_slice %159 {offsets = [240, 0], sizes = [16, 32], strides = [1, 1]} : vector<256x32xf32> to vector<16x32xf32>
    %235 = vector.extract_strided_slice %94 {offsets = [15, 0], sizes = [1, 32], strides = [1, 1]} : vector<16x32xf32> to vector<1x32xf32>
    %236 = vector.broadcast %235 : vector<1x32xf32> to vector<16x32xf32>
    %237 = arith.mulf %234, %236 : vector<16x32xf32>
    %238 = arith.addf %233, %237 : vector<16x32xf32>
    %c0_74 = arith.constant 0 : index
    %c0_75 = arith.constant 0 : index
    %239 = vector.load %arg26[%c0_74, %c0_75] : memref<32x16xf32, #tpu.memory_space<vmem>>, vector<32x16xf32>
    %cst_76 = arith.constant dense<0.000000e+00> : vector<32x32xf32>
    %240 = tpu.matmul %239, %238, %cst_76 {dimension_numbers = #tpu.dot_dimension_numbers<[1], [0], [0], [1], [0, 0, 1, 1], [], []>} : vector<32x16xf32>, vector<16x32xf32>, vector<32x32xf32> -> vector<32x32xf32>
    %c0_77 = arith.constant 0 : index
    %c0_78 = arith.constant 0 : index
    %241 = vector.load %arg27[%c0_77, %c0_78] : memref<32x1xf32, #tpu.memory_space<vmem>>, vector<32x1xf32>
    %242 = vector.broadcast %241 : vector<32x1xf32> to vector<32x32xf32>
    %243 = arith.addf %240, %242 : vector<32x32xf32>
    %cst_79 = arith.constant 0.000000e+00 : f32
    %244 = vector.broadcast %cst_79 : f32 to vector<32x32xf32>
    %245 = arith.maximumf %243, %244 : vector<32x32xf32>
    %c0_80 = arith.constant 0 : index
    %c0_81 = arith.constant 0 : index
    %246 = vector.load %arg28[%c0_80, %c0_81] : memref<64x32xf32, #tpu.memory_space<vmem>>, vector<64x32xf32>
    %cst_82 = arith.constant dense<0.000000e+00> : vector<64x32xf32>
    %247 = tpu.matmul %246, %245, %cst_82 {dimension_numbers = #tpu.dot_dimension_numbers<[1], [0], [0], [1], [0, 0, 1, 1], [], []>} : vector<64x32xf32>, vector<32x32xf32>, vector<64x32xf32> -> vector<64x32xf32>
    %c0_83 = arith.constant 0 : index
    %c0_84 = arith.constant 0 : index
    %248 = vector.load %arg29[%c0_83, %c0_84] : memref<64x1xf32, #tpu.memory_space<vmem>>, vector<64x1xf32>
    %249 = vector.broadcast %248 : vector<64x1xf32> to vector<64x32xf32>
    %250 = arith.addf %247, %249 : vector<64x32xf32>
    %cst_85 = arith.constant 0.000000e+00 : f32
    %251 = vector.broadcast %cst_85 : f32 to vector<64x32xf32>
    %252 = arith.maximumf %250, %251 : vector<64x32xf32>
    %253 = vector.extract_strided_slice %252 {offsets = [0, 0], sizes = [64, 2], strides = [1, 1]} : vector<64x32xf32> to vector<64x2xf32>
    %254 = vector.extract_strided_slice %252 {offsets = [0, 2], sizes = [64, 2], strides = [1, 1]} : vector<64x32xf32> to vector<64x2xf32>
    %255 = arith.maximumf %253, %254 : vector<64x2xf32>
    %256 = vector.extract_strided_slice %252 {offsets = [0, 4], sizes = [64, 2], strides = [1, 1]} : vector<64x32xf32> to vector<64x2xf32>
    %257 = arith.maximumf %255, %256 : vector<64x2xf32>
    %258 = vector.extract_strided_slice %252 {offsets = [0, 6], sizes = [64, 2], strides = [1, 1]} : vector<64x32xf32> to vector<64x2xf32>
    %259 = arith.maximumf %257, %258 : vector<64x2xf32>
    %260 = vector.extract_strided_slice %252 {offsets = [0, 8], sizes = [64, 2], strides = [1, 1]} : vector<64x32xf32> to vector<64x2xf32>
    %261 = arith.maximumf %259, %260 : vector<64x2xf32>
    %262 = vector.extract_strided_slice %252 {offsets = [0, 10], sizes = [64, 2], strides = [1, 1]} : vector<64x32xf32> to vector<64x2xf32>
    %263 = arith.maximumf %261, %262 : vector<64x2xf32>
    %264 = vector.extract_strided_slice %252 {offsets = [0, 12], sizes = [64, 2], strides = [1, 1]} : vector<64x32xf32> to vector<64x2xf32>
    %265 = arith.maximumf %263, %264 : vector<64x2xf32>
    %266 = vector.extract_strided_slice %252 {offsets = [0, 14], sizes = [64, 2], strides = [1, 1]} : vector<64x32xf32> to vector<64x2xf32>
    %267 = arith.maximumf %265, %266 : vector<64x2xf32>
    %268 = vector.extract_strided_slice %252 {offsets = [0, 16], sizes = [64, 2], strides = [1, 1]} : vector<64x32xf32> to vector<64x2xf32>
    %269 = arith.maximumf %267, %268 : vector<64x2xf32>
    %270 = vector.extract_strided_slice %252 {offsets = [0, 18], sizes = [64, 2], strides = [1, 1]} : vector<64x32xf32> to vector<64x2xf32>
    %271 = arith.maximumf %269, %270 : vector<64x2xf32>
    %272 = vector.extract_strided_slice %252 {offsets = [0, 20], sizes = [64, 2], strides = [1, 1]} : vector<64x32xf32> to vector<64x2xf32>
    %273 = arith.maximumf %271, %272 : vector<64x2xf32>
    %274 = vector.extract_strided_slice %252 {offsets = [0, 22], sizes = [64, 2], strides = [1, 1]} : vector<64x32xf32> to vector<64x2xf32>
    %275 = arith.maximumf %273, %274 : vector<64x2xf32>
    %276 = vector.extract_strided_slice %252 {offsets = [0, 24], sizes = [64, 2], strides = [1, 1]} : vector<64x32xf32> to vector<64x2xf32>
    %277 = arith.maximumf %275, %276 : vector<64x2xf32>
    %278 = vector.extract_strided_slice %252 {offsets = [0, 26], sizes = [64, 2], strides = [1, 1]} : vector<64x32xf32> to vector<64x2xf32>
    %279 = arith.maximumf %277, %278 : vector<64x2xf32>
    %280 = vector.extract_strided_slice %252 {offsets = [0, 28], sizes = [64, 2], strides = [1, 1]} : vector<64x32xf32> to vector<64x2xf32>
    %281 = arith.maximumf %279, %280 : vector<64x2xf32>
    %282 = vector.extract_strided_slice %252 {offsets = [0, 30], sizes = [64, 2], strides = [1, 1]} : vector<64x32xf32> to vector<64x2xf32>
    %283 = arith.maximumf %281, %282 : vector<64x2xf32>
    %c0_86 = arith.constant 0 : index
    %c0_87 = arith.constant 0 : index
    %284 = vector.load %arg30[%c0_86, %c0_87] : memref<64x2xf32, #tpu.memory_space<vmem>>, vector<64x2xf32>
    tpu.vector_store %arg30[%c0_86, %c0_87], %283 {strides = array<i32>} : memref<64x2xf32, #tpu.memory_space<vmem>>, vector<64x2xf32>,
    return
  }
}

</mosaic_0001>

<llo_original>
// kernel: tile.9
$region0: #{tile.9}
  %s0 = inlined_call_operand.vmem [shape: f32[2,16,2], index: 0, kind: input, shape index: {}]
  %s1 = inlined_call_operand.vmem [shape: f32[2,32], index: 1, kind: output, shape index: {}]
  $region1: #{tile.9} parent=0
    #allocation0 [shape = 'u8[4096]{0}', space=vmem, size = 0x1000, scoped, tag = 'scoped mem for output reshape']
    %s2 = smov 3
    %v3 = vld [vmem:[%s0] ss:$16 sm:%s2]
    %vm4 = vcmask 15360
    %5 = vst.msk [vmem:[#allocation0] sm:$0x3] %vm4, %v3
    %s6 = scalar_lea.vmem %s0, 15
    %s7 = smov 3
    %v8 = vld [vmem:[%s6] ss:$16 sm:%s7]
    %9 = vrot.lane.b32.xlu0 %v8, 30
    %v10 = vpop.permute.xlu0 %9
    %vm11 = vcmask 261360
    %12 = vst.msk [vmem:[#allocation0] sm:$0x3] %vm11, %v10
    %s13 = scalar_lea.vmem %s0, 14
    %s14 = smov 3
    %v15 = vld [vmem:[%s13] ss:$16 sm:%s14]
    %16 = vrot.lane.b32.xlu0 %v15, 28
    %v17 = vpop.permute.xlu0 %16
    %vm18 = vcmask 244960
    %19 = vst.msk [vmem:[#allocation0] sm:$0x3] %vm18, %v17
    %s20 = scalar_lea.vmem %s0, 13
    %s21 = smov 3
    %v22 = vld [vmem:[%s20] ss:$16 sm:%s21]
    %23 = vrot.lane.b32.xlu0 %v22, 26
    %v24 = vpop.permute.xlu0 %23
    %vm25 = vcmask 228560
    %26 = vst.msk [vmem:[#allocation0] sm:$0x3] %vm25, %v24
    %s27 = scalar_lea.vmem %s0, 12
    %s28 = smov 3
    %v29 = vld [vmem:[%s27] ss:$16 sm:%s28]
    %30 = vrot.lane.b32.xlu0 %v29, 24
    %v31 = vpop.permute.xlu0 %30
    %vm32 = vcmask 212160
    %33 = vst.msk [vmem:[#allocation0] sm:$0x3] %vm32, %v31
    %s34 = scalar_lea.vmem %s0, 11
    %s35 = smov 3
    %v36 = vld [vmem:[%s34] ss:$16 sm:%s35]
    %37 = vrot.lane.b32.xlu0 %v36, 22
    %v38 = vpop.permute.xlu0 %37
    %vm39 = vcmask 195760
    %40 = vst.msk [vmem:[#allocation0] sm:$0x3] %vm39, %v38
    %s41 = scalar_lea.vmem %s0, 10
    %s42 = smov 3
    %v43 = vld [vmem:[%s41] ss:$16 sm:%s42]
    %44 = vrot.lane.b32.xlu0 %v43, 20
    %v45 = vpop.permute.xlu0 %44
    %vm46 = vcmask 179360
    %47 = vst.msk [vmem:[#allocation0] sm:$0x3] %vm46, %v45
    %s48 = scalar_lea.vmem %s0, 9
    %s49 = smov 3
    %v50 = vld [vmem:[%s48] ss:$16 sm:%s49]
    %51 = vrot.lane.b32.xlu0 %v50, 18
    %v52 = vpop.permute.xlu0 %51
    %vm53 = vcmask 162960
    %54 = vst.msk [vmem:[#allocation0] sm:$0x3] %vm53, %v52
    %s55 = scalar_lea.vmem %s0, 8
    %s56 = smov 3
    %v57 = vld [vmem:[%s55] ss:$16 sm:%s56]
    %58 = vrot.lane.b32.xlu0 %v57, 16
    %v59 = vpop.permute.xlu0 %58
    %vm60 = vcmask 146560
    %61 = vst.msk [vmem:[#allocation0] sm:$0x3] %vm60, %v59
    %s62 = scalar_lea.vmem %s0, 7
    %s63 = smov 3
    %v64 = vld [vmem:[%s62] ss:$16 sm:%s63]
    %65 = vrot.lane.b32.xlu0 %v64, 14
    %v66 = vpop.permute.xlu0 %65
    %vm67 = vcmask 130160
    %68 = vst.msk [vmem:[#allocation0] sm:$0x3] %vm67, %v66
    %s69 = scalar_lea.vmem %s0, 6
    %s70 = smov 3
    %v71 = vld [vmem:[%s69] ss:$16 sm:%s70]
    %72 = vrot.lane.b32.xlu0 %v71, 12
    %v73 = vpop.permute.xlu0 %72
    %vm74 = vcmask 113760
    %75 = vst.msk [vmem:[#allocation0] sm:$0x3] %vm74, %v73
    %s76 = scalar_lea.vmem %s0, 5
    %s77 = smov 3
    %v78 = vld [vmem:[%s76] ss:$16 sm:%s77]
    %79 = vrot.lane.b32.xlu0 %v78, 10
    %v80 = vpop.permute.xlu0 %79
    %vm81 = vcmask 97360
    %82 = vst.msk [vmem:[#allocation0] sm:$0x3] %vm81, %v80
    %s83 = scalar_lea.vmem %s0, 4
    %s84 = smov 3
    %v85 = vld [vmem:[%s83] ss:$16 sm:%s84]
    %86 = vrot.lane.b32.xlu0 %v85, 8
    %v87 = vpop.permute.xlu0 %86
    %vm88 = vcmask 80960
    %89 = vst.msk [vmem:[#allocation0] sm:$0x3] %vm88, %v87
    %s90 = scalar_lea.vmem %s0, 3
    %s91 = smov 3
    %v92 = vld [vmem:[%s90] ss:$16 sm:%s91]
    %93 = vrot.lane.b32.xlu0 %v92, 6
    %v94 = vpop.permute.xlu0 %93
    %vm95 = vcmask 64560
    %96 = vst.msk [vmem:[#allocation0] sm:$0x3] %vm95, %v94
    %s97 = scalar_lea.vmem %s0, 2
    %s98 = smov 3
    %v99 = vld [vmem:[%s97] ss:$16 sm:%s98]
    %100 = vrot.lane.b32.xlu0 %v99, 4
    %v101 = vpop.permute.xlu0 %100
    %vm102 = vcmask 48160
    %103 = vst.msk [vmem:[#allocation0] sm:$0x3] %vm102, %v101
    %s104 = scalar_lea.vmem %s0, 1
    %s105 = smov 3
    %v106 = vld [vmem:[%s104] ss:$16 sm:%s105]
    %107 = vrot.lane.b32.xlu0 %v106, 2
    %v108 = vpop.permute.xlu0 %107
    %vm109 = vcmask 31760
    %110 = vst.msk [vmem:[#allocation0] sm:$0x3] %vm109, %v108
    %s112 = ssub.s32 4, 1
    %v113 = vld [vmem:[#allocation0] sm:%s112]
    %s115 = ssub.s32 4, 1
    %116 = vst [vmem:[%s1] sm:%s115] %v113

// kernel: pointnet_encoder_forward.1
$region0: #{pointnet_encoder_forward.1}
  #allocation0 [shape = 'u32[]', space=smem, size = 0x4, offset = 0x4, fixed_abs, tag = 'smem constant byte address 0x4 - core index']
  #allocation1 [shape = 'u32[72,128]{1,0:T(1,128)}', space=vmem, size = 0x9000, scoped, tag = 'internal scratch']
  %s0 = inlined_call_operand.smem [shape: u32[31], index: -1, kind: input, shape index: {}]
  %s1 = sld [smem:[%s0]]
  %s2 = scalar_lea.smem %s0, 1
  %s3 = sld [smem:[%s2]]
  %s4 = scalar_lea.smem %s0, 2
  %s5 = sld [smem:[%s4]]
  %s6 = scalar_lea.smem %s0, 3
  %s7 = sld [smem:[%s6]]
  %s8 = scalar_lea.smem %s0, 4
  %s9 = sld [smem:[%s8]]
  %s10 = scalar_lea.smem %s0, 5
  %s11 = sld [smem:[%s10]]
  %s12 = scalar_lea.smem %s0, 6
  %s13 = sld [smem:[%s12]]
  %s14 = scalar_lea.smem %s0, 7
  %s15 = sld [smem:[%s14]]
  %s16 = scalar_lea.smem %s0, 8
  %s17 = sld [smem:[%s16]]
  %s18 = scalar_lea.smem %s0, 9
  %s19 = sld [smem:[%s18]]
  %s20 = scalar_lea.smem %s0, 10
  %s21 = sld [smem:[%s20]]
  %s22 = scalar_lea.smem %s0, 11
  %s23 = sld [smem:[%s22]]
  %s24 = scalar_lea.smem %s0, 12
  %s25 = sld [smem:[%s24]]
  %s26 = scalar_lea.smem %s0, 13
  %s27 = sld [smem:[%s26]]
  %s28 = scalar_lea.smem %s0, 14
  %s29 = sld [smem:[%s28]]
  %s30 = scalar_lea.smem %s0, 15
  %s31 = sld [smem:[%s30]]
  %s32 = scalar_lea.smem %s0, 16
  %s33 = sld [smem:[%s32]]
  %s34 = scalar_lea.smem %s0, 17
  %s35 = sld [smem:[%s34]]
  %s36 = scalar_lea.smem %s0, 18
  %s37 = sld [smem:[%s36]]
  %s38 = scalar_lea.smem %s0, 19
  %s39 = sld [smem:[%s38]]
  %s40 = scalar_lea.smem %s0, 20
  %s41 = sld [smem:[%s40]]
  %s42 = scalar_lea.smem %s0, 21
  %s43 = sld [smem:[%s42]]
  %s44 = scalar_lea.smem %s0, 22
  %s45 = sld [smem:[%s44]]
  %s46 = scalar_lea.smem %s0, 23
  %s47 = sld [smem:[%s46]]
  %s48 = scalar_lea.smem %s0, 24
  %s49 = sld [smem:[%s48]]
  %s50 = scalar_lea.smem %s0, 25
  %s51 = sld [smem:[%s50]]
  %s52 = scalar_lea.smem %s0, 26
  %s53 = sld [smem:[%s52]]
  %s54 = scalar_lea.smem %s0, 27
  %s55 = sld [smem:[%s54]]
  %s56 = scalar_lea.smem %s0, 28
  %s57 = sld [smem:[%s56]]
  %s58 = scalar_lea.smem %s0, 29
  %s59 = sld [smem:[%s58]]
  %s60 = scalar_lea.smem %s0, 30
  %s61 = sld [smem:[%s60]]
  %s62 = sld [smem:[#allocation0]]
  $region130: #{pointnet_encoder_forward.1} parent=0
    _
  %s64 = ssub.s32 1, %s62
  %s65 = scalar_select 0, %s64, %s62
  // Predicated region
  $region2: #{pointnet_encoder_forward.1} parent=0 // pred_check
    _
  $region3: #{pointnet_encoder_forward.1} parent=0 // pred_check_branch
    %67 = sbr.rel (0) target = $region5
  $region4: #{pointnet_encoder_forward.1} parent=0 // pred_region
    _
  $region5: #{pointnet_encoder_forward.1} parent=0 // pred_fallthru
    _
  // Predicated region
  $region6: #{pointnet_encoder_forward.1} parent=0 // pred_check
    _
  $region7: #{pointnet_encoder_forward.1} parent=0 // pred_check_branch
    %69 = sbr.rel (0) target = $region9
  $region8: #{pointnet_encoder_forward.1} parent=0 // pred_region
    _
  $region9: #{pointnet_encoder_forward.1} parent=0 // pred_fallthru
    _
  // Predicated region
  $region10: #{pointnet_encoder_forward.1} parent=0 // pred_check
    _
  $region11: #{pointnet_encoder_forward.1} parent=0 // pred_check_branch
    %71 = sbr.rel (0) target = $region13
  $region12: #{pointnet_encoder_forward.1} parent=0 // pred_region
    _
  $region13: #{pointnet_encoder_forward.1} parent=0 // pred_fallthru
    _
  // Predicated region
  $region14: #{pointnet_encoder_forward.1} parent=0 // pred_check
    _
  $region15: #{pointnet_encoder_forward.1} parent=0 // pred_check_branch
    %73 = sbr.rel (0) target = $region17
  $region16: #{pointnet_encoder_forward.1} parent=0 // pred_region
    _
  $region17: #{pointnet_encoder_forward.1} parent=0 // pred_fallthru
    _
  // Predicated region
  $region18: #{pointnet_encoder_forward.1} parent=0 // pred_check
    _
  $region19: #{pointnet_encoder_forward.1} parent=0 // pred_check_branch
    %75 = sbr.rel (0) target = $region21
  $region20: #{pointnet_encoder_forward.1} parent=0 // pred_region
    _
  $region21: #{pointnet_encoder_forward.1} parent=0 // pred_fallthru
    _
  // Predicated region
  $region22: #{pointnet_encoder_forward.1} parent=0 // pred_check
    _
  $region23: #{pointnet_encoder_forward.1} parent=0 // pred_check_branch
    %77 = sbr.rel (0) target = $region25
  $region24: #{pointnet_encoder_forward.1} parent=0 // pred_region
    _
  $region25: #{pointnet_encoder_forward.1} parent=0 // pred_fallthru
    _
  // Predicated region
  $region26: #{pointnet_encoder_forward.1} parent=0 // pred_check
    _
  $region27: #{pointnet_encoder_forward.1} parent=0 // pred_check_branch
    %79 = sbr.rel (0) target = $region29
  $region28: #{pointnet_encoder_forward.1} parent=0 // pred_region
    _
  $region29: #{pointnet_encoder_forward.1} parent=0 // pred_fallthru
    _
  // Predicated region
  $region30: #{pointnet_encoder_forward.1} parent=0 // pred_check
    _
  $region31: #{pointnet_encoder_forward.1} parent=0 // pred_check_branch
    %81 = sbr.rel (0) target = $region33
  $region32: #{pointnet_encoder_forward.1} parent=0 // pred_region
    _
  $region33: #{pointnet_encoder_forward.1} parent=0 // pred_fallthru
    _
  // Predicated region
  $region34: #{pointnet_encoder_forward.1} parent=0 // pred_check
    _
  $region35: #{pointnet_encoder_forward.1} parent=0 // pred_check_branch
    %83 = sbr.rel (0) target = $region37
  $region36: #{pointnet_encoder_forward.1} parent=0 // pred_region
    _
  $region37: #{pointnet_encoder_forward.1} parent=0 // pred_fallthru
    _
  // Predicated region
  $region38: #{pointnet_encoder_forward.1} parent=0 // pred_check
    _
  $region39: #{pointnet_encoder_forward.1} parent=0 // pred_check_branch
    %85 = sbr.rel (0) target = $region41
  $region40: #{pointnet_encoder_forward.1} parent=0 // pred_region
    _
  $region41: #{pointnet_encoder_forward.1} parent=0 // pred_fallthru
    _
  // Predicated region
  $region42: #{pointnet_encoder_forward.1} parent=0 // pred_check
    _
  $region43: #{pointnet_encoder_forward.1} parent=0 // pred_check_branch
    %87 = sbr.rel (0) target = $region45
  $region44: #{pointnet_encoder_forward.1} parent=0 // pred_region
    _
  $region45: #{pointnet_encoder_forward.1} parent=0 // pred_fallthru
    _
  // Predicated region
  $region46: #{pointnet_encoder_forward.1} parent=0 // pred_check
    _
  $region47: #{pointnet_encoder_forward.1} parent=0 // pred_check_branch
    %89 = sbr.rel (0) target = $region49
  $region48: #{pointnet_encoder_forward.1} parent=0 // pred_region
    _
  $region49: #{pointnet_encoder_forward.1} parent=0 // pred_fallthru
    _
  // Predicated region
  $region50: #{pointnet_encoder_forward.1} parent=0 // pred_check
    _
  $region51: #{pointnet_encoder_forward.1} parent=0 // pred_check_branch
    %91 = sbr.rel (0) target = $region53
  $region52: #{pointnet_encoder_forward.1} parent=0 // pred_region
    _
  $region53: #{pointnet_encoder_forward.1} parent=0 // pred_fallthru
    _
  // Predicated region
  $region54: #{pointnet_encoder_forward.1} parent=0 // pred_check
    _
  $region55: #{pointnet_encoder_forward.1} parent=0 // pred_check_branch
    %93 = sbr.rel (0) target = $region57
  $region56: #{pointnet_encoder_forward.1} parent=0 // pred_region
    _
  $region57: #{pointnet_encoder_forward.1} parent=0 // pred_fallthru
    _
  // Predicated region
  $region58: #{pointnet_encoder_forward.1} parent=0 // pred_check
    _
  $region59: #{pointnet_encoder_forward.1} parent=0 // pred_check_branch
    %95 = sbr.rel (0) target = $region61
  $region60: #{pointnet_encoder_forward.1} parent=0 // pred_region
    _
  $region61: #{pointnet_encoder_forward.1} parent=0 // pred_fallthru
    _
  // Predicated region
  $region62: #{pointnet_encoder_forward.1} parent=0 // pred_check
    _
  $region63: #{pointnet_encoder_forward.1} parent=0 // pred_check_branch
    %97 = sbr.rel (0) target = $region65
  $region64: #{pointnet_encoder_forward.1} parent=0 // pred_region
    _
  $region65: #{pointnet_encoder_forward.1} parent=0 // pred_fallthru
    _
  // Predicated region
  $region66: #{pointnet_encoder_forward.1} parent=0 // pred_check
    _
  $region67: #{pointnet_encoder_forward.1} parent=0 // pred_check_branch
    %99 = sbr.rel (0) target = $region69
  $region68: #{pointnet_encoder_forward.1} parent=0 // pred_region
    _
  $region69: #{pointnet_encoder_forward.1} parent=0 // pred_fallthru
    _
  // Predicated region
  $region70: #{pointnet_encoder_forward.1} parent=0 // pred_check
    _
  $region71: #{pointnet_encoder_forward.1} parent=0 // pred_check_branch
    %101 = sbr.rel (0) target = $region73
  $region72: #{pointnet_encoder_forward.1} parent=0 // pred_region
    _
  $region73: #{pointnet_encoder_forward.1} parent=0 // pred_fallthru
    _
  // Predicated region
  $region74: #{pointnet_encoder_forward.1} parent=0 // pred_check
    _
  $region75: #{pointnet_encoder_forward.1} parent=0 // pred_check_branch
    %103 = sbr.rel (0) target = $region77
  $region76: #{pointnet_encoder_forward.1} parent=0 // pred_region
    _
  $region77: #{pointnet_encoder_forward.1} parent=0 // pred_fallthru
    _
  // Predicated region
  $region78: #{pointnet_encoder_forward.1} parent=0 // pred_check
    _
  $region79: #{pointnet_encoder_forward.1} parent=0 // pred_check_branch
    %105 = sbr.rel (0) target = $region81
  $region80: #{pointnet_encoder_forward.1} parent=0 // pred_region
    _
  $region81: #{pointnet_encoder_forward.1} parent=0 // pred_fallthru
    _
  // Predicated region
  $region82: #{pointnet_encoder_forward.1} parent=0 // pred_check
    _
  $region83: #{pointnet_encoder_forward.1} parent=0 // pred_check_branch
    %107 = sbr.rel (0) target = $region85
  $region84: #{pointnet_encoder_forward.1} parent=0 // pred_region
    _
  $region85: #{pointnet_encoder_forward.1} parent=0 // pred_fallthru
    _
  // Predicated region
  $region86: #{pointnet_encoder_forward.1} parent=0 // pred_check
    _
  $region87: #{pointnet_encoder_forward.1} parent=0 // pred_check_branch
    %109 = sbr.rel (0) target = $region89
  $region88: #{pointnet_encoder_forward.1} parent=0 // pred_region
    _
  $region89: #{pointnet_encoder_forward.1} parent=0 // pred_fallthru
    _
  // Predicated region
  $region90: #{pointnet_encoder_forward.1} parent=0 // pred_check
    _
  $region91: #{pointnet_encoder_forward.1} parent=0 // pred_check_branch
    %111 = sbr.rel (0) target = $region93
  $region92: #{pointnet_encoder_forward.1} parent=0 // pred_region
    _
  $region93: #{pointnet_encoder_forward.1} parent=0 // pred_fallthru
    _
  // Predicated region
  $region94: #{pointnet_encoder_forward.1} parent=0 // pred_check
    _
  $region95: #{pointnet_encoder_forward.1} parent=0 // pred_check_branch
    %113 = sbr.rel (0) target = $region97
  $region96: #{pointnet_encoder_forward.1} parent=0 // pred_region
    _
  $region97: #{pointnet_encoder_forward.1} parent=0 // pred_fallthru
    _
  // Predicated region
  $region98: #{pointnet_encoder_forward.1} parent=0 // pred_check
    _
  $region99: #{pointnet_encoder_forward.1} parent=0 // pred_check_branch
    %115 = sbr.rel (0) target = $region101
  $region100: #{pointnet_encoder_forward.1} parent=0 // pred_region
    _
  $region101: #{pointnet_encoder_forward.1} parent=0 // pred_fallthru
    _
  // Predicated region
  $region102: #{pointnet_encoder_forward.1} parent=0 // pred_check
    _
  $region103: #{pointnet_encoder_forward.1} parent=0 // pred_check_branch
    %117 = sbr.rel (0) target = $region105
  $region104: #{pointnet_encoder_forward.1} parent=0 // pred_region
    _
  $region105: #{pointnet_encoder_forward.1} parent=0 // pred_fallthru
    _
  // Predicated region
  $region106: #{pointnet_encoder_forward.1} parent=0 // pred_check
    _
  $region107: #{pointnet_encoder_forward.1} parent=0 // pred_check_branch
    %119 = sbr.rel (0) target = $region109
  $region108: #{pointnet_encoder_forward.1} parent=0 // pred_region
    _
  $region109: #{pointnet_encoder_forward.1} parent=0 // pred_fallthru
    _
  // Predicated region
  $region110: #{pointnet_encoder_forward.1} parent=0 // pred_check
    _
  $region111: #{pointnet_encoder_forward.1} parent=0 // pred_check_branch
    %121 = sbr.rel (0) target = $region113
  $region112: #{pointnet_encoder_forward.1} parent=0 // pred_region
    _
  $region113: #{pointnet_encoder_forward.1} parent=0 // pred_fallthru
    _
  // Predicated region
  $region114: #{pointnet_encoder_forward.1} parent=0 // pred_check
    _
  $region115: #{pointnet_encoder_forward.1} parent=0 // pred_check_branch
    %123 = sbr.rel (0) target = $region117
  $region116: #{pointnet_encoder_forward.1} parent=0 // pred_region
    _
  $region117: #{pointnet_encoder_forward.1} parent=0 // pred_fallthru
    _
  // Predicated region
  $region118: #{pointnet_encoder_forward.1} parent=0 // pred_check
    _
  $region119: #{pointnet_encoder_forward.1} parent=0 // pred_check_branch
    %125 = sbr.rel (0) target = $region121
  $region120: #{pointnet_encoder_forward.1} parent=0 // pred_region
    _
  $region121: #{pointnet_encoder_forward.1} parent=0 // pred_fallthru
    _
  %v126 = vld [vmem:[%s3] sm:$0x7]
  %v127 = vld [vmem:[%s1] sm:$0x3]
  %v128 = vld [vmem:[%s5] sm:$0xff]
  %v129 = vld [vmem:[%s5 + $0x8] sm:$0xff]
  %v130 = vld [vmem:[%s5 + $0x10] sm:$0xff]
  %v131 = vld [vmem:[%s5 + $0x18] sm:$0xff]
  %v132 = vld [vmem:[%s7] sm:$0xff]
  %v133 = vld [vmem:[%s7 + $0x8] sm:$0xff]
  %v134 = vld [vmem:[%s7 + $0x10] sm:$0xff]
  %v135 = vld [vmem:[%s7 + $0x18] sm:$0xff]
  %137 = vset.pattern.permute.xlu0 0
  %138 = vperm.xlu0 %137, %v132
  %v139 = vpop.permute.xlu0 %138
  %142 = vset.pattern.permute.xlu0 0
  %143 = vperm.xlu0 %142, %v133
  %v144 = vpop.permute.xlu0 %143
  %147 = vset.pattern.permute.xlu0 0
  %148 = vperm.xlu0 %147, %v134
  %v149 = vpop.permute.xlu0 %148
  %152 = vset.pattern.permute.xlu0 0
  %153 = vperm.xlu0 %152, %v135
  %v154 = vpop.permute.xlu0 %153
  %vm156 = vcmask 23552
  %v158 = vsel %vm156, %v128, 0
  %v161 = vsel %vm156, %v129, 0
  %v164 = vsel %vm156, %v130, 0
  %v167 = vsel %vm156, %v131, 0
  %vm169 = vcmask 1042432
  %v171 = vsel %vm169, %v126, 0
  %173 = vmatpush.msra.mxu0 0.0
  %174 = vmatpush.msra.mxu0 0.0
  %175 = vmatpush.msra.mxu0 0.0
  %176 = vmatpush.msra.mxu0 0.0
  %177 = vmatpush.msra.mxu0 0.0
  %178 = vmatpush.msra.mxu0 0.0
  %179 = vmatpush.msra.mxu0 0.0
  %180 = vmatpush.msra.mxu0 0.0
  %181 = vmatpush.msra.mxu0 0.0
  %182 = vmatpush.msra.mxu0 0.0
  %183 = vmatpush.msra.mxu0 0.0
  %184 = vmatpush.msra.mxu0 0.0
  %185 = vmatpush.msra.mxu0 0.0
  %186 = vmatpush.msra.mxu0 0.0
  %187 = vmatpush.msra.mxu0 0.0
  %188 = vmatpush.msra.mxu0 %v171
  %189 = vmatmul.f32.gmra.mxu0 %v158
  %v190 = vpop.f32.mrf.mxu0
  %v191 = vadd.f32 %v139, %v190
  %192 = vmatmul.f32.gmra.mxu0 %v161
  %v193 = vpop.f32.mrf.mxu0
  %v194 = vadd.f32 %v144, %v193
  %195 = vmatmul.f32.gmra.mxu0 %v164
  %v196 = vpop.f32.mrf.mxu0
  %v197 = vadd.f32 %v149, %v196
  %198 = vmatmul.f32.gmra.mxu0 %v167
  %v199 = vpop.f32.mrf.mxu0
  %v200 = vadd.f32 %v154, %v199
  %201 = vdwg.mxu0
  %v202 = vmax.f32 %v191, 0.0
  %v203 = vmax.f32 %v194, 0.0
  %v204 = vmax.f32 %v197, 0.0
  %v205 = vmax.f32 %v200, 0.0
  %v206 = vld [vmem:[%s9] sm:$0xff]
  %v207 = vld [vmem:[%s9 + $0x8] sm:$0xff]
  %v208 = vld [vmem:[%s9 + $0x10] sm:$0xff]
  %v209 = vld [vmem:[%s9 + $0x18] sm:$0xff]
  %v210 = vld [vmem:[%s9 + $0x20] sm:$0xff]
  %v211 = vld [vmem:[%s9 + $0x28] sm:$0xff]
  %v212 = vld [vmem:[%s9 + $0x30] sm:$0xff]
  %v213 = vld [vmem:[%s9 + $0x38] sm:$0xff]
  %v214 = vld [vmem:[%s11] sm:$0xff]
  %v215 = vld [vmem:[%s11 + $0x8] sm:$0xff]
  %v216 = vld [vmem:[%s11 + $0x10] sm:$0xff]
  %v217 = vld [vmem:[%s11 + $0x18] sm:$0xff]
  %v218 = vld [vmem:[%s11 + $0x20] sm:$0xff]
  %v219 = vld [vmem:[%s11 + $0x28] sm:$0xff]
  %v220 = vld [vmem:[%s11 + $0x30] sm:$0xff]
  %v221 = vld [vmem:[%s11 + $0x38] sm:$0xff]
  %223 = vset.pattern.permute.xlu0 0
  %224 = vperm.xlu0 %223, %v214
  %v225 = vpop.permute.xlu0 %224
  %228 = vset.pattern.permute.xlu0 0
  %229 = vperm.xlu0 %228, %v215
  %v230 = vpop.permute.xlu0 %229
  %233 = vset.pattern.permute.xlu0 0
  %234 = vperm.xlu0 %233, %v216
  %v235 = vpop.permute.xlu0 %234
  %238 = vset.pattern.permute.xlu0 0
  %239 = vperm.xlu0 %238, %v217
  %v240 = vpop.permute.xlu0 %239
  %243 = vset.pattern.permute.xlu0 0
  %244 = vperm.xlu0 %243, %v218
  %v245 = vpop.permute.xlu0 %244
  %248 = vset.pattern.permute.xlu0 0
  %249 = vperm.xlu0 %248, %v219
  %v250 = vpop.permute.xlu0 %249
  %253 = vset.pattern.permute.xlu0 0
  %254 = vperm.xlu0 %253, %v220
  %v255 = vpop.permute.xlu0 %254
  %258 = vset.pattern.permute.xlu0 0
  %259 = vperm.xlu0 %258, %v221
  %v260 = vpop.permute.xlu0 %259
  %vm262 = vcmask 261120
  %v264 = vsel %vm262, %v206, 0
  %v267 = vsel %vm262, %v207, 0
  %v270 = vsel %vm262, %v208, 0
  %v273 = vsel %vm262, %v209, 0
  %v276 = vsel %vm262, %v210, 0
  %v279 = vsel %vm262, %v211, 0
  %v282 = vsel %vm262, %v212, 0
  %v285 = vsel %vm262, %v213, 0
  %287 = vmatpush.msra.mxu0 0.0
  %288 = vmatpush.msra.mxu0 0.0
  %289 = vmatpush.msra.mxu0 0.0
  %290 = vmatpush.msra.mxu0 0.0
  %291 = vmatpush.msra.mxu0 0.0
  %292 = vmatpush.msra.mxu0 0.0
  %293 = vmatpush.msra.mxu0 0.0
  %294 = vmatpush.msra.mxu0 0.0
  %295 = vmatpush.msra.mxu0 0.0
  %296 = vmatpush.msra.mxu0 0.0
  %297 = vmatpush.msra.mxu0 0.0
  %298 = vmatpush.msra.mxu0 0.0
  %299 = vmatpush.msra.mxu0 %v205
  %300 = vmatpush.msra.mxu0 %v204
  %301 = vmatpush.msra.mxu0 %v203
  %302 = vmatpush.msra.mxu0 %v202
  %303 = vmatmul.f32.gmra.mxu0 %v264
  %v304 = vpop.f32.mrf.mxu0
  %v305 = vadd.f32 %v225, %v304
  %306 = vmatmul.f32.gmra.mxu0 %v267
  %v307 = vpop.f32.mrf.mxu0
  %v308 = vadd.f32 %v230, %v307
  %309 = vmatmul.f32.gmra.mxu0 %v270
  %v310 = vpop.f32.mrf.mxu0
  %v311 = vadd.f32 %v235, %v310
  %312 = vmatmul.f32.gmra.mxu0 %v273
  %v313 = vpop.f32.mrf.mxu0
  %v314 = vadd.f32 %v240, %v313
  %315 = vmatmul.f32.gmra.mxu0 %v276
  %v316 = vpop.f32.mrf.mxu0
  %v317 = vadd.f32 %v245, %v316
  %318 = vmatmul.f32.gmra.mxu0 %v279
  %v319 = vpop.f32.mrf.mxu0
  %v320 = vadd.f32 %v250, %v319
  %321 = vmatmul.f32.gmra.mxu0 %v282
  %v322 = vpop.f32.mrf.mxu0
  %v323 = vadd.f32 %v255, %v322
  %324 = vmatmul.f32.gmra.mxu0 %v285
  %v325 = vpop.f32.mrf.mxu0
  %v326 = vadd.f32 %v260, %v325
  %327 = vdwg.mxu0
  %v328 = vmax.f32 %v305, 0.0
  %v329 = vmax.f32 %v308, 0.0
  %v330 = vmax.f32 %v311, 0.0
  %v331 = vmax.f32 %v314, 0.0
  %v332 = vmax.f32 %v317, 0.0
  %v333 = vmax.f32 %v320, 0.0
  %v334 = vmax.f32 %v323, 0.0
  %v335 = vmax.f32 %v326, 0.0
  %344 = vrot.lane.b32.xlu0 %v328, 126
  %v345 = vpop.permute.xlu0 %344
  %346 = vrot.lane.b32.xlu0 %v329, 126
  %v347 = vpop.permute.xlu0 %346
  %348 = vrot.lane.b32.xlu0 %v330, 126
  %v349 = vpop.permute.xlu0 %348
  %350 = vrot.lane.b32.xlu0 %v331, 126
  %v351 = vpop.permute.xlu0 %350
  %352 = vrot.lane.b32.xlu0 %v332, 126
  %v353 = vpop.permute.xlu0 %352
  %354 = vrot.lane.b32.xlu0 %v333, 126
  %v355 = vpop.permute.xlu0 %354
  %356 = vrot.lane.b32.xlu0 %v334, 126
  %v357 = vpop.permute.xlu0 %356
  %358 = vrot.lane.b32.xlu0 %v335, 126
  %v359 = vpop.permute.xlu0 %358
  %v368 = vmax.f32 %v328, %v345
  %v369 = vmax.f32 %v329, %v347
  %v370 = vmax.f32 %v330, %v349
  %v371 = vmax.f32 %v331, %v351
  %v372 = vmax.f32 %v332, %v353
  %v373 = vmax.f32 %v333, %v355
  %v374 = vmax.f32 %v334, %v357
  %v375 = vmax.f32 %v335, %v359
  %376 = vrot.lane.b32.xlu0 %v328, 124
  %v377 = vpop.permute.xlu0 %376
  %378 = vrot.lane.b32.xlu0 %v329, 124
  %v379 = vpop.permute.xlu0 %378
  %380 = vrot.lane.b32.xlu0 %v330, 124
  %v381 = vpop.permute.xlu0 %380
  %382 = vrot.lane.b32.xlu0 %v331, 124
  %v383 = vpop.permute.xlu0 %382
  %384 = vrot.lane.b32.xlu0 %v332, 124
  %v385 = vpop.permute.xlu0 %384
  %386 = vrot.lane.b32.xlu0 %v333, 124
  %v387 = vpop.permute.xlu0 %386
  %388 = vrot.lane.b32.xlu0 %v334, 124
  %v389 = vpop.permute.xlu0 %388
  %390 = vrot.lane.b32.xlu0 %v335, 124
  %v391 = vpop.permute.xlu0 %390
  %v400 = vmax.f32 %v368, %v377
  %v401 = vmax.f32 %v369, %v379
  %v402 = vmax.f32 %v370, %v381
  %v403 = vmax.f32 %v371, %v383
  %v404 = vmax.f32 %v372, %v385
  %v405 = vmax.f32 %v373, %v387
  %v406 = vmax.f32 %v374, %v389
  %v407 = vmax.f32 %v375, %v391
  %408 = vrot.lane.b32.xlu0 %v328, 122
  %v409 = vpop.permute.xlu0 %408
  %410 = vrot.lane.b32.xlu0 %v329, 122
  %v411 = vpop.permute.xlu0 %410
  %412 = vrot.lane.b32.xlu0 %v330, 122
  %v413 = vpop.permute.xlu0 %412
  %414 = vrot.lane.b32.xlu0 %v331, 122
  %v415 = vpop.permute.xlu0 %414
  %416 = vrot.lane.b32.xlu0 %v332, 122
  %v417 = vpop.permute.xlu0 %416
  %418 = vrot.lane.b32.xlu0 %v333, 122
  %v419 = vpop.permute.xlu0 %418
  %420 = vrot.lane.b32.xlu0 %v334, 122
  %v421 = vpop.permute.xlu0 %420
  %422 = vrot.lane.b32.xlu0 %v335, 122
  %v423 = vpop.permute.xlu0 %422
  %v432 = vmax.f32 %v400, %v409
  %v433 = vmax.f32 %v401, %v411
  %v434 = vmax.f32 %v402, %v413
  %v435 = vmax.f32 %v403, %v415
  %v436 = vmax.f32 %v404, %v417
  %v437 = vmax.f32 %v405, %v419
  %v438 = vmax.f32 %v406, %v421
  %v439 = vmax.f32 %v407, %v423
  %440 = vrot.lane.b32.xlu0 %v328, 120
  %v441 = vpop.permute.xlu0 %440
  %442 = vrot.lane.b32.xlu0 %v329, 120
  %v443 = vpop.permute.xlu0 %442
  %444 = vrot.lane.b32.xlu0 %v330, 120
  %v445 = vpop.permute.xlu0 %444
  %446 = vrot.lane.b32.xlu0 %v331, 120
  %v447 = vpop.permute.xlu0 %446
  %448 = vrot.lane.b32.xlu0 %v332, 120
  %v449 = vpop.permute.xlu0 %448
  %450 = vrot.lane.b32.xlu0 %v333, 120
  %v451 = vpop.permute.xlu0 %450
  %452 = vrot.lane.b32.xlu0 %v334, 120
  %v453 = vpop.permute.xlu0 %452
  %454 = vrot.lane.b32.xlu0 %v335, 120
  %v455 = vpop.permute.xlu0 %454
  %v464 = vmax.f32 %v432, %v441
  %v465 = vmax.f32 %v433, %v443
  %v466 = vmax.f32 %v434, %v445
  %v467 = vmax.f32 %v435, %v447
  %v468 = vmax.f32 %v436, %v449
  %v469 = vmax.f32 %v437, %v451
  %v470 = vmax.f32 %v438, %v453
  %v471 = vmax.f32 %v439, %v455
  %472 = vrot.lane.b32.xlu0 %v328, 118
  %v473 = vpop.permute.xlu0 %472
  %474 = vrot.lane.b32.xlu0 %v329, 118
  %v475 = vpop.permute.xlu0 %474
  %476 = vrot.lane.b32.xlu0 %v330, 118
  %v477 = vpop.permute.xlu0 %476
  %478 = vrot.lane.b32.xlu0 %v331, 118
  %v479 = vpop.permute.xlu0 %478
  %480 = vrot.lane.b32.xlu0 %v332, 118
  %v481 = vpop.permute.xlu0 %480
  %482 = vrot.lane.b32.xlu0 %v333, 118
  %v483 = vpop.permute.xlu0 %482
  %484 = vrot.lane.b32.xlu0 %v334, 118
  %v485 = vpop.permute.xlu0 %484
  %486 = vrot.lane.b32.xlu0 %v335, 118
  %v487 = vpop.permute.xlu0 %486
  %v496 = vmax.f32 %v464, %v473
  %v497 = vmax.f32 %v465, %v475
  %v498 = vmax.f32 %v466, %v477
  %v499 = vmax.f32 %v467, %v479
  %v500 = vmax.f32 %v468, %v481
  %v501 = vmax.f32 %v469, %v483
  %v502 = vmax.f32 %v470, %v485
  %v503 = vmax.f32 %v471, %v487
  %504 = vrot.lane.b32.xlu0 %v328, 116
  %v505 = vpop.permute.xlu0 %504
  %506 = vrot.lane.b32.xlu0 %v329, 116
  %v507 = vpop.permute.xlu0 %506
  %508 = vrot.lane.b32.xlu0 %v330, 116
  %v509 = vpop.permute.xlu0 %508
  %510 = vrot.lane.b32.xlu0 %v331, 116
  %v511 = vpop.permute.xlu0 %510
  %512 = vrot.lane.b32.xlu0 %v332, 116
  %v513 = vpop.permute.xlu0 %512
  %514 = vrot.lane.b32.xlu0 %v333, 116
  %v515 = vpop.permute.xlu0 %514
  %516 = vrot.lane.b32.xlu0 %v334, 116
  %v517 = vpop.permute.xlu0 %516
  %518 = vrot.lane.b32.xlu0 %v335, 116
  %v519 = vpop.permute.xlu0 %518
  %v528 = vmax.f32 %v496, %v505
  %v529 = vmax.f32 %v497, %v507
  %v530 = vmax.f32 %v498, %v509
  %v531 = vmax.f32 %v499, %v511
  %v532 = vmax.f32 %v500, %v513
  %v533 = vmax.f32 %v501, %v515
  %v534 = vmax.f32 %v502, %v517
  %v535 = vmax.f32 %v503, %v519
  %536 = vrot.lane.b32.xlu0 %v328, 114
  %v537 = vpop.permute.xlu0 %536
  %538 = vrot.lane.b32.xlu0 %v329, 114
  %v539 = vpop.permute.xlu0 %538
  %540 = vrot.lane.b32.xlu0 %v330, 114
  %v541 = vpop.permute.xlu0 %540
  %542 = vrot.lane.b32.xlu0 %v331, 114
  %v543 = vpop.permute.xlu0 %542
  %544 = vrot.lane.b32.xlu0 %v332, 114
  %v545 = vpop.permute.xlu0 %544
  %546 = vrot.lane.b32.xlu0 %v333, 114
  %v547 = vpop.permute.xlu0 %546
  %548 = vrot.lane.b32.xlu0 %v334, 114
  %v549 = vpop.permute.xlu0 %548
  %550 = vrot.lane.b32.xlu0 %v335, 114
  %v551 = vpop.permute.xlu0 %550
  %v560 = vmax.f32 %v528, %v537
  %v561 = vmax.f32 %v529, %v539
  %v562 = vmax.f32 %v530, %v541
  %v563 = vmax.f32 %v531, %v543
  %v564 = vmax.f32 %v532, %v545
  %v565 = vmax.f32 %v533, %v547
  %v566 = vmax.f32 %v534, %v549
  %v567 = vmax.f32 %v535, %v551
  %568 = vrot.lane.b32.xlu0 %v328, 112
  %v569 = vpop.permute.xlu0 %568
  %570 = vrot.lane.b32.xlu0 %v329, 112
  %v571 = vpop.permute.xlu0 %570
  %572 = vrot.lane.b32.xlu0 %v330, 112
  %v573 = vpop.permute.xlu0 %572
  %574 = vrot.lane.b32.xlu0 %v331, 112
  %v575 = vpop.permute.xlu0 %574
  %576 = vrot.lane.b32.xlu0 %v332, 112
  %v577 = vpop.permute.xlu0 %576
  %578 = vrot.lane.b32.xlu0 %v333, 112
  %v579 = vpop.permute.xlu0 %578
  %580 = vrot.lane.b32.xlu0 %v334, 112
  %v581 = vpop.permute.xlu0 %580
  %582 = vrot.lane.b32.xlu0 %v335, 112
  %v583 = vpop.permute.xlu0 %582
  %v592 = vmax.f32 %v560, %v569
  %v593 = vmax.f32 %v561, %v571
  %v594 = vmax.f32 %v562, %v573
  %v595 = vmax.f32 %v563, %v575
  %v596 = vmax.f32 %v564, %v577
  %v597 = vmax.f32 %v565, %v579
  %v598 = vmax.f32 %v566, %v581
  %v599 = vmax.f32 %v567, %v583
  %600 = vrot.lane.b32.xlu0 %v328, 110
  %v601 = vpop.permute.xlu0 %600
  %602 = vrot.lane.b32.xlu0 %v329, 110
  %v603 = vpop.permute.xlu0 %602
  %604 = vrot.lane.b32.xlu0 %v330, 110
  %v605 = vpop.permute.xlu0 %604
  %606 = vrot.lane.b32.xlu0 %v331, 110
  %v607 = vpop.permute.xlu0 %606
  %608 = vrot.lane.b32.xlu0 %v332, 110
  %v609 = vpop.permute.xlu0 %608
  %610 = vrot.lane.b32.xlu0 %v333, 110
  %v611 = vpop.permute.xlu0 %610
  %612 = vrot.lane.b32.xlu0 %v334, 110
  %v613 = vpop.permute.xlu0 %612
  %614 = vrot.lane.b32.xlu0 %v335, 110
  %v615 = vpop.permute.xlu0 %614
  %v624 = vmax.f32 %v592, %v601
  %v625 = vmax.f32 %v593, %v603
  %v626 = vmax.f32 %v594, %v605
  %v627 = vmax.f32 %v595, %v607
  %v628 = vmax.f32 %v596, %v609
  %v629 = vmax.f32 %v597, %v611
  %v630 = vmax.f32 %v598, %v613
  %v631 = vmax.f32 %v599, %v615
  %632 = vrot.lane.b32.xlu0 %v328, 108
  %v633 = vpop.permute.xlu0 %632
  %634 = vrot.lane.b32.xlu0 %v329, 108
  %v635 = vpop.permute.xlu0 %634
  %636 = vrot.lane.b32.xlu0 %v330, 108
  %v637 = vpop.permute.xlu0 %636
  %638 = vrot.lane.b32.xlu0 %v331, 108
  %v639 = vpop.permute.xlu0 %638
  %640 = vrot.lane.b32.xlu0 %v332, 108
  %v641 = vpop.permute.xlu0 %640
  %642 = vrot.lane.b32.xlu0 %v333, 108
  %v643 = vpop.permute.xlu0 %642
  %644 = vrot.lane.b32.xlu0 %v334, 108
  %v645 = vpop.permute.xlu0 %644
  %646 = vrot.lane.b32.xlu0 %v335, 108
  %v647 = vpop.permute.xlu0 %646
  %v656 = vmax.f32 %v624, %v633
  %v657 = vmax.f32 %v625, %v635
  %v658 = vmax.f32 %v626, %v637
  %v659 = vmax.f32 %v627, %v639
  %v660 = vmax.f32 %v628, %v641
  %v661 = vmax.f32 %v629, %v643
  %v662 = vmax.f32 %v630, %v645
  %v663 = vmax.f32 %v631, %v647
  %664 = vrot.lane.b32.xlu0 %v328, 106
  %v665 = vpop.permute.xlu0 %664
  %666 = vrot.lane.b32.xlu0 %v329, 106
  %v667 = vpop.permute.xlu0 %666
  %668 = vrot.lane.b32.xlu0 %v330, 106
  %v669 = vpop.permute.xlu0 %668
  %670 = vrot.lane.b32.xlu0 %v331, 106
  %v671 = vpop.permute.xlu0 %670
  %672 = vrot.lane.b32.xlu0 %v332, 106
  %v673 = vpop.permute.xlu0 %672
  %674 = vrot.lane.b32.xlu0 %v333, 106
  %v675 = vpop.permute.xlu0 %674
  %676 = vrot.lane.b32.xlu0 %v334, 106
  %v677 = vpop.permute.xlu0 %676
  %678 = vrot.lane.b32.xlu0 %v335, 106
  %v679 = vpop.permute.xlu0 %678
  %v688 = vmax.f32 %v656, %v665
  %v689 = vmax.f32 %v657, %v667
  %v690 = vmax.f32 %v658, %v669
  %v691 = vmax.f32 %v659, %v671
  %v692 = vmax.f32 %v660, %v673
  %v693 = vmax.f32 %v661, %v675
  %v694 = vmax.f32 %v662, %v677
  %v695 = vmax.f32 %v663, %v679
  %696 = vrot.lane.b32.xlu0 %v328, 104
  %v697 = vpop.permute.xlu0 %696
  %698 = vrot.lane.b32.xlu0 %v329, 104
  %v699 = vpop.permute.xlu0 %698
  %700 = vrot.lane.b32.xlu0 %v330, 104
  %v701 = vpop.permute.xlu0 %700
  %702 = vrot.lane.b32.xlu0 %v331, 104
  %v703 = vpop.permute.xlu0 %702
  %704 = vrot.lane.b32.xlu0 %v332, 104
  %v705 = vpop.permute.xlu0 %704
  %706 = vrot.lane.b32.xlu0 %v333, 104
  %v707 = vpop.permute.xlu0 %706
  %708 = vrot.lane.b32.xlu0 %v334, 104
  %v709 = vpop.permute.xlu0 %708
  %710 = vrot.lane.b32.xlu0 %v335, 104
  %v711 = vpop.permute.xlu0 %710
  %v720 = vmax.f32 %v688, %v697
  %v721 = vmax.f32 %v689, %v699
  %v722 = vmax.f32 %v690, %v701
  %v723 = vmax.f32 %v691, %v703
  %v724 = vmax.f32 %v692, %v705
  %v725 = vmax.f32 %v693, %v707
  %v726 = vmax.f32 %v694, %v709
  %v727 = vmax.f32 %v695, %v711
  %728 = vrot.lane.b32.xlu0 %v328, 102
  %v729 = vpop.permute.xlu0 %728
  %730 = vrot.lane.b32.xlu0 %v329, 102
  %v731 = vpop.permute.xlu0 %730
  %732 = vrot.lane.b32.xlu0 %v330, 102
  %v733 = vpop.permute.xlu0 %732
  %734 = vrot.lane.b32.xlu0 %v331, 102
  %v735 = vpop.permute.xlu0 %734
  %736 = vrot.lane.b32.xlu0 %v332, 102
  %v737 = vpop.permute.xlu0 %736
  %738 = vrot.lane.b32.xlu0 %v333, 102
  %v739 = vpop.permute.xlu0 %738
  %740 = vrot.lane.b32.xlu0 %v334, 102
  %v741 = vpop.permute.xlu0 %740
  %742 = vrot.lane.b32.xlu0 %v335, 102
  %v743 = vpop.permute.xlu0 %742
  %v752 = vmax.f32 %v720, %v729
  %v753 = vmax.f32 %v721, %v731
  %v754 = vmax.f32 %v722, %v733
  %v755 = vmax.f32 %v723, %v735
  %v756 = vmax.f32 %v724, %v737
  %v757 = vmax.f32 %v725, %v739
  %v758 = vmax.f32 %v726, %v741
  %v759 = vmax.f32 %v727, %v743
  %760 = vrot.lane.b32.xlu0 %v328, 100
  %v761 = vpop.permute.xlu0 %760
  %762 = vrot.lane.b32.xlu0 %v329, 100
  %v763 = vpop.permute.xlu0 %762
  %764 = vrot.lane.b32.xlu0 %v330, 100
  %v765 = vpop.permute.xlu0 %764
  %766 = vrot.lane.b32.xlu0 %v331, 100
  %v767 = vpop.permute.xlu0 %766
  %768 = vrot.lane.b32.xlu0 %v332, 100
  %v769 = vpop.permute.xlu0 %768
  %770 = vrot.lane.b32.xlu0 %v333, 100
  %v771 = vpop.permute.xlu0 %770
  %772 = vrot.lane.b32.xlu0 %v334, 100
  %v773 = vpop.permute.xlu0 %772
  %774 = vrot.lane.b32.xlu0 %v335, 100
  %v775 = vpop.permute.xlu0 %774
  %v784 = vmax.f32 %v752, %v761
  %v785 = vmax.f32 %v753, %v763
  %v786 = vmax.f32 %v754, %v765
  %v787 = vmax.f32 %v755, %v767
  %v788 = vmax.f32 %v756, %v769
  %v789 = vmax.f32 %v757, %v771
  %v790 = vmax.f32 %v758, %v773
  %v791 = vmax.f32 %v759, %v775
  %792 = vrot.lane.b32.xlu0 %v328, 98
  %v793 = vpop.permute.xlu0 %792
  %794 = vrot.lane.b32.xlu0 %v329, 98
  %v795 = vpop.permute.xlu0 %794
  %796 = vrot.lane.b32.xlu0 %v330, 98
  %v797 = vpop.permute.xlu0 %796
  %798 = vrot.lane.b32.xlu0 %v331, 98
  %v799 = vpop.permute.xlu0 %798
  %800 = vrot.lane.b32.xlu0 %v332, 98
  %v801 = vpop.permute.xlu0 %800
  %802 = vrot.lane.b32.xlu0 %v333, 98
  %v803 = vpop.permute.xlu0 %802
  %804 = vrot.lane.b32.xlu0 %v334, 98
  %v805 = vpop.permute.xlu0 %804
  %806 = vrot.lane.b32.xlu0 %v335, 98
  %v807 = vpop.permute.xlu0 %806
  %v816 = vmax.f32 %v784, %v793
  %v817 = vmax.f32 %v785, %v795
  %v818 = vmax.f32 %v786, %v797
  %v819 = vmax.f32 %v787, %v799
  %v820 = vmax.f32 %v788, %v801
  %v821 = vmax.f32 %v789, %v803
  %v822 = vmax.f32 %v790, %v805
  %v823 = vmax.f32 %v791, %v807
  %v824 = vld [vmem:[%s13] sm:$0xff]
  %v825 = vld [vmem:[%s13 + $0x8] sm:$0xff]
  %v826 = vld [vmem:[%s13 + $0x10] sm:$0xff]
  %v827 = vld [vmem:[%s13 + $0x18] sm:$0xff]
  %v828 = vld [vmem:[%s15] sm:$0xff]
  %v829 = vld [vmem:[%s15 + $0x8] sm:$0xff]
  %v830 = vld [vmem:[%s15 + $0x10] sm:$0xff]
  %v831 = vld [vmem:[%s15 + $0x18] sm:$0xff]
  %833 = vset.pattern.permute.xlu0 0
  %834 = vperm.xlu0 %833, %v828
  %v835 = vpop.permute.xlu0 %834
  %838 = vset.pattern.permute.xlu0 0
  %839 = vperm.xlu0 %838, %v829
  %v840 = vpop.permute.xlu0 %839
  %843 = vset.pattern.permute.xlu0 0
  %844 = vperm.xlu0 %843, %v830
  %v845 = vpop.permute.xlu0 %844
  %848 = vset.pattern.permute.xlu0 0
  %849 = vperm.xlu0 %848, %v831
  %v850 = vpop.permute.xlu0 %849
  %vm852 = vcmask 523264
  %v854 = vsel %vm852, %v824, 0
  %v857 = vsel %vm852, %v825, 0
  %v860 = vsel %vm852, %v826, 0
  %v863 = vsel %vm852, %v827, 0
  %865 = vmatpush.msra.mxu0 0.0
  %866 = vmatpush.msra.mxu0 0.0
  %867 = vmatpush.msra.mxu0 0.0
  %868 = vmatpush.msra.mxu0 0.0
  %869 = vmatpush.msra.mxu0 0.0
  %870 = vmatpush.msra.mxu0 0.0
  %871 = vmatpush.msra.mxu0 0.0
  %872 = vmatpush.msra.mxu0 0.0
  %873 = vmatpush.msra.mxu0 %v823
  %874 = vmatpush.msra.mxu0 %v822
  %875 = vmatpush.msra.mxu0 %v821
  %876 = vmatpush.msra.mxu0 %v820
  %877 = vmatpush.msra.mxu0 %v819
  %878 = vmatpush.msra.mxu0 %v818
  %879 = vmatpush.msra.mxu0 %v817
  %880 = vmatpush.msra.mxu0 %v816
  %881 = vmatmul.f32.gmra.mxu0 %v854
  %v882 = vpop.f32.mrf.mxu0
  %v883 = vadd.f32 %v835, %v882
  %884 = vmatmul.f32.gmra.mxu0 %v857
  %v885 = vpop.f32.mrf.mxu0
  %v886 = vadd.f32 %v840, %v885
  %887 = vmatmul.f32.gmra.mxu0 %v860
  %v888 = vpop.f32.mrf.mxu0
  %v889 = vadd.f32 %v845, %v888
  %890 = vmatmul.f32.gmra.mxu0 %v863
  %v891 = vpop.f32.mrf.mxu0
  %v892 = vadd.f32 %v850, %v891
  %893 = vdwg.mxu0
  %v894 = vmax.f32 %v883, 0.0
  %v895 = vmax.f32 %v886, 0.0
  %v896 = vmax.f32 %v889, 0.0
  %v897 = vmax.f32 %v892, 0.0
  %v898 = vld [vmem:[%s17] sm:$0xff]
  %v899 = vld [vmem:[%s17 + $0x8] sm:$0xff]
  %v900 = vld [vmem:[%s19] sm:$0xff]
  %v901 = vld [vmem:[%s19 + $0x8] sm:$0xff]
  %903 = vset.pattern.permute.xlu0 0
  %904 = vperm.xlu0 %903, %v900
  %v905 = vpop.permute.xlu0 %904
  %908 = vset.pattern.permute.xlu0 0
  %909 = vperm.xlu0 %908, %v901
  %v910 = vpop.permute.xlu0 %909
  %v913 = vsel %vm262, %v898, 0
  %v916 = vsel %vm262, %v899, 0
  %918 = vmatpush.msra.mxu0 0.0
  %919 = vmatpush.msra.mxu0 0.0
  %920 = vmatpush.msra.mxu0 0.0
  %921 = vmatpush.msra.mxu0 0.0
  %922 = vmatpush.msra.mxu0 0.0
  %923 = vmatpush.msra.mxu0 0.0
  %924 = vmatpush.msra.mxu0 0.0
  %925 = vmatpush.msra.mxu0 0.0
  %926 = vmatpush.msra.mxu0 0.0
  %927 = vmatpush.msra.mxu0 0.0
  %928 = vmatpush.msra.mxu0 0.0
  %929 = vmatpush.msra.mxu0 0.0
  %930 = vmatpush.msra.mxu0 %v897
  %931 = vmatpush.msra.mxu0 %v896
  %932 = vmatpush.msra.mxu0 %v895
  %933 = vmatpush.msra.mxu0 %v894
  %934 = vmatmul.f32.gmra.mxu0 %v913
  %v935 = vpop.f32.mrf.mxu0
  %v936 = vadd.f32 %v905, %v935
  %937 = vmatmul.f32.gmra.mxu0 %v916
  %v938 = vpop.f32.mrf.mxu0
  %v939 = vadd.f32 %v910, %v938
  %940 = vdwg.mxu0
  %v941 = vmax.f32 %v936, 0.0
  %v942 = vmax.f32 %v939, 0.0
  %v943 = vld [vmem:[%s21] sm:$0xff]
  %v944 = vld [vmem:[%s21 + $0x8] sm:$0x1]
  %v945 = vld [vmem:[%s23] sm:$0xff]
  %v946 = vld [vmem:[%s23 + $0x8] sm:$0x1]
  %948 = vset.pattern.permute.xlu0 0
  %949 = vperm.xlu0 %948, %v945
  %v950 = vpop.permute.xlu0 %949
  %953 = vset.pattern.permute.xlu0 0
  %954 = vperm.xlu0 %953, %v946
  %v955 = vpop.permute.xlu0 %954
  %vm957 = vcmask 130048
  %v959 = vsel %vm957, %v943, 0
  %v962 = vsel %vm957, %v944, 0
  %964 = vmatpush.msra.mxu0 0.0
  %965 = vmatpush.msra.mxu0 0.0
  %966 = vmatpush.msra.mxu0 0.0
  %967 = vmatpush.msra.mxu0 0.0
  %968 = vmatpush.msra.mxu0 0.0
  %969 = vmatpush.msra.mxu0 0.0
  %970 = vmatpush.msra.mxu0 0.0
  %971 = vmatpush.msra.mxu0 0.0
  %972 = vmatpush.msra.mxu0 0.0
  %973 = vmatpush.msra.mxu0 0.0
  %974 = vmatpush.msra.mxu0 0.0
  %975 = vmatpush.msra.mxu0 0.0
  %976 = vmatpush.msra.mxu0 0.0
  %977 = vmatpush.msra.mxu0 0.0
  %978 = vmatpush.msra.mxu0 %v942
  %979 = vmatpush.msra.mxu0 %v941
  %980 = vmatmul.f32.gmra.mxu0 %v959
  %v981 = vpop.f32.mrf.mxu0
  %v982 = vadd.f32 %v950, %v981
  %983 = vmatmul.f32.gmra.mxu0 %v962
  %v984 = vpop.f32.mrf.mxu0
  %v985 = vadd.f32 %v955, %v984
  %986 = vdwg.mxu0
  %vm987 = vcmask 15360
  %v989 = vsel %vm987, %v982, 0
  %v992 = vsel %vm987, %v985, 0
  %vm994 = vcmask 1041408
  %v996 = vsel %vm994, %v127, 0
  %998 = vmatpush.msra.mxu0 0.0
  %999 = vmatpush.msra.mxu0 0.0
  %1000 = vmatpush.msra.mxu0 0.0
  %1001 = vmatpush.msra.mxu0 0.0
  %1002 = vmatpush.msra.mxu0 0.0
  %1003 = vmatpush.msra.mxu0 0.0
  %1004 = vmatpush.msra.mxu0 0.0
  %1005 = vmatpush.msra.mxu0 0.0
  %1006 = vmatpush.msra.mxu0 0.0
  %1007 = vmatpush.msra.mxu0 0.0
  %1008 = vmatpush.msra.mxu0 0.0
  %1009 = vmatpush.msra.mxu0 0.0
  %1010 = vmatpush.msra.mxu0 0.0
  %1011 = vmatpush.msra.mxu0 0.0
  %1012 = vmatpush.msra.mxu0 0.0
  %1013 = vmatpush.msra.mxu0 %v996
  %1014 = vmatmul.f32.gmra.mxu0 %v989
  %v1015 = vpop.f32.mrf.mxu0
  %v1016 = vadd.f32 0.0, %v1015
  %1017 = vmatmul.f32.gmra.mxu0 %v992
  %v1018 = vpop.f32.mrf.mxu0
  %v1019 = vadd.f32 0.0, %v1018
  %1020 = vdwg.mxu0
  %v1021 = vperm.slane %v126, 0
  %v1022 = vmul.f32 %v1016, %v1021
  %v1023 = vperm.slane %v126, 1
  %v1024 = vmul.f32 %v1016, %v1023
  %v1026 = vrot.slane %v1024, 3
  %v1028 = vadd.f32 %v1022, %v1026
  %v1029 = vperm.slane %v126, 2
  %v1030 = vmul.f32 %v1016, %v1029
  %v1031 = vmul.f32 %v1019, %v1029
  %v1034 = vrot.slane %v1030, 6
  %v1035 = vrot.slane %v1031, 6
  %v1036 = vsel %vm994, %v1034, %v1035
  %v1038 = vadd.f32 %v1028, %v1036
  %v1039 = vld [vmem:[%s25] sm:$0xff]
  %v1040 = vld [vmem:[%s25 + $0x8] sm:$0xff]
  %v1041 = vld [vmem:[%s27] sm:$0xff]
  %v1042 = vld [vmem:[%s27 + $0x8] sm:$0xff]
  %1044 = vset.pattern.permute.xlu0 0
  %1045 = vperm.xlu0 %1044, %v1041
  %v1046 = vpop.permute.xlu0 %1045
  %1049 = vset.pattern.permute.xlu0 0
  %1050 = vperm.xlu0 %1049, %v1042
  %v1051 = vpop.permute.xlu0 %1050
  %v1054 = vsel %vm156, %v1039, 0
  %v1057 = vsel %vm156, %v1040, 0
  %v1060 = vsel %vm169, %v1038, 0
  %1062 = vmatpush.msra.mxu0 0.0
  %1063 = vmatpush.msra.mxu0 0.0
  %1064 = vmatpush.msra.mxu0 0.0
  %1065 = vmatpush.msra.mxu0 0.0
  %1066 = vmatpush.msra.mxu0 0.0
  %1067 = vmatpush.msra.mxu0 0.0
  %1068 = vmatpush.msra.mxu0 0.0
  %1069 = vmatpush.msra.mxu0 0.0
  %1070 = vmatpush.msra.mxu0 0.0
  %1071 = vmatpush.msra.mxu0 0.0
  %1072 = vmatpush.msra.mxu0 0.0
  %1073 = vmatpush.msra.mxu0 0.0
  %1074 = vmatpush.msra.mxu0 0.0
  %1075 = vmatpush.msra.mxu0 0.0
  %1076 = vmatpush.msra.mxu0 0.0
  %1077 = vmatpush.msra.mxu0 %v1060
  %1078 = vmatmul.f32.gmra.mxu0 %v1054
  %v1079 = vpop.f32.mrf.mxu0
  %v1080 = vadd.f32 %v1046, %v1079
  %1081 = vmatmul.f32.gmra.mxu0 %v1057
  %v1082 = vpop.f32.mrf.mxu0
  %v1083 = vadd.f32 %v1051, %v1082
  %1084 = vdwg.mxu0
  %v1085 = vmax.f32 %v1080, 0.0
  %v1086 = vmax.f32 %v1083, 0.0
  %v1087 = vld [vmem:[%s29] sm:$0xff]
  %v1088 = vld [vmem:[%s29 + $0x8] sm:$0xff]
  %v1089 = vld [vmem:[%s31] sm:$0xff]
  %v1090 = vld [vmem:[%s31 + $0x8] sm:$0xff]
  %1092 = vset.pattern.permute.xlu0 0
  %1093 = vperm.xlu0 %1092, %v1089
  %v1094 = vpop.permute.xlu0 %1093
  %1097 = vset.pattern.permute.xlu0 0
  %1098 = vperm.xlu0 %1097, %v1090
  %v1099 = vpop.permute.xlu0 %1098
  %v1102 = vsel %vm957, %v1087, 0
  %v1105 = vsel %vm957, %v1088, 0
  %1107 = vmatpush.msra.mxu0 0.0
  %1108 = vmatpush.msra.mxu0 0.0
  %1109 = vmatpush.msra.mxu0 0.0
  %1110 = vmatpush.msra.mxu0 0.0
  %1111 = vmatpush.msra.mxu0 0.0
  %1112 = vmatpush.msra.mxu0 0.0
  %1113 = vmatpush.msra.mxu0 0.0
  %1114 = vmatpush.msra.mxu0 0.0
  %1115 = vmatpush.msra.mxu0 0.0
  %1116 = vmatpush.msra.mxu0 0.0
  %1117 = vmatpush.msra.mxu0 0.0
  %1118 = vmatpush.msra.mxu0 0.0
  %1119 = vmatpush.msra.mxu0 0.0
  %1120 = vmatpush.msra.mxu0 0.0
  %1121 = vmatpush.msra.mxu0 %v1086
  %1122 = vmatpush.msra.mxu0 %v1085
  %1123 = vmatmul.f32.gmra.mxu0 %v1102
  %v1124 = vpop.f32.mrf.mxu0
  %v1125 = vadd.f32 %v1094, %v1124
  %1126 = vmatmul.f32.gmra.mxu0 %v1105
  %v1127 = vpop.f32.mrf.mxu0
  %v1128 = vadd.f32 %v1099, %v1127
  %1129 = vdwg.mxu0
  %v1130 = vmax.f32 %v1125, 0.0
  %v1131 = vmax.f32 %v1128, 0.0
  %v1132 = vld [vmem:[%s33] sm:$0xff]
  %v1133 = vld [vmem:[%s33 + $0x8] sm:$0xff]
  %v1134 = vld [vmem:[%s33 + $0x10] sm:$0xff]
  %v1135 = vld [vmem:[%s33 + $0x18] sm:$0xff]
  %v1136 = vld [vmem:[%s35] sm:$0xff]
  %v1137 = vld [vmem:[%s35 + $0x8] sm:$0xff]
  %v1138 = vld [vmem:[%s35 + $0x10] sm:$0xff]
  %v1139 = vld [vmem:[%s35 + $0x18] sm:$0xff]
  %1141 = vset.pattern.permute.xlu0 0
  %1142 = vperm.xlu0 %1141, %v1136
  %v1143 = vpop.permute.xlu0 %1142
  %1146 = vset.pattern.permute.xlu0 0
  %1147 = vperm.xlu0 %1146, %v1137
  %v1148 = vpop.permute.xlu0 %1147
  %1151 = vset.pattern.permute.xlu0 0
  %1152 = vperm.xlu0 %1151, %v1138
  %v1153 = vpop.permute.xlu0 %1152
  %1156 = vset.pattern.permute.xlu0 0
  %1157 = vperm.xlu0 %1156, %v1139
  %v1158 = vpop.permute.xlu0 %1157
  %v1161 = vsel %vm957, %v1132, 0
  %v1164 = vsel %vm957, %v1133, 0
  %v1167 = vsel %vm957, %v1134, 0
  %v1170 = vsel %vm957, %v1135, 0
  %1172 = vmatpush.msra.mxu0 0.0
  %1173 = vmatpush.msra.mxu0 0.0
  %1174 = vmatpush.msra.mxu0 0.0
  %1175 = vmatpush.msra.mxu0 0.0
  %1176 = vmatpush.msra.mxu0 0.0
  %1177 = vmatpush.msra.mxu0 0.0
  %1178 = vmatpush.msra.mxu0 0.0
  %1179 = vmatpush.msra.mxu0 0.0
  %1180 = vmatpush.msra.mxu0 0.0
  %1181 = vmatpush.msra.mxu0 0.0
  %1182 = vmatpush.msra.mxu0 0.0
  %1183 = vmatpush.msra.mxu0 0.0
  %1184 = vmatpush.msra.mxu0 0.0
  %1185 = vmatpush.msra.mxu0 0.0
  %1186 = vmatpush.msra.mxu0 %v1131
  %1187 = vmatpush.msra.mxu0 %v1130
  %1188 = vmatmul.f32.gmra.mxu0 %v1161
  %v1189 = vpop.f32.mrf.mxu0
  %v1190 = vadd.f32 %v1143, %v1189
  %1191 = vmatmul.f32.gmra.mxu0 %v1164
  %v1192 = vpop.f32.mrf.mxu0
  %v1193 = vadd.f32 %v1148, %v1192
  %1194 = vmatmul.f32.gmra.mxu0 %v1167
  %v1195 = vpop.f32.mrf.mxu0
  %v1196 = vadd.f32 %v1153, %v1195
  %1197 = vmatmul.f32.gmra.mxu0 %v1170
  %v1198 = vpop.f32.mrf.mxu0
  %v1199 = vadd.f32 %v1158, %v1198
  %1200 = vdwg.mxu0
  %v1201 = vmax.f32 %v1190, 0.0
  %v1202 = vmax.f32 %v1193, 0.0
  %v1203 = vmax.f32 %v1196, 0.0
  %v1204 = vmax.f32 %v1199, 0.0
  %v1205 = vld [vmem:[%s37] sm:$0xff]
  %v1206 = vld [vmem:[%s37 + $0x8] sm:$0xff]
  %v1207 = vld [vmem:[%s37 + $0x10] sm:$0xff]
  %v1208 = vld [vmem:[%s37 + $0x18] sm:$0xff]
  %v1209 = vld [vmem:[%s37 + $0x20] sm:$0xff]
  %v1210 = vld [vmem:[%s37 + $0x28] sm:$0xff]
  %v1211 = vld [vmem:[%s37 + $0x30] sm:$0xff]
  %v1212 = vld [vmem:[%s37 + $0x38] sm:$0xff]
  %v1213 = vld [vmem:[%s39] sm:$0xff]
  %v1214 = vld [vmem:[%s39 + $0x8] sm:$0xff]
  %v1215 = vld [vmem:[%s39 + $0x10] sm:$0xff]
  %v1216 = vld [vmem:[%s39 + $0x18] sm:$0xff]
  %v1217 = vld [vmem:[%s39 + $0x20] sm:$0xff]
  %v1218 = vld [vmem:[%s39 + $0x28] sm:$0xff]
  %v1219 = vld [vmem:[%s39 + $0x30] sm:$0xff]
  %v1220 = vld [vmem:[%s39 + $0x38] sm:$0xff]
  %1222 = vset.pattern.permute.xlu0 0
  %1223 = vperm.xlu0 %1222, %v1213
  %v1224 = vpop.permute.xlu0 %1223
  %1227 = vset.pattern.permute.xlu0 0
  %1228 = vperm.xlu0 %1227, %v1214
  %v1229 = vpop.permute.xlu0 %1228
  %1232 = vset.pattern.permute.xlu0 0
  %1233 = vperm.xlu0 %1232, %v1215
  %v1234 = vpop.permute.xlu0 %1233
  %1237 = vset.pattern.permute.xlu0 0
  %1238 = vperm.xlu0 %1237, %v1216
  %v1239 = vpop.permute.xlu0 %1238
  %1242 = vset.pattern.permute.xlu0 0
  %1243 = vperm.xlu0 %1242, %v1217
  %v1244 = vpop.permute.xlu0 %1243
  %1247 = vset.pattern.permute.xlu0 0
  %1248 = vperm.xlu0 %1247, %v1218
  %v1249 = vpop.permute.xlu0 %1248
  %1252 = vset.pattern.permute.xlu0 0
  %1253 = vperm.xlu0 %1252, %v1219
  %v1254 = vpop.permute.xlu0 %1253
  %1257 = vset.pattern.permute.xlu0 0
  %1258 = vperm.xlu0 %1257, %v1220
  %v1259 = vpop.permute.xlu0 %1258
  %v1262 = vsel %vm262, %v1205, 0
  %v1265 = vsel %vm262, %v1206, 0
  %v1268 = vsel %vm262, %v1207, 0
  %v1271 = vsel %vm262, %v1208, 0
  %v1274 = vsel %vm262, %v1209, 0
  %v1277 = vsel %vm262, %v1210, 0
  %v1280 = vsel %vm262, %v1211, 0
  %v1283 = vsel %vm262, %v1212, 0
  %1285 = vmatpush.msra.mxu0 0.0
  %1286 = vmatpush.msra.mxu0 0.0
  %1287 = vmatpush.msra.mxu0 0.0
  %1288 = vmatpush.msra.mxu0 0.0
  %1289 = vmatpush.msra.mxu0 0.0
  %1290 = vmatpush.msra.mxu0 0.0
  %1291 = vmatpush.msra.mxu0 0.0
  %1292 = vmatpush.msra.mxu0 0.0
  %1293 = vmatpush.msra.mxu0 0.0
  %1294 = vmatpush.msra.mxu0 0.0
  %1295 = vmatpush.msra.mxu0 0.0
  %1296 = vmatpush.msra.mxu0 0.0
  %1297 = vmatpush.msra.mxu0 %v1204
  %1298 = vmatpush.msra.mxu0 %v1203
  %1299 = vmatpush.msra.mxu0 %v1202
  %1300 = vmatpush.msra.mxu0 %v1201
  %1301 = vmatmul.f32.gmra.mxu0 %v1262
  %v1302 = vpop.f32.mrf.mxu0
  %v1303 = vadd.f32 %v1224, %v1302
  %1304 = vmatmul.f32.gmra.mxu0 %v1265
  %v1305 = vpop.f32.mrf.mxu0
  %v1306 = vadd.f32 %v1229, %v1305
  %1307 = vmatmul.f32.gmra.mxu0 %v1268
  %v1308 = vpop.f32.mrf.mxu0
  %v1309 = vadd.f32 %v1234, %v1308
  %1310 = vmatmul.f32.gmra.mxu0 %v1271
  %v1311 = vpop.f32.mrf.mxu0
  %v1312 = vadd.f32 %v1239, %v1311
  %1313 = vmatmul.f32.gmra.mxu0 %v1274
  %v1314 = vpop.f32.mrf.mxu0
  %v1315 = vadd.f32 %v1244, %v1314
  %1316 = vmatmul.f32.gmra.mxu0 %v1277
  %v1317 = vpop.f32.mrf.mxu0
  %v1318 = vadd.f32 %v1249, %v1317
  %1319 = vmatmul.f32.gmra.mxu0 %v1280
  %v1320 = vpop.f32.mrf.mxu0
  %v1321 = vadd.f32 %v1254, %v1320
  %1322 = vmatmul.f32.gmra.mxu0 %v1283
  %v1323 = vpop.f32.mrf.mxu0
  %v1324 = vadd.f32 %v1259, %v1323
  %1325 = vdwg.mxu0
  %v1326 = vmax.f32 %v1303, 0.0
  %v1327 = vmax.f32 %v1306, 0.0
  %v1328 = vmax.f32 %v1309, 0.0
  %v1329 = vmax.f32 %v1312, 0.0
  %v1330 = vmax.f32 %v1315, 0.0
  %v1331 = vmax.f32 %v1318, 0.0
  %v1332 = vmax.f32 %v1321, 0.0
  %v1333 = vmax.f32 %v1324, 0.0
  %1342 = vrot.lane.b32.xlu0 %v1326, 126
  %v1343 = vpop.permute.xlu0 %1342
  %1344 = vrot.lane.b32.xlu0 %v1327, 126
  %v1345 = vpop.permute.xlu0 %1344
  %1346 = vrot.lane.b32.xlu0 %v1328, 126
  %v1347 = vpop.permute.xlu0 %1346
  %1348 = vrot.lane.b32.xlu0 %v1329, 126
  %v1349 = vpop.permute.xlu0 %1348
  %1350 = vrot.lane.b32.xlu0 %v1330, 126
  %v1351 = vpop.permute.xlu0 %1350
  %1352 = vrot.lane.b32.xlu0 %v1331, 126
  %v1353 = vpop.permute.xlu0 %1352
  %1354 = vrot.lane.b32.xlu0 %v1332, 126
  %v1355 = vpop.permute.xlu0 %1354
  %1356 = vrot.lane.b32.xlu0 %v1333, 126
  %v1357 = vpop.permute.xlu0 %1356
  %v1366 = vmax.f32 %v1326, %v1343
  %v1367 = vmax.f32 %v1327, %v1345
  %v1368 = vmax.f32 %v1328, %v1347
  %v1369 = vmax.f32 %v1329, %v1349
  %v1370 = vmax.f32 %v1330, %v1351
  %v1371 = vmax.f32 %v1331, %v1353
  %v1372 = vmax.f32 %v1332, %v1355
  %v1373 = vmax.f32 %v1333, %v1357
  %1374 = vrot.lane.b32.xlu0 %v1326, 124
  %v1375 = vpop.permute.xlu0 %1374
  %1376 = vrot.lane.b32.xlu0 %v1327, 124
  %v1377 = vpop.permute.xlu0 %1376
  %1378 = vrot.lane.b32.xlu0 %v1328, 124
  %v1379 = vpop.permute.xlu0 %1378
  %1380 = vrot.lane.b32.xlu0 %v1329, 124
  %v1381 = vpop.permute.xlu0 %1380
  %1382 = vrot.lane.b32.xlu0 %v1330, 124
  %v1383 = vpop.permute.xlu0 %1382
  %1384 = vrot.lane.b32.xlu0 %v1331, 124
  %v1385 = vpop.permute.xlu0 %1384
  %1386 = vrot.lane.b32.xlu0 %v1332, 124
  %v1387 = vpop.permute.xlu0 %1386
  %1388 = vrot.lane.b32.xlu0 %v1333, 124
  %v1389 = vpop.permute.xlu0 %1388
  %v1398 = vmax.f32 %v1366, %v1375
  %v1399 = vmax.f32 %v1367, %v1377
  %v1400 = vmax.f32 %v1368, %v1379
  %v1401 = vmax.f32 %v1369, %v1381
  %v1402 = vmax.f32 %v1370, %v1383
  %v1403 = vmax.f32 %v1371, %v1385
  %v1404 = vmax.f32 %v1372, %v1387
  %v1405 = vmax.f32 %v1373, %v1389
  %1406 = vrot.lane.b32.xlu0 %v1326, 122
  %v1407 = vpop.permute.xlu0 %1406
  %1408 = vrot.lane.b32.xlu0 %v1327, 122
  %v1409 = vpop.permute.xlu0 %1408
  %1410 = vrot.lane.b32.xlu0 %v1328, 122
  %v1411 = vpop.permute.xlu0 %1410
  %1412 = vrot.lane.b32.xlu0 %v1329, 122
  %v1413 = vpop.permute.xlu0 %1412
  %1414 = vrot.lane.b32.xlu0 %v1330, 122
  %v1415 = vpop.permute.xlu0 %1414
  %1416 = vrot.lane.b32.xlu0 %v1331, 122
  %v1417 = vpop.permute.xlu0 %1416
  %1418 = vrot.lane.b32.xlu0 %v1332, 122
  %v1419 = vpop.permute.xlu0 %1418
  %1420 = vrot.lane.b32.xlu0 %v1333, 122
  %v1421 = vpop.permute.xlu0 %1420
  %v1430 = vmax.f32 %v1398, %v1407
  %v1431 = vmax.f32 %v1399, %v1409
  %v1432 = vmax.f32 %v1400, %v1411
  %v1433 = vmax.f32 %v1401, %v1413
  %v1434 = vmax.f32 %v1402, %v1415
  %v1435 = vmax.f32 %v1403, %v1417
  %v1436 = vmax.f32 %v1404, %v1419
  %v1437 = vmax.f32 %v1405, %v1421
  %1438 = vrot.lane.b32.xlu0 %v1326, 120
  %v1439 = vpop.permute.xlu0 %1438
  %1440 = vrot.lane.b32.xlu0 %v1327, 120
  %v1441 = vpop.permute.xlu0 %1440
  %1442 = vrot.lane.b32.xlu0 %v1328, 120
  %v1443 = vpop.permute.xlu0 %1442
  %1444 = vrot.lane.b32.xlu0 %v1329, 120
  %v1445 = vpop.permute.xlu0 %1444
  %1446 = vrot.lane.b32.xlu0 %v1330, 120
  %v1447 = vpop.permute.xlu0 %1446
  %1448 = vrot.lane.b32.xlu0 %v1331, 120
  %v1449 = vpop.permute.xlu0 %1448
  %1450 = vrot.lane.b32.xlu0 %v1332, 120
  %v1451 = vpop.permute.xlu0 %1450
  %1452 = vrot.lane.b32.xlu0 %v1333, 120
  %v1453 = vpop.permute.xlu0 %1452
  %v1462 = vmax.f32 %v1430, %v1439
  %v1463 = vmax.f32 %v1431, %v1441
  %v1464 = vmax.f32 %v1432, %v1443
  %v1465 = vmax.f32 %v1433, %v1445
  %v1466 = vmax.f32 %v1434, %v1447
  %v1467 = vmax.f32 %v1435, %v1449
  %v1468 = vmax.f32 %v1436, %v1451
  %v1469 = vmax.f32 %v1437, %v1453
  %1470 = vrot.lane.b32.xlu0 %v1326, 118
  %v1471 = vpop.permute.xlu0 %1470
  %1472 = vrot.lane.b32.xlu0 %v1327, 118
  %v1473 = vpop.permute.xlu0 %1472
  %1474 = vrot.lane.b32.xlu0 %v1328, 118
  %v1475 = vpop.permute.xlu0 %1474
  %1476 = vrot.lane.b32.xlu0 %v1329, 118
  %v1477 = vpop.permute.xlu0 %1476
  %1478 = vrot.lane.b32.xlu0 %v1330, 118
  %v1479 = vpop.permute.xlu0 %1478
  %1480 = vrot.lane.b32.xlu0 %v1331, 118
  %v1481 = vpop.permute.xlu0 %1480
  %1482 = vrot.lane.b32.xlu0 %v1332, 118
  %v1483 = vpop.permute.xlu0 %1482
  %1484 = vrot.lane.b32.xlu0 %v1333, 118
  %v1485 = vpop.permute.xlu0 %1484
  %v1494 = vmax.f32 %v1462, %v1471
  %v1495 = vmax.f32 %v1463, %v1473
  %v1496 = vmax.f32 %v1464, %v1475
  %v1497 = vmax.f32 %v1465, %v1477
  %v1498 = vmax.f32 %v1466, %v1479
  %v1499 = vmax.f32 %v1467, %v1481
  %v1500 = vmax.f32 %v1468, %v1483
  %v1501 = vmax.f32 %v1469, %v1485
  %1502 = vrot.lane.b32.xlu0 %v1326, 116
  %v1503 = vpop.permute.xlu0 %1502
  %1504 = vrot.lane.b32.xlu0 %v1327, 116
  %v1505 = vpop.permute.xlu0 %1504
  %1506 = vrot.lane.b32.xlu0 %v1328, 116
  %v1507 = vpop.permute.xlu0 %1506
  %1508 = vrot.lane.b32.xlu0 %v1329, 116
  %v1509 = vpop.permute.xlu0 %1508
  %1510 = vrot.lane.b32.xlu0 %v1330, 116
  %v1511 = vpop.permute.xlu0 %1510
  %1512 = vrot.lane.b32.xlu0 %v1331, 116
  %v1513 = vpop.permute.xlu0 %1512
  %1514 = vrot.lane.b32.xlu0 %v1332, 116
  %v1515 = vpop.permute.xlu0 %1514
  %1516 = vrot.lane.b32.xlu0 %v1333, 116
  %v1517 = vpop.permute.xlu0 %1516
  %v1526 = vmax.f32 %v1494, %v1503
  %v1527 = vmax.f32 %v1495, %v1505
  %v1528 = vmax.f32 %v1496, %v1507
  %v1529 = vmax.f32 %v1497, %v1509
  %v1530 = vmax.f32 %v1498, %v1511
  %v1531 = vmax.f32 %v1499, %v1513
  %v1532 = vmax.f32 %v1500, %v1515
  %v1533 = vmax.f32 %v1501, %v1517
  %1534 = vrot.lane.b32.xlu0 %v1326, 114
  %v1535 = vpop.permute.xlu0 %1534
  %1536 = vrot.lane.b32.xlu0 %v1327, 114
  %v1537 = vpop.permute.xlu0 %1536
  %1538 = vrot.lane.b32.xlu0 %v1328, 114
  %v1539 = vpop.permute.xlu0 %1538
  %1540 = vrot.lane.b32.xlu0 %v1329, 114
  %v1541 = vpop.permute.xlu0 %1540
  %1542 = vrot.lane.b32.xlu0 %v1330, 114
  %v1543 = vpop.permute.xlu0 %1542
  %1544 = vrot.lane.b32.xlu0 %v1331, 114
  %v1545 = vpop.permute.xlu0 %1544
  %1546 = vrot.lane.b32.xlu0 %v1332, 114
  %v1547 = vpop.permute.xlu0 %1546
  %1548 = vrot.lane.b32.xlu0 %v1333, 114
  %v1549 = vpop.permute.xlu0 %1548
  %v1558 = vmax.f32 %v1526, %v1535
  %v1559 = vmax.f32 %v1527, %v1537
  %v1560 = vmax.f32 %v1528, %v1539
  %v1561 = vmax.f32 %v1529, %v1541
  %v1562 = vmax.f32 %v1530, %v1543
  %v1563 = vmax.f32 %v1531, %v1545
  %v1564 = vmax.f32 %v1532, %v1547
  %v1565 = vmax.f32 %v1533, %v1549
  %1566 = vrot.lane.b32.xlu0 %v1326, 112
  %v1567 = vpop.permute.xlu0 %1566
  %1568 = vrot.lane.b32.xlu0 %v1327, 112
  %v1569 = vpop.permute.xlu0 %1568
  %1570 = vrot.lane.b32.xlu0 %v1328, 112
  %v1571 = vpop.permute.xlu0 %1570
  %1572 = vrot.lane.b32.xlu0 %v1329, 112
  %v1573 = vpop.permute.xlu0 %1572
  %1574 = vrot.lane.b32.xlu0 %v1330, 112
  %v1575 = vpop.permute.xlu0 %1574
  %1576 = vrot.lane.b32.xlu0 %v1331, 112
  %v1577 = vpop.permute.xlu0 %1576
  %1578 = vrot.lane.b32.xlu0 %v1332, 112
  %v1579 = vpop.permute.xlu0 %1578
  %1580 = vrot.lane.b32.xlu0 %v1333, 112
  %v1581 = vpop.permute.xlu0 %1580
  %v1590 = vmax.f32 %v1558, %v1567
  %v1591 = vmax.f32 %v1559, %v1569
  %v1592 = vmax.f32 %v1560, %v1571
  %v1593 = vmax.f32 %v1561, %v1573
  %v1594 = vmax.f32 %v1562, %v1575
  %v1595 = vmax.f32 %v1563, %v1577
  %v1596 = vmax.f32 %v1564, %v1579
  %v1597 = vmax.f32 %v1565, %v1581
  %1598 = vrot.lane.b32.xlu0 %v1326, 110
  %v1599 = vpop.permute.xlu0 %1598
  %1600 = vrot.lane.b32.xlu0 %v1327, 110
  %v1601 = vpop.permute.xlu0 %1600
  %1602 = vrot.lane.b32.xlu0 %v1328, 110
  %v1603 = vpop.permute.xlu0 %1602
  %1604 = vrot.lane.b32.xlu0 %v1329, 110
  %v1605 = vpop.permute.xlu0 %1604
  %1606 = vrot.lane.b32.xlu0 %v1330, 110
  %v1607 = vpop.permute.xlu0 %1606
  %1608 = vrot.lane.b32.xlu0 %v1331, 110
  %v1609 = vpop.permute.xlu0 %1608
  %1610 = vrot.lane.b32.xlu0 %v1332, 110
  %v1611 = vpop.permute.xlu0 %1610
  %1612 = vrot.lane.b32.xlu0 %v1333, 110
  %v1613 = vpop.permute.xlu0 %1612
  %v1622 = vmax.f32 %v1590, %v1599
  %v1623 = vmax.f32 %v1591, %v1601
  %v1624 = vmax.f32 %v1592, %v1603
  %v1625 = vmax.f32 %v1593, %v1605
  %v1626 = vmax.f32 %v1594, %v1607
  %v1627 = vmax.f32 %v1595, %v1609
  %v1628 = vmax.f32 %v1596, %v1611
  %v1629 = vmax.f32 %v1597, %v1613
  %1630 = vrot.lane.b32.xlu0 %v1326, 108
  %v1631 = vpop.permute.xlu0 %1630
  %1632 = vrot.lane.b32.xlu0 %v1327, 108
  %v1633 = vpop.permute.xlu0 %1632
  %1634 = vrot.lane.b32.xlu0 %v1328, 108
  %v1635 = vpop.permute.xlu0 %1634
  %1636 = vrot.lane.b32.xlu0 %v1329, 108
  %v1637 = vpop.permute.xlu0 %1636
  %1638 = vrot.lane.b32.xlu0 %v1330, 108
  %v1639 = vpop.permute.xlu0 %1638
  %1640 = vrot.lane.b32.xlu0 %v1331, 108
  %v1641 = vpop.permute.xlu0 %1640
  %1642 = vrot.lane.b32.xlu0 %v1332, 108
  %v1643 = vpop.permute.xlu0 %1642
  %1644 = vrot.lane.b32.xlu0 %v1333, 108
  %v1645 = vpop.permute.xlu0 %1644
  %v1654 = vmax.f32 %v1622, %v1631
  %v1655 = vmax.f32 %v1623, %v1633
  %v1656 = vmax.f32 %v1624, %v1635
  %v1657 = vmax.f32 %v1625, %v1637
  %v1658 = vmax.f32 %v1626, %v1639
  %v1659 = vmax.f32 %v1627, %v1641
  %v1660 = vmax.f32 %v1628, %v1643
  %v1661 = vmax.f32 %v1629, %v1645
  %1662 = vrot.lane.b32.xlu0 %v1326, 106
  %v1663 = vpop.permute.xlu0 %1662
  %1664 = vrot.lane.b32.xlu0 %v1327, 106
  %v1665 = vpop.permute.xlu0 %1664
  %1666 = vrot.lane.b32.xlu0 %v1328, 106
  %v1667 = vpop.permute.xlu0 %1666
  %1668 = vrot.lane.b32.xlu0 %v1329, 106
  %v1669 = vpop.permute.xlu0 %1668
  %1670 = vrot.lane.b32.xlu0 %v1330, 106
  %v1671 = vpop.permute.xlu0 %1670
  %1672 = vrot.lane.b32.xlu0 %v1331, 106
  %v1673 = vpop.permute.xlu0 %1672
  %1674 = vrot.lane.b32.xlu0 %v1332, 106
  %v1675 = vpop.permute.xlu0 %1674
  %1676 = vrot.lane.b32.xlu0 %v1333, 106
  %v1677 = vpop.permute.xlu0 %1676
  %v1686 = vmax.f32 %v1654, %v1663
  %v1687 = vmax.f32 %v1655, %v1665
  %v1688 = vmax.f32 %v1656, %v1667
  %v1689 = vmax.f32 %v1657, %v1669
  %v1690 = vmax.f32 %v1658, %v1671
  %v1691 = vmax.f32 %v1659, %v1673
  %v1692 = vmax.f32 %v1660, %v1675
  %v1693 = vmax.f32 %v1661, %v1677
  %1694 = vrot.lane.b32.xlu0 %v1326, 104
  %v1695 = vpop.permute.xlu0 %1694
  %1696 = vrot.lane.b32.xlu0 %v1327, 104
  %v1697 = vpop.permute.xlu0 %1696
  %1698 = vrot.lane.b32.xlu0 %v1328, 104
  %v1699 = vpop.permute.xlu0 %1698
  %1700 = vrot.lane.b32.xlu0 %v1329, 104
  %v1701 = vpop.permute.xlu0 %1700
  %1702 = vrot.lane.b32.xlu0 %v1330, 104
  %v1703 = vpop.permute.xlu0 %1702
  %1704 = vrot.lane.b32.xlu0 %v1331, 104
  %v1705 = vpop.permute.xlu0 %1704
  %1706 = vrot.lane.b32.xlu0 %v1332, 104
  %v1707 = vpop.permute.xlu0 %1706
  %1708 = vrot.lane.b32.xlu0 %v1333, 104
  %v1709 = vpop.permute.xlu0 %1708
  %v1718 = vmax.f32 %v1686, %v1695
  %v1719 = vmax.f32 %v1687, %v1697
  %v1720 = vmax.f32 %v1688, %v1699
  %v1721 = vmax.f32 %v1689, %v1701
  %v1722 = vmax.f32 %v1690, %v1703
  %v1723 = vmax.f32 %v1691, %v1705
  %v1724 = vmax.f32 %v1692, %v1707
  %v1725 = vmax.f32 %v1693, %v1709
  %1726 = vrot.lane.b32.xlu0 %v1326, 102
  %v1727 = vpop.permute.xlu0 %1726
  %1728 = vrot.lane.b32.xlu0 %v1327, 102
  %v1729 = vpop.permute.xlu0 %1728
  %1730 = vrot.lane.b32.xlu0 %v1328, 102
  %v1731 = vpop.permute.xlu0 %1730
  %1732 = vrot.lane.b32.xlu0 %v1329, 102
  %v1733 = vpop.permute.xlu0 %1732
  %1734 = vrot.lane.b32.xlu0 %v1330, 102
  %v1735 = vpop.permute.xlu0 %1734
  %1736 = vrot.lane.b32.xlu0 %v1331, 102
  %v1737 = vpop.permute.xlu0 %1736
  %1738 = vrot.lane.b32.xlu0 %v1332, 102
  %v1739 = vpop.permute.xlu0 %1738
  %1740 = vrot.lane.b32.xlu0 %v1333, 102
  %v1741 = vpop.permute.xlu0 %1740
  %v1750 = vmax.f32 %v1718, %v1727
  %v1751 = vmax.f32 %v1719, %v1729
  %v1752 = vmax.f32 %v1720, %v1731
  %v1753 = vmax.f32 %v1721, %v1733
  %v1754 = vmax.f32 %v1722, %v1735
  %v1755 = vmax.f32 %v1723, %v1737
  %v1756 = vmax.f32 %v1724, %v1739
  %v1757 = vmax.f32 %v1725, %v1741
  %1758 = vrot.lane.b32.xlu0 %v1326, 100
  %v1759 = vpop.permute.xlu0 %1758
  %1760 = vrot.lane.b32.xlu0 %v1327, 100
  %v1761 = vpop.permute.xlu0 %1760
  %1762 = vrot.lane.b32.xlu0 %v1328, 100
  %v1763 = vpop.permute.xlu0 %1762
  %1764 = vrot.lane.b32.xlu0 %v1329, 100
  %v1765 = vpop.permute.xlu0 %1764
  %1766 = vrot.lane.b32.xlu0 %v1330, 100
  %v1767 = vpop.permute.xlu0 %1766
  %1768 = vrot.lane.b32.xlu0 %v1331, 100
  %v1769 = vpop.permute.xlu0 %1768
  %1770 = vrot.lane.b32.xlu0 %v1332, 100
  %v1771 = vpop.permute.xlu0 %1770
  %1772 = vrot.lane.b32.xlu0 %v1333, 100
  %v1773 = vpop.permute.xlu0 %1772
  %v1782 = vmax.f32 %v1750, %v1759
  %v1783 = vmax.f32 %v1751, %v1761
  %v1784 = vmax.f32 %v1752, %v1763
  %v1785 = vmax.f32 %v1753, %v1765
  %v1786 = vmax.f32 %v1754, %v1767
  %v1787 = vmax.f32 %v1755, %v1769
  %v1788 = vmax.f32 %v1756, %v1771
  %v1789 = vmax.f32 %v1757, %v1773
  %1790 = vrot.lane.b32.xlu0 %v1326, 98
  %v1791 = vpop.permute.xlu0 %1790
  %1792 = vrot.lane.b32.xlu0 %v1327, 98
  %v1793 = vpop.permute.xlu0 %1792
  %1794 = vrot.lane.b32.xlu0 %v1328, 98
  %v1795 = vpop.permute.xlu0 %1794
  %1796 = vrot.lane.b32.xlu0 %v1329, 98
  %v1797 = vpop.permute.xlu0 %1796
  %1798 = vrot.lane.b32.xlu0 %v1330, 98
  %v1799 = vpop.permute.xlu0 %1798
  %1800 = vrot.lane.b32.xlu0 %v1331, 98
  %v1801 = vpop.permute.xlu0 %1800
  %1802 = vrot.lane.b32.xlu0 %v1332, 98
  %v1803 = vpop.permute.xlu0 %1802
  %1804 = vrot.lane.b32.xlu0 %v1333, 98
  %v1805 = vpop.permute.xlu0 %1804
  %v1814 = vmax.f32 %v1782, %v1791
  %v1815 = vmax.f32 %v1783, %v1793
  %v1816 = vmax.f32 %v1784, %v1795
  %v1817 = vmax.f32 %v1785, %v1797
  %v1818 = vmax.f32 %v1786, %v1799
  %v1819 = vmax.f32 %v1787, %v1801
  %v1820 = vmax.f32 %v1788, %v1803
  %v1821 = vmax.f32 %v1789, %v1805
  %v1822 = vld [vmem:[%s41] sm:$0xff]
  %v1823 = vld [vmem:[%s41 + $0x8] sm:$0xff]
  %v1824 = vld [vmem:[%s41 + $0x10] sm:$0xff]
  %v1825 = vld [vmem:[%s41 + $0x18] sm:$0xff]
  %v1826 = vld [vmem:[%s43] sm:$0xff]
  %v1827 = vld [vmem:[%s43 + $0x8] sm:$0xff]
  %v1828 = vld [vmem:[%s43 + $0x10] sm:$0xff]
  %v1829 = vld [vmem:[%s43 + $0x18] sm:$0xff]
  %1831 = vset.pattern.permute.xlu0 0
  %1832 = vperm.xlu0 %1831, %v1826
  %v1833 = vpop.permute.xlu0 %1832
  %1836 = vset.pattern.permute.xlu0 0
  %1837 = vperm.xlu0 %1836, %v1827
  %v1838 = vpop.permute.xlu0 %1837
  %1841 = vset.pattern.permute.xlu0 0
  %1842 = vperm.xlu0 %1841, %v1828
  %v1843 = vpop.permute.xlu0 %1842
  %1846 = vset.pattern.permute.xlu0 0
  %1847 = vperm.xlu0 %1846, %v1829
  %v1848 = vpop.permute.xlu0 %1847
  %v1851 = vsel %vm852, %v1822, 0
  %v1854 = vsel %vm852, %v1823, 0
  %v1857 = vsel %vm852, %v1824, 0
  %v1860 = vsel %vm852, %v1825, 0
  %1862 = vmatpush.msra.mxu0 0.0
  %1863 = vmatpush.msra.mxu0 0.0
  %1864 = vmatpush.msra.mxu0 0.0
  %1865 = vmatpush.msra.mxu0 0.0
  %1866 = vmatpush.msra.mxu0 0.0
  %1867 = vmatpush.msra.mxu0 0.0
  %1868 = vmatpush.msra.mxu0 0.0
  %1869 = vmatpush.msra.mxu0 0.0
  %1870 = vmatpush.msra.mxu0 %v1821
  %1871 = vmatpush.msra.mxu0 %v1820
  %1872 = vmatpush.msra.mxu0 %v1819
  %1873 = vmatpush.msra.mxu0 %v1818
  %1874 = vmatpush.msra.mxu0 %v1817
  %1875 = vmatpush.msra.mxu0 %v1816
  %1876 = vmatpush.msra.mxu0 %v1815
  %1877 = vmatpush.msra.mxu0 %v1814
  %1878 = vmatmul.f32.gmra.mxu0 %v1851
  %v1879 = vpop.f32.mrf.mxu0
  %v1880 = vadd.f32 %v1833, %v1879
  %1881 = vmatmul.f32.gmra.mxu0 %v1854
  %v1882 = vpop.f32.mrf.mxu0
  %v1883 = vadd.f32 %v1838, %v1882
  %1884 = vmatmul.f32.gmra.mxu0 %v1857
  %v1885 = vpop.f32.mrf.mxu0
  %v1886 = vadd.f32 %v1843, %v1885
  %1887 = vmatmul.f32.gmra.mxu0 %v1860
  %v1888 = vpop.f32.mrf.mxu0
  %v1889 = vadd.f32 %v1848, %v1888
  %1890 = vdwg.mxu0
  %v1891 = vmax.f32 %v1880, 0.0
  %v1892 = vmax.f32 %v1883, 0.0
  %v1893 = vmax.f32 %v1886, 0.0
  %v1894 = vmax.f32 %v1889, 0.0
  %v1895 = vld [vmem:[%s45] sm:$0xff]
  %v1896 = vld [vmem:[%s45 + $0x8] sm:$0xff]
  %v1897 = vld [vmem:[%s47] sm:$0xff]
  %v1898 = vld [vmem:[%s47 + $0x8] sm:$0xff]
  %1900 = vset.pattern.permute.xlu0 0
  %1901 = vperm.xlu0 %1900, %v1897
  %v1902 = vpop.permute.xlu0 %1901
  %1905 = vset.pattern.permute.xlu0 0
  %1906 = vperm.xlu0 %1905, %v1898
  %v1907 = vpop.permute.xlu0 %1906
  %v1910 = vsel %vm262, %v1895, 0
  %v1913 = vsel %vm262, %v1896, 0
  %1915 = vmatpush.msra.mxu0 0.0
  %1916 = vmatpush.msra.mxu0 0.0
  %1917 = vmatpush.msra.mxu0 0.0
  %1918 = vmatpush.msra.mxu0 0.0
  %1919 = vmatpush.msra.mxu0 0.0
  %1920 = vmatpush.msra.mxu0 0.0
  %1921 = vmatpush.msra.mxu0 0.0
  %1922 = vmatpush.msra.mxu0 0.0
  %1923 = vmatpush.msra.mxu0 0.0
  %1924 = vmatpush.msra.mxu0 0.0
  %1925 = vmatpush.msra.mxu0 0.0
  %1926 = vmatpush.msra.mxu0 0.0
  %1927 = vmatpush.msra.mxu0 %v1894
  %1928 = vmatpush.msra.mxu0 %v1893
  %1929 = vmatpush.msra.mxu0 %v1892
  %1930 = vmatpush.msra.mxu0 %v1891
  %1931 = vmatmul.f32.gmra.mxu0 %v1910
  %v1932 = vpop.f32.mrf.mxu0
  %v1933 = vadd.f32 %v1902, %v1932
  %1934 = vmatmul.f32.gmra.mxu0 %v1913
  %v1935 = vpop.f32.mrf.mxu0
  %v1936 = vadd.f32 %v1907, %v1935
  %1937 = vdwg.mxu0
  %v1938 = vmax.f32 %v1933, 0.0
  %v1939 = vmax.f32 %v1936, 0.0
  %v1940 = vld [vmem:[%s49] sm:$0xff]
  %v1941 = vld [vmem:[%s49 + $0x8] sm:$0xff]
  %v1942 = vld [vmem:[%s49 + $0x10] sm:$0xff]
  %v1943 = vld [vmem:[%s49 + $0x18] sm:$0xff]
  %v1944 = vld [vmem:[%s49 + $0x20] sm:$0xff]
  %v1945 = vld [vmem:[%s49 + $0x28] sm:$0xff]
  %v1946 = vld [vmem:[%s49 + $0x30] sm:$0xff]
  %v1947 = vld [vmem:[%s49 + $0x38] sm:$0xff]
  %v1948 = vld [vmem:[%s49 + $0x40] sm:$0xff]
  %v1949 = vld [vmem:[%s49 + $0x48] sm:$0xff]
  %v1950 = vld [vmem:[%s49 + $0x50] sm:$0xff]
  %v1951 = vld [vmem:[%s49 + $0x58] sm:$0xff]
  %v1952 = vld [vmem:[%s49 + $0x60] sm:$0xff]
  %v1953 = vld [vmem:[%s49 + $0x68] sm:$0xff]
  %v1954 = vld [vmem:[%s49 + $0x70] sm:$0xff]
  %v1955 = vld [vmem:[%s49 + $0x78] sm:$0xff]
  %v1956 = vld [vmem:[%s49 + $0x80] sm:$0xff]
  %v1957 = vld [vmem:[%s49 + $0x88] sm:$0xff]
  %v1958 = vld [vmem:[%s49 + $0x90] sm:$0xff]
  %v1959 = vld [vmem:[%s49 + $0x98] sm:$0xff]
  %v1960 = vld [vmem:[%s49 + $0xa0] sm:$0xff]
  %v1961 = vld [vmem:[%s49 + $0xa8] sm:$0xff]
  %v1962 = vld [vmem:[%s49 + $0xb0] sm:$0xff]
  %v1963 = vld [vmem:[%s49 + $0xb8] sm:$0xff]
  %v1964 = vld [vmem:[%s49 + $0xc0] sm:$0xff]
  %v1965 = vld [vmem:[%s49 + $0xc8] sm:$0xff]
  %v1966 = vld [vmem:[%s49 + $0xd0] sm:$0xff]
  %v1967 = vld [vmem:[%s49 + $0xd8] sm:$0xff]
  %v1968 = vld [vmem:[%s49 + $0xe0] sm:$0xff]
  %v1969 = vld [vmem:[%s49 + $0xe8] sm:$0xff]
  %v1970 = vld [vmem:[%s49 + $0xf0] sm:$0xff]
  %v1971 = vld [vmem:[%s49 + $0xf8] sm:$0xff]
  %v1972 = vld [vmem:[%s51] sm:$0xff]
  %v1973 = vld [vmem:[%s51 + $0x8] sm:$0xff]
  %v1974 = vld [vmem:[%s51 + $0x10] sm:$0xff]
  %v1975 = vld [vmem:[%s51 + $0x18] sm:$0xff]
  %v1976 = vld [vmem:[%s51 + $0x20] sm:$0xff]
  %v1977 = vld [vmem:[%s51 + $0x28] sm:$0xff]
  %v1978 = vld [vmem:[%s51 + $0x30] sm:$0xff]
  %v1979 = vld [vmem:[%s51 + $0x38] sm:$0xff]
  %v1980 = vld [vmem:[%s51 + $0x40] sm:$0xff]
  %v1981 = vld [vmem:[%s51 + $0x48] sm:$0xff]
  %v1982 = vld [vmem:[%s51 + $0x50] sm:$0xff]
  %v1983 = vld [vmem:[%s51 + $0x58] sm:$0xff]
  %v1984 = vld [vmem:[%s51 + $0x60] sm:$0xff]
  %v1985 = vld [vmem:[%s51 + $0x68] sm:$0xff]
  %v1986 = vld [vmem:[%s51 + $0x70] sm:$0xff]
  %v1987 = vld [vmem:[%s51 + $0x78] sm:$0xff]
  %v1988 = vld [vmem:[%s51 + $0x80] sm:$0xff]
  %v1989 = vld [vmem:[%s51 + $0x88] sm:$0xff]
  %v1990 = vld [vmem:[%s51 + $0x90] sm:$0xff]
  %v1991 = vld [vmem:[%s51 + $0x98] sm:$0xff]
  %v1992 = vld [vmem:[%s51 + $0xa0] sm:$0xff]
  %v1993 = vld [vmem:[%s51 + $0xa8] sm:$0xff]
  %v1994 = vld [vmem:[%s51 + $0xb0] sm:$0xff]
  %v1995 = vld [vmem:[%s51 + $0xb8] sm:$0xff]
  %v1996 = vld [vmem:[%s51 + $0xc0] sm:$0xff]
  %v1997 = vld [vmem:[%s51 + $0xc8] sm:$0xff]
  %v1998 = vld [vmem:[%s51 + $0xd0] sm:$0xff]
  %v1999 = vld [vmem:[%s51 + $0xd8] sm:$0xff]
  %v2000 = vld [vmem:[%s51 + $0xe0] sm:$0xff]
  %v2001 = vld [vmem:[%s51 + $0xe8] sm:$0xff]
  %v2002 = vld [vmem:[%s51 + $0xf0] sm:$0xff]
  %v2003 = vld [vmem:[%s51 + $0xf8] sm:$0xff]
  %2005 = vset.pattern.permute.xlu0 0
  %2006 = vperm.xlu0 %2005, %v1972
  %v2007 = vpop.permute.xlu0 %2006
  %2010 = vset.pattern.permute.xlu0 0
  %2011 = vperm.xlu0 %2010, %v1973
  %v2012 = vpop.permute.xlu0 %2011
  %2015 = vset.pattern.permute.xlu0 0
  %2016 = vperm.xlu0 %2015, %v1974
  %v2017 = vpop.permute.xlu0 %2016
  %2020 = vset.pattern.permute.xlu0 0
  %2021 = vperm.xlu0 %2020, %v1975
  %v2022 = vpop.permute.xlu0 %2021
  %2025 = vset.pattern.permute.xlu0 0
  %2026 = vperm.xlu0 %2025, %v1976
  %v2027 = vpop.permute.xlu0 %2026
  %2030 = vset.pattern.permute.xlu0 0
  %2031 = vperm.xlu0 %2030, %v1977
  %v2032 = vpop.permute.xlu0 %2031
  %2035 = vset.pattern.permute.xlu0 0
  %2036 = vperm.xlu0 %2035, %v1978
  %v2037 = vpop.permute.xlu0 %2036
  %2040 = vset.pattern.permute.xlu0 0
  %2041 = vperm.xlu0 %2040, %v1979
  %v2042 = vpop.permute.xlu0 %2041
  %2045 = vset.pattern.permute.xlu0 0
  %2046 = vperm.xlu0 %2045, %v1980
  %v2047 = vpop.permute.xlu0 %2046
  %2050 = vset.pattern.permute.xlu0 0
  %2051 = vperm.xlu0 %2050, %v1981
  %v2052 = vpop.permute.xlu0 %2051
  %2055 = vset.pattern.permute.xlu0 0
  %2056 = vperm.xlu0 %2055, %v1982
  %v2057 = vpop.permute.xlu0 %2056
  %2060 = vset.pattern.permute.xlu0 0
  %2061 = vperm.xlu0 %2060, %v1983
  %v2062 = vpop.permute.xlu0 %2061
  %2065 = vset.pattern.permute.xlu0 0
  %2066 = vperm.xlu0 %2065, %v1984
  %v2067 = vpop.permute.xlu0 %2066
  %2070 = vset.pattern.permute.xlu0 0
  %2071 = vperm.xlu0 %2070, %v1985
  %v2072 = vpop.permute.xlu0 %2071
  %2075 = vset.pattern.permute.xlu0 0
  %2076 = vperm.xlu0 %2075, %v1986
  %v2077 = vpop.permute.xlu0 %2076
  %2080 = vset.pattern.permute.xlu0 0
  %2081 = vperm.xlu0 %2080, %v1987
  %v2082 = vpop.permute.xlu0 %2081
  %2085 = vset.pattern.permute.xlu0 0
  %2086 = vperm.xlu0 %2085, %v1988
  %v2087 = vpop.permute.xlu0 %2086
  %2090 = vset.pattern.permute.xlu0 0
  %2091 = vperm.xlu0 %2090, %v1989
  %v2092 = vpop.permute.xlu0 %2091
  %2095 = vset.pattern.permute.xlu0 0
  %2096 = vperm.xlu0 %2095, %v1990
  %v2097 = vpop.permute.xlu0 %2096
  %2100 = vset.pattern.permute.xlu0 0
  %2101 = vperm.xlu0 %2100, %v1991
  %v2102 = vpop.permute.xlu0 %2101
  %2105 = vset.pattern.permute.xlu0 0
  %2106 = vperm.xlu0 %2105, %v1992
  %v2107 = vpop.permute.xlu0 %2106
  %2110 = vset.pattern.permute.xlu0 0
  %2111 = vperm.xlu0 %2110, %v1993
  %v2112 = vpop.permute.xlu0 %2111
  %2115 = vset.pattern.permute.xlu0 0
  %2116 = vperm.xlu0 %2115, %v1994
  %v2117 = vpop.permute.xlu0 %2116
  %2120 = vset.pattern.permute.xlu0 0
  %2121 = vperm.xlu0 %2120, %v1995
  %v2122 = vpop.permute.xlu0 %2121
  %2125 = vset.pattern.permute.xlu0 0
  %2126 = vperm.xlu0 %2125, %v1996
  %v2127 = vpop.permute.xlu0 %2126
  %2130 = vset.pattern.permute.xlu0 0
  %2131 = vperm.xlu0 %2130, %v1997
  %v2132 = vpop.permute.xlu0 %2131
  %2135 = vset.pattern.permute.xlu0 0
  %2136 = vperm.xlu0 %2135, %v1998
  %v2137 = vpop.permute.xlu0 %2136
  %2140 = vset.pattern.permute.xlu0 0
  %2141 = vperm.xlu0 %2140, %v1999
  %v2142 = vpop.permute.xlu0 %2141
  %2145 = vset.pattern.permute.xlu0 0
  %2146 = vperm.xlu0 %2145, %v2000
  %v2147 = vpop.permute.xlu0 %2146
  %2150 = vset.pattern.permute.xlu0 0
  %2151 = vperm.xlu0 %2150, %v2001
  %v2152 = vpop.permute.xlu0 %2151
  %2155 = vset.pattern.permute.xlu0 0
  %2156 = vperm.xlu0 %2155, %v2002
  %v2157 = vpop.permute.xlu0 %2156
  %2160 = vset.pattern.permute.xlu0 0
  %2161 = vperm.xlu0 %2160, %v2003
  %v2162 = vpop.permute.xlu0 %2161
  %v2165 = vsel %vm957, %v1940, 0
  %v2168 = vsel %vm957, %v1941, 0
  %v2171 = vsel %vm957, %v1942, 0
  %v2174 = vsel %vm957, %v1943, 0
  %v2177 = vsel %vm957, %v1944, 0
  %v2180 = vsel %vm957, %v1945, 0
  %v2183 = vsel %vm957, %v1946, 0
  %v2186 = vsel %vm957, %v1947, 0
  %v2189 = vsel %vm957, %v1948, 0
  %v2192 = vsel %vm957, %v1949, 0
  %v2195 = vsel %vm957, %v1950, 0
  %v2198 = vsel %vm957, %v1951, 0
  %v2201 = vsel %vm957, %v1952, 0
  %v2204 = vsel %vm957, %v1953, 0
  %v2207 = vsel %vm957, %v1954, 0
  %v2210 = vsel %vm957, %v1955, 0
  %v2213 = vsel %vm957, %v1956, 0
  %v2216 = vsel %vm957, %v1957, 0
  %v2219 = vsel %vm957, %v1958, 0
  %v2222 = vsel %vm957, %v1959, 0
  %v2225 = vsel %vm957, %v1960, 0
  %v2228 = vsel %vm957, %v1961, 0
  %v2231 = vsel %vm957, %v1962, 0
  %v2234 = vsel %vm957, %v1963, 0
  %v2237 = vsel %vm957, %v1964, 0
  %v2240 = vsel %vm957, %v1965, 0
  %v2243 = vsel %vm957, %v1966, 0
  %v2246 = vsel %vm957, %v1967, 0
  %v2249 = vsel %vm957, %v1968, 0
  %v2252 = vsel %vm957, %v1969, 0
  %v2255 = vsel %vm957, %v1970, 0
  %v2258 = vsel %vm957, %v1971, 0
  %2260 = vmatpush.msra.mxu0 0.0
  %2261 = vmatpush.msra.mxu0 0.0
  %2262 = vmatpush.msra.mxu0 0.0
  %2263 = vmatpush.msra.mxu0 0.0
  %2264 = vmatpush.msra.mxu0 0.0
  %2265 = vmatpush.msra.mxu0 0.0
  %2266 = vmatpush.msra.mxu0 0.0
  %2267 = vmatpush.msra.mxu0 0.0
  %2268 = vmatpush.msra.mxu0 0.0
  %2269 = vmatpush.msra.mxu0 0.0
  %2270 = vmatpush.msra.mxu0 0.0
  %2271 = vmatpush.msra.mxu0 0.0
  %2272 = vmatpush.msra.mxu0 0.0
  %2273 = vmatpush.msra.mxu0 0.0
  %2274 = vmatpush.msra.mxu0 %v1939
  %2275 = vmatpush.msra.mxu0 %v1938
  %2276 = vmatmul.f32.gmra.mxu0 %v2165
  %v2277 = vpop.f32.mrf.mxu0
  %v2278 = vadd.f32 %v2007, %v2277
  %2279 = vmatmul.f32.gmra.mxu0 %v2168
  %v2280 = vpop.f32.mrf.mxu0
  %v2281 = vadd.f32 %v2012, %v2280
  %2282 = vmatmul.f32.gmra.mxu0 %v2171
  %v2283 = vpop.f32.mrf.mxu0
  %v2284 = vadd.f32 %v2017, %v2283
  %2285 = vmatmul.f32.gmra.mxu0 %v2174
  %v2286 = vpop.f32.mrf.mxu0
  %v2287 = vadd.f32 %v2022, %v2286
  %2288 = vmatmul.f32.gmra.mxu0 %v2177
  %v2289 = vpop.f32.mrf.mxu0
  %v2290 = vadd.f32 %v2027, %v2289
  %2291 = vmatmul.f32.gmra.mxu0 %v2180
  %v2292 = vpop.f32.mrf.mxu0
  %v2293 = vadd.f32 %v2032, %v2292
  %2294 = vmatmul.f32.gmra.mxu0 %v2183
  %v2295 = vpop.f32.mrf.mxu0
  %v2296 = vadd.f32 %v2037, %v2295
  %2297 = vmatmul.f32.gmra.mxu0 %v2186
  %v2298 = vpop.f32.mrf.mxu0
  %v2299 = vadd.f32 %v2042, %v2298
  %2300 = vmatmul.f32.gmra.mxu0 %v2189
  %v2301 = vpop.f32.mrf.mxu0
  %v2302 = vadd.f32 %v2047, %v2301
  %2303 = vmatmul.f32.gmra.mxu0 %v2192
  %v2304 = vpop.f32.mrf.mxu0
  %v2305 = vadd.f32 %v2052, %v2304
  %2306 = vmatmul.f32.gmra.mxu0 %v2195
  %v2307 = vpop.f32.mrf.mxu0
  %v2308 = vadd.f32 %v2057, %v2307
  %2309 = vmatmul.f32.gmra.mxu0 %v2198
  %v2310 = vpop.f32.mrf.mxu0
  %v2311 = vadd.f32 %v2062, %v2310
  %2312 = vmatmul.f32.gmra.mxu0 %v2201
  %v2313 = vpop.f32.mrf.mxu0
  %v2314 = vadd.f32 %v2067, %v2313
  %2315 = vmatmul.f32.gmra.mxu0 %v2204
  %v2316 = vpop.f32.mrf.mxu0
  %v2317 = vadd.f32 %v2072, %v2316
  %2318 = vmatmul.f32.gmra.mxu0 %v2207
  %v2319 = vpop.f32.mrf.mxu0
  %v2320 = vadd.f32 %v2077, %v2319
  %2321 = vmatmul.f32.gmra.mxu0 %v2210
  %v2322 = vpop.f32.mrf.mxu0
  %v2323 = vadd.f32 %v2082, %v2322
  %2324 = vmatmul.f32.gmra.mxu0 %v2213
  %v2325 = vpop.f32.mrf.mxu0
  %v2326 = vadd.f32 %v2087, %v2325
  %2327 = vmatmul.f32.gmra.mxu0 %v2216
  %v2328 = vpop.f32.mrf.mxu0
  %v2329 = vadd.f32 %v2092, %v2328
  %2330 = vmatmul.f32.gmra.mxu0 %v2219
  %v2331 = vpop.f32.mrf.mxu0
  %v2332 = vadd.f32 %v2097, %v2331
  %2333 = vmatmul.f32.gmra.mxu0 %v2222
  %v2334 = vpop.f32.mrf.mxu0
  %v2335 = vadd.f32 %v2102, %v2334
  %2336 = vmatmul.f32.gmra.mxu0 %v2225
  %v2337 = vpop.f32.mrf.mxu0
  %v2338 = vadd.f32 %v2107, %v2337
  %2339 = vmatmul.f32.gmra.mxu0 %v2228
  %v2340 = vpop.f32.mrf.mxu0
  %v2341 = vadd.f32 %v2112, %v2340
  %2342 = vmatmul.f32.gmra.mxu0 %v2231
  %v2343 = vpop.f32.mrf.mxu0
  %v2344 = vadd.f32 %v2117, %v2343
  %2345 = vmatmul.f32.gmra.mxu0 %v2234
  %v2346 = vpop.f32.mrf.mxu0
  %v2347 = vadd.f32 %v2122, %v2346
  %2348 = vmatmul.f32.gmra.mxu0 %v2237
  %v2349 = vpop.f32.mrf.mxu0
  %v2350 = vadd.f32 %v2127, %v2349
  %2351 = vmatmul.f32.gmra.mxu0 %v2240
  %v2352 = vpop.f32.mrf.mxu0
  %v2353 = vadd.f32 %v2132, %v2352
  %2354 = vmatmul.f32.gmra.mxu0 %v2243
  %v2355 = vpop.f32.mrf.mxu0
  %v2356 = vadd.f32 %v2137, %v2355
  %2357 = vmatmul.f32.gmra.mxu0 %v2246
  %v2358 = vpop.f32.mrf.mxu0
  %v2359 = vadd.f32 %v2142, %v2358
  %2360 = vmatmul.f32.gmra.mxu0 %v2249
  %v2361 = vpop.f32.mrf.mxu0
  %v2362 = vadd.f32 %v2147, %v2361
  %2363 = vmatmul.f32.gmra.mxu0 %v2252
  %v2364 = vpop.f32.mrf.mxu0
  %v2365 = vadd.f32 %v2152, %v2364
  %2366 = vmatmul.f32.gmra.mxu0 %v2255
  %v2367 = vpop.f32.mrf.mxu0
  %v2368 = vadd.f32 %v2157, %v2367
  %2369 = vmatmul.f32.gmra.mxu0 %v2258
  %v2370 = vpop.f32.mrf.mxu0
  %v2371 = vadd.f32 %v2162, %v2370
  %2372 = vdwg.mxu0
  %v2374 = vsel %vm987, %v2278, 0
  %v2377 = vsel %vm987, %v2281, 0
  %v2380 = vsel %vm987, %v2284, 0
  %v2383 = vsel %vm987, %v2287, 0
  %v2386 = vsel %vm987, %v2290, 0
  %v2389 = vsel %vm987, %v2293, 0
  %v2392 = vsel %vm987, %v2296, 0
  %v2395 = vsel %vm987, %v2299, 0
  %v2398 = vsel %vm987, %v2302, 0
  %v2401 = vsel %vm987, %v2305, 0
  %v2404 = vsel %vm987, %v2308, 0
  %v2407 = vsel %vm987, %v2311, 0
  %v2410 = vsel %vm987, %v2314, 0
  %v2413 = vsel %vm987, %v2317, 0
  %v2416 = vsel %vm987, %v2320, 0
  %v2419 = vsel %vm987, %v2323, 0
  %v2422 = vsel %vm987, %v2326, 0
  %v2425 = vsel %vm987, %v2329, 0
  %v2428 = vsel %vm987, %v2332, 0
  %v2431 = vsel %vm987, %v2335, 0
  %v2434 = vsel %vm987, %v2338, 0
  %v2437 = vsel %vm987, %v2341, 0
  %v2440 = vsel %vm987, %v2344, 0
  %v2443 = vsel %vm987, %v2347, 0
  %v2446 = vsel %vm987, %v2350, 0
  %v2449 = vsel %vm987, %v2353, 0
  %v2452 = vsel %vm987, %v2356, 0
  %v2455 = vsel %vm987, %v2359, 0
  %v2458 = vsel %vm987, %v2362, 0
  %v2461 = vsel %vm987, %v2365, 0
  %v2464 = vsel %vm987, %v2368, 0
  %v2467 = vsel %vm987, %v2371, 0
  %2469 = vmatpush.msra.mxu0 0.0
  %2470 = vmatpush.msra.mxu0 0.0
  %2471 = vmatpush.msra.mxu0 0.0
  %2472 = vmatpush.msra.mxu0 0.0
  %2473 = vmatpush.msra.mxu0 0.0
  %2474 = vmatpush.msra.mxu0 0.0
  %2475 = vmatpush.msra.mxu0 0.0
  %2476 = vmatpush.msra.mxu0 0.0
  %2477 = vmatpush.msra.mxu0 0.0
  %2478 = vmatpush.msra.mxu0 0.0
  %2479 = vmatpush.msra.mxu0 0.0
  %2480 = vmatpush.msra.mxu0 0.0
  %2481 = vmatpush.msra.mxu0 0.0
  %2482 = vmatpush.msra.mxu0 0.0
  %2483 = vmatpush.msra.mxu0 0.0
  %2484 = vmatpush.msra.mxu0 %v996
  %2485 = vmatmul.f32.gmra.mxu0 %v2374
  %v2486 = vpop.f32.mrf.mxu0
  %v2487 = vadd.f32 0.0, %v2486
  %2488 = vmatmul.f32.gmra.mxu0 %v2377
  %v2489 = vpop.f32.mrf.mxu0
  %v2490 = vadd.f32 0.0, %v2489
  %2491 = vmatmul.f32.gmra.mxu0 %v2380
  %v2492 = vpop.f32.mrf.mxu0
  %v2493 = vadd.f32 0.0, %v2492
  %2494 = vmatmul.f32.gmra.mxu0 %v2383
  %v2495 = vpop.f32.mrf.mxu0
  %v2496 = vadd.f32 0.0, %v2495
  %2497 = vmatmul.f32.gmra.mxu0 %v2386
  %v2498 = vpop.f32.mrf.mxu0
  %v2499 = vadd.f32 0.0, %v2498
  %2500 = vmatmul.f32.gmra.mxu0 %v2389
  %v2501 = vpop.f32.mrf.mxu0
  %v2502 = vadd.f32 0.0, %v2501
  %2503 = vmatmul.f32.gmra.mxu0 %v2392
  %v2504 = vpop.f32.mrf.mxu0
  %v2505 = vadd.f32 0.0, %v2504
  %2506 = vmatmul.f32.gmra.mxu0 %v2395
  %v2507 = vpop.f32.mrf.mxu0
  %v2508 = vadd.f32 0.0, %v2507
  %2509 = vmatmul.f32.gmra.mxu0 %v2398
  %v2510 = vpop.f32.mrf.mxu0
  %v2511 = vadd.f32 0.0, %v2510
  %2512 = vmatmul.f32.gmra.mxu0 %v2401
  %v2513 = vpop.f32.mrf.mxu0
  %v2514 = vadd.f32 0.0, %v2513
  %2515 = vmatmul.f32.gmra.mxu0 %v2404
  %v2516 = vpop.f32.mrf.mxu0
  %v2517 = vadd.f32 0.0, %v2516
  %2518 = vmatmul.f32.gmra.mxu0 %v2407
  %v2519 = vpop.f32.mrf.mxu0
  %v2520 = vadd.f32 0.0, %v2519
  %2521 = vmatmul.f32.gmra.mxu0 %v2410
  %v2522 = vpop.f32.mrf.mxu0
  %v2523 = vadd.f32 0.0, %v2522
  %2524 = vmatmul.f32.gmra.mxu0 %v2413
  %v2525 = vpop.f32.mrf.mxu0
  %v2526 = vadd.f32 0.0, %v2525
  %2527 = vmatmul.f32.gmra.mxu0 %v2416
  %v2528 = vpop.f32.mrf.mxu0
  %v2529 = vadd.f32 0.0, %v2528
  %2530 = vmatmul.f32.gmra.mxu0 %v2419
  %v2531 = vpop.f32.mrf.mxu0
  %v2532 = vadd.f32 0.0, %v2531
  %2533 = vmatmul.f32.gmra.mxu0 %v2422
  %v2534 = vpop.f32.mrf.mxu0
  %v2535 = vadd.f32 0.0, %v2534
  %2536 = vmatmul.f32.gmra.mxu0 %v2425
  %v2537 = vpop.f32.mrf.mxu0
  %v2538 = vadd.f32 0.0, %v2537
  %2539 = vmatmul.f32.gmra.mxu0 %v2428
  %v2540 = vpop.f32.mrf.mxu0
  %v2541 = vadd.f32 0.0, %v2540
  %2542 = vmatmul.f32.gmra.mxu0 %v2431
  %v2543 = vpop.f32.mrf.mxu0
  %v2544 = vadd.f32 0.0, %v2543
  %2545 = vmatmul.f32.gmra.mxu0 %v2434
  %v2546 = vpop.f32.mrf.mxu0
  %v2547 = vadd.f32 0.0, %v2546
  %2548 = vmatmul.f32.gmra.mxu0 %v2437
  %v2549 = vpop.f32.mrf.mxu0
  %v2550 = vadd.f32 0.0, %v2549
  %2551 = vmatmul.f32.gmra.mxu0 %v2440
  %v2552 = vpop.f32.mrf.mxu0
  %v2553 = vadd.f32 0.0, %v2552
  %2554 = vmatmul.f32.gmra.mxu0 %v2443
  %v2555 = vpop.f32.mrf.mxu0
  %v2556 = vadd.f32 0.0, %v2555
  %2557 = vmatmul.f32.gmra.mxu0 %v2446
  %v2558 = vpop.f32.mrf.mxu0
  %v2559 = vadd.f32 0.0, %v2558
  %2560 = vmatmul.f32.gmra.mxu0 %v2449
  %v2561 = vpop.f32.mrf.mxu0
  %v2562 = vadd.f32 0.0, %v2561
  %2563 = vmatmul.f32.gmra.mxu0 %v2452
  %v2564 = vpop.f32.mrf.mxu0
  %v2565 = vadd.f32 0.0, %v2564
  %2566 = vmatmul.f32.gmra.mxu0 %v2455
  %v2567 = vpop.f32.mrf.mxu0
  %v2568 = vadd.f32 0.0, %v2567
  %2569 = vmatmul.f32.gmra.mxu0 %v2458
  %v2570 = vpop.f32.mrf.mxu0
  %v2571 = vadd.f32 0.0, %v2570
  %2572 = vmatmul.f32.gmra.mxu0 %v2461
  %v2573 = vpop.f32.mrf.mxu0
  %v2574 = vadd.f32 0.0, %v2573
  %2575 = vmatmul.f32.gmra.mxu0 %v2464
  %v2576 = vpop.f32.mrf.mxu0
  %v2577 = vadd.f32 0.0, %v2576
  %2578 = vmatmul.f32.gmra.mxu0 %v2467
  %v2579 = vpop.f32.mrf.mxu0
  %v2580 = vadd.f32 0.0, %v2579
  %2581 = vdwg.mxu0
  %v2582 = vperm.slane %v1130, 0
  %v2583 = vmul.f32 %v2487, %v2582
  %v2584 = vmul.f32 %v2490, %v2582
  %v2585 = vperm.slane %v1130, 1
  %v2586 = vmul.f32 %v2493, %v2585
  %v2587 = vmul.f32 %v2496, %v2585
  %v2588 = vadd.f32 %v2583, %v2586
  %v2589 = vadd.f32 %v2584, %v2587
  %v2590 = vperm.slane %v1130, 2
  %v2591 = vmul.f32 %v2499, %v2590
  %v2592 = vmul.f32 %v2502, %v2590
  %v2593 = vadd.f32 %v2588, %v2591
  %v2594 = vadd.f32 %v2589, %v2592
  %v2595 = vperm.slane %v1130, 3
  %v2596 = vmul.f32 %v2505, %v2595
  %v2597 = vmul.f32 %v2508, %v2595
  %v2598 = vadd.f32 %v2593, %v2596
  %v2599 = vadd.f32 %v2594, %v2597
  %v2600 = vperm.slane %v1130, 4
  %v2601 = vmul.f32 %v2511, %v2600
  %v2602 = vmul.f32 %v2514, %v2600
  %v2603 = vadd.f32 %v2598, %v2601
  %v2604 = vadd.f32 %v2599, %v2602
  %v2605 = vperm.slane %v1130, 5
  %v2606 = vmul.f32 %v2517, %v2605
  %v2607 = vmul.f32 %v2520, %v2605
  %v2608 = vadd.f32 %v2603, %v2606
  %v2609 = vadd.f32 %v2604, %v2607
  %v2610 = vperm.slane %v1130, 6
  %v2611 = vmul.f32 %v2523, %v2610
  %v2612 = vmul.f32 %v2526, %v2610
  %v2613 = vadd.f32 %v2608, %v2611
  %v2614 = vadd.f32 %v2609, %v2612
  %v2615 = vperm.slane %v1130, 7
  %v2616 = vmul.f32 %v2529, %v2615
  %v2617 = vmul.f32 %v2532, %v2615
  %v2618 = vadd.f32 %v2613, %v2616
  %v2619 = vadd.f32 %v2614, %v2617
  %v2620 = vperm.slane %v1131, 0
  %v2621 = vmul.f32 %v2535, %v2620
  %v2622 = vmul.f32 %v2538, %v2620
  %v2623 = vadd.f32 %v2618, %v2621
  %v2624 = vadd.f32 %v2619, %v2622
  %v2625 = vperm.slane %v1131, 1
  %v2626 = vmul.f32 %v2541, %v2625
  %v2627 = vmul.f32 %v2544, %v2625
  %v2628 = vadd.f32 %v2623, %v2626
  %v2629 = vadd.f32 %v2624, %v2627
  %v2630 = vperm.slane %v1131, 2
  %v2631 = vmul.f32 %v2547, %v2630
  %v2632 = vmul.f32 %v2550, %v2630
  %v2633 = vadd.f32 %v2628, %v2631
  %v2634 = vadd.f32 %v2629, %v2632
  %v2635 = vperm.slane %v1131, 3
  %v2636 = vmul.f32 %v2553, %v2635
  %v2637 = vmul.f32 %v2556, %v2635
  %v2638 = vadd.f32 %v2633, %v2636
  %v2639 = vadd.f32 %v2634, %v2637
  %v2640 = vperm.slane %v1131, 4
  %v2641 = vmul.f32 %v2559, %v2640
  %v2642 = vmul.f32 %v2562, %v2640
  %v2643 = vadd.f32 %v2638, %v2641
  %v2644 = vadd.f32 %v2639, %v2642
  %v2645 = vperm.slane %v1131, 5
  %v2646 = vmul.f32 %v2565, %v2645
  %v2647 = vmul.f32 %v2568, %v2645
  %v2648 = vadd.f32 %v2643, %v2646
  %v2649 = vadd.f32 %v2644, %v2647
  %v2650 = vperm.slane %v1131, 6
  %v2651 = vmul.f32 %v2571, %v2650
  %v2652 = vmul.f32 %v2574, %v2650
  %v2653 = vadd.f32 %v2648, %v2651
  %v2654 = vadd.f32 %v2649, %v2652
  %v2655 = vperm.slane %v1131, 7
  %v2656 = vmul.f32 %v2577, %v2655
  %v2657 = vmul.f32 %v2580, %v2655
  %v2658 = vadd.f32 %v2653, %v2656
  %v2659 = vadd.f32 %v2654, %v2657
  %v2660 = vld [vmem:[%s53] sm:$0xff]
  %v2661 = vld [vmem:[%s53 + $0x8] sm:$0xff]
  %v2662 = vld [vmem:[%s53 + $0x10] sm:$0xff]
  %v2663 = vld [vmem:[%s53 + $0x18] sm:$0xff]
  %v2664 = vld [vmem:[%s55] sm:$0xff]
  %v2665 = vld [vmem:[%s55 + $0x8] sm:$0xff]
  %v2666 = vld [vmem:[%s55 + $0x10] sm:$0xff]
  %v2667 = vld [vmem:[%s55 + $0x18] sm:$0xff]
  %2669 = vset.pattern.permute.xlu0 0
  %2670 = vperm.xlu0 %2669, %v2664
  %v2671 = vpop.permute.xlu0 %2670
  %2674 = vset.pattern.permute.xlu0 0
  %2675 = vperm.xlu0 %2674, %v2665
  %v2676 = vpop.permute.xlu0 %2675
  %2679 = vset.pattern.permute.xlu0 0
  %2680 = vperm.xlu0 %2679, %v2666
  %v2681 = vpop.permute.xlu0 %2680
  %2684 = vset.pattern.permute.xlu0 0
  %2685 = vperm.xlu0 %2684, %v2667
  %v2686 = vpop.permute.xlu0 %2685
  %v2689 = vsel %vm957, %v2660, 0
  %v2692 = vsel %vm957, %v2661, 0
  %v2695 = vsel %vm957, %v2662, 0
  %v2698 = vsel %vm957, %v2663, 0
  %2700 = vmatpush.msra.mxu0 0.0
  %2701 = vmatpush.msra.mxu0 0.0
  %2702 = vmatpush.msra.mxu0 0.0
  %2703 = vmatpush.msra.mxu0 0.0
  %2704 = vmatpush.msra.mxu0 0.0
  %2705 = vmatpush.msra.mxu0 0.0
  %2706 = vmatpush.msra.mxu0 0.0
  %2707 = vmatpush.msra.mxu0 0.0
  %2708 = vmatpush.msra.mxu0 0.0
  %2709 = vmatpush.msra.mxu0 0.0
  %2710 = vmatpush.msra.mxu0 0.0
  %2711 = vmatpush.msra.mxu0 0.0
  %2712 = vmatpush.msra.mxu0 0.0
  %2713 = vmatpush.msra.mxu0 0.0
  %2714 = vmatpush.msra.mxu0 %v2659
  %2715 = vmatpush.msra.mxu0 %v2658
  %2716 = vmatmul.f32.gmra.mxu0 %v2689
  %v2717 = vpop.f32.mrf.mxu0
  %v2718 = vadd.f32 %v2671, %v2717
  %2719 = vmatmul.f32.gmra.mxu0 %v2692
  %v2720 = vpop.f32.mrf.mxu0
  %v2721 = vadd.f32 %v2676, %v2720
  %2722 = vmatmul.f32.gmra.mxu0 %v2695
  %v2723 = vpop.f32.mrf.mxu0
  %v2724 = vadd.f32 %v2681, %v2723
  %2725 = vmatmul.f32.gmra.mxu0 %v2698
  %v2726 = vpop.f32.mrf.mxu0
  %v2727 = vadd.f32 %v2686, %v2726
  %2728 = vdwg.mxu0
  %v2729 = vmax.f32 %v2718, 0.0
  %v2730 = vmax.f32 %v2721, 0.0
  %v2731 = vmax.f32 %v2724, 0.0
  %v2732 = vmax.f32 %v2727, 0.0
  %v2733 = vld [vmem:[%s57] sm:$0xff]
  %v2734 = vld [vmem:[%s57 + $0x8] sm:$0xff]
  %v2735 = vld [vmem:[%s57 + $0x10] sm:$0xff]
  %v2736 = vld [vmem:[%s57 + $0x18] sm:$0xff]
  %v2737 = vld [vmem:[%s57 + $0x20] sm:$0xff]
  %v2738 = vld [vmem:[%s57 + $0x28] sm:$0xff]
  %v2739 = vld [vmem:[%s57 + $0x30] sm:$0xff]
  %v2740 = vld [vmem:[%s57 + $0x38] sm:$0xff]
  %v2741 = vld [vmem:[%s59] sm:$0xff]
  %v2742 = vld [vmem:[%s59 + $0x8] sm:$0xff]
  %v2743 = vld [vmem:[%s59 + $0x10] sm:$0xff]
  %v2744 = vld [vmem:[%s59 + $0x18] sm:$0xff]
  %v2745 = vld [vmem:[%s59 + $0x20] sm:$0xff]
  %v2746 = vld [vmem:[%s59 + $0x28] sm:$0xff]
  %v2747 = vld [vmem:[%s59 + $0x30] sm:$0xff]
  %v2748 = vld [vmem:[%s59 + $0x38] sm:$0xff]
  %2750 = vset.pattern.permute.xlu0 0
  %2751 = vperm.xlu0 %2750, %v2741
  %v2752 = vpop.permute.xlu0 %2751
  %2755 = vset.pattern.permute.xlu0 0
  %2756 = vperm.xlu0 %2755, %v2742
  %v2757 = vpop.permute.xlu0 %2756
  %2760 = vset.pattern.permute.xlu0 0
  %2761 = vperm.xlu0 %2760, %v2743
  %v2762 = vpop.permute.xlu0 %2761
  %2765 = vset.pattern.permute.xlu0 0
  %2766 = vperm.xlu0 %2765, %v2744
  %v2767 = vpop.permute.xlu0 %2766
  %2770 = vset.pattern.permute.xlu0 0
  %2771 = vperm.xlu0 %2770, %v2745
  %v2772 = vpop.permute.xlu0 %2771
  %2775 = vset.pattern.permute.xlu0 0
  %2776 = vperm.xlu0 %2775, %v2746
  %v2777 = vpop.permute.xlu0 %2776
  %2780 = vset.pattern.permute.xlu0 0
  %2781 = vperm.xlu0 %2780, %v2747
  %v2782 = vpop.permute.xlu0 %2781
  %2785 = vset.pattern.permute.xlu0 0
  %2786 = vperm.xlu0 %2785, %v2748
  %v2787 = vpop.permute.xlu0 %2786
  %v2790 = vsel %vm262, %v2733, 0
  %v2793 = vsel %vm262, %v2734, 0
  %v2796 = vsel %vm262, %v2735, 0
  %v2799 = vsel %vm262, %v2736, 0
  %v2802 = vsel %vm262, %v2737, 0
  %v2805 = vsel %vm262, %v2738, 0
  %v2808 = vsel %vm262, %v2739, 0
  %v2811 = vsel %vm262, %v2740, 0
  %2813 = vmatpush.msra.mxu0 0.0
  %2814 = vmatpush.msra.mxu0 0.0
  %2815 = vmatpush.msra.mxu0 0.0
  %2816 = vmatpush.msra.mxu0 0.0
  %2817 = vmatpush.msra.mxu0 0.0
  %2818 = vmatpush.msra.mxu0 0.0
  %2819 = vmatpush.msra.mxu0 0.0
  %2820 = vmatpush.msra.mxu0 0.0
  %2821 = vmatpush.msra.mxu0 0.0
  %2822 = vmatpush.msra.mxu0 0.0
  %2823 = vmatpush.msra.mxu0 0.0
  %2824 = vmatpush.msra.mxu0 0.0
  %2825 = vmatpush.msra.mxu0 %v2732
  %2826 = vmatpush.msra.mxu0 %v2731
  %2827 = vmatpush.msra.mxu0 %v2730
  %2828 = vmatpush.msra.mxu0 %v2729
  %2829 = vmatmul.f32.gmra.mxu0 %v2790
  %v2830 = vpop.f32.mrf.mxu0
  %v2831 = vadd.f32 %v2752, %v2830
  %2832 = vmatmul.f32.gmra.mxu0 %v2793
  %v2833 = vpop.f32.mrf.mxu0
  %v2834 = vadd.f32 %v2757, %v2833
  %2835 = vmatmul.f32.gmra.mxu0 %v2796
  %v2836 = vpop.f32.mrf.mxu0
  %v2837 = vadd.f32 %v2762, %v2836
  %2838 = vmatmul.f32.gmra.mxu0 %v2799
  %v2839 = vpop.f32.mrf.mxu0
  %v2840 = vadd.f32 %v2767, %v2839
  %2841 = vmatmul.f32.gmra.mxu0 %v2802
  %v2842 = vpop.f32.mrf.mxu0
  %v2843 = vadd.f32 %v2772, %v2842
  %2844 = vmatmul.f32.gmra.mxu0 %v2805
  %v2845 = vpop.f32.mrf.mxu0
  %v2846 = vadd.f32 %v2777, %v2845
  %2847 = vmatmul.f32.gmra.mxu0 %v2808
  %v2848 = vpop.f32.mrf.mxu0
  %v2849 = vadd.f32 %v2782, %v2848
  %2850 = vmatmul.f32.gmra.mxu0 %v2811
  %v2851 = vpop.f32.mrf.mxu0
  %v2852 = vadd.f32 %v2787, %v2851
  %2853 = vdwg.mxu0
  %v2854 = vmax.f32 %v2831, 0.0
  %v2855 = vmax.f32 %v2834, 0.0
  %v2856 = vmax.f32 %v2837, 0.0
  %v2857 = vmax.f32 %v2840, 0.0
  %v2858 = vmax.f32 %v2843, 0.0
  %v2859 = vmax.f32 %v2846, 0.0
  %v2860 = vmax.f32 %v2849, 0.0
  %v2861 = vmax.f32 %v2852, 0.0
  %2870 = vrot.lane.b32.xlu0 %v2854, 126
  %v2871 = vpop.permute.xlu0 %2870
  %2872 = vrot.lane.b32.xlu0 %v2855, 126
  %v2873 = vpop.permute.xlu0 %2872
  %2874 = vrot.lane.b32.xlu0 %v2856, 126
  %v2875 = vpop.permute.xlu0 %2874
  %2876 = vrot.lane.b32.xlu0 %v2857, 126
  %v2877 = vpop.permute.xlu0 %2876
  %2878 = vrot.lane.b32.xlu0 %v2858, 126
  %v2879 = vpop.permute.xlu0 %2878
  %2880 = vrot.lane.b32.xlu0 %v2859, 126
  %v2881 = vpop.permute.xlu0 %2880
  %2882 = vrot.lane.b32.xlu0 %v2860, 126
  %v2883 = vpop.permute.xlu0 %2882
  %2884 = vrot.lane.b32.xlu0 %v2861, 126
  %v2885 = vpop.permute.xlu0 %2884
  %v2894 = vmax.f32 %v2854, %v2871
  %v2895 = vmax.f32 %v2855, %v2873
  %v2896 = vmax.f32 %v2856, %v2875
  %v2897 = vmax.f32 %v2857, %v2877
  %v2898 = vmax.f32 %v2858, %v2879
  %v2899 = vmax.f32 %v2859, %v2881
  %v2900 = vmax.f32 %v2860, %v2883
  %v2901 = vmax.f32 %v2861, %v2885
  %2902 = vrot.lane.b32.xlu0 %v2854, 124
  %v2903 = vpop.permute.xlu0 %2902
  %2904 = vrot.lane.b32.xlu0 %v2855, 124
  %v2905 = vpop.permute.xlu0 %2904
  %2906 = vrot.lane.b32.xlu0 %v2856, 124
  %v2907 = vpop.permute.xlu0 %2906
  %2908 = vrot.lane.b32.xlu0 %v2857, 124
  %v2909 = vpop.permute.xlu0 %2908
  %2910 = vrot.lane.b32.xlu0 %v2858, 124
  %v2911 = vpop.permute.xlu0 %2910
  %2912 = vrot.lane.b32.xlu0 %v2859, 124
  %v2913 = vpop.permute.xlu0 %2912
  %2914 = vrot.lane.b32.xlu0 %v2860, 124
  %v2915 = vpop.permute.xlu0 %2914
  %2916 = vrot.lane.b32.xlu0 %v2861, 124
  %v2917 = vpop.permute.xlu0 %2916
  %v2926 = vmax.f32 %v2894, %v2903
  %v2927 = vmax.f32 %v2895, %v2905
  %v2928 = vmax.f32 %v2896, %v2907
  %v2929 = vmax.f32 %v2897, %v2909
  %v2930 = vmax.f32 %v2898, %v2911
  %v2931 = vmax.f32 %v2899, %v2913
  %v2932 = vmax.f32 %v2900, %v2915
  %v2933 = vmax.f32 %v2901, %v2917
  %2934 = vrot.lane.b32.xlu0 %v2854, 122
  %v2935 = vpop.permute.xlu0 %2934
  %2936 = vrot.lane.b32.xlu0 %v2855, 122
  %v2937 = vpop.permute.xlu0 %2936
  %2938 = vrot.lane.b32.xlu0 %v2856, 122
  %v2939 = vpop.permute.xlu0 %2938
  %2940 = vrot.lane.b32.xlu0 %v2857, 122
  %v2941 = vpop.permute.xlu0 %2940
  %2942 = vrot.lane.b32.xlu0 %v2858, 122
  %v2943 = vpop.permute.xlu0 %2942
  %2944 = vrot.lane.b32.xlu0 %v2859, 122
  %v2945 = vpop.permute.xlu0 %2944
  %2946 = vrot.lane.b32.xlu0 %v2860, 122
  %v2947 = vpop.permute.xlu0 %2946
  %2948 = vrot.lane.b32.xlu0 %v2861, 122
  %v2949 = vpop.permute.xlu0 %2948
  %v2958 = vmax.f32 %v2926, %v2935
  %v2959 = vmax.f32 %v2927, %v2937
  %v2960 = vmax.f32 %v2928, %v2939
  %v2961 = vmax.f32 %v2929, %v2941
  %v2962 = vmax.f32 %v2930, %v2943
  %v2963 = vmax.f32 %v2931, %v2945
  %v2964 = vmax.f32 %v2932, %v2947
  %v2965 = vmax.f32 %v2933, %v2949
  %2966 = vrot.lane.b32.xlu0 %v2854, 120
  %v2967 = vpop.permute.xlu0 %2966
  %2968 = vrot.lane.b32.xlu0 %v2855, 120
  %v2969 = vpop.permute.xlu0 %2968
  %2970 = vrot.lane.b32.xlu0 %v2856, 120
  %v2971 = vpop.permute.xlu0 %2970
  %2972 = vrot.lane.b32.xlu0 %v2857, 120
  %v2973 = vpop.permute.xlu0 %2972
  %2974 = vrot.lane.b32.xlu0 %v2858, 120
  %v2975 = vpop.permute.xlu0 %2974
  %2976 = vrot.lane.b32.xlu0 %v2859, 120
  %v2977 = vpop.permute.xlu0 %2976
  %2978 = vrot.lane.b32.xlu0 %v2860, 120
  %v2979 = vpop.permute.xlu0 %2978
  %2980 = vrot.lane.b32.xlu0 %v2861, 120
  %v2981 = vpop.permute.xlu0 %2980
  %v2990 = vmax.f32 %v2958, %v2967
  %v2991 = vmax.f32 %v2959, %v2969
  %v2992 = vmax.f32 %v2960, %v2971
  %v2993 = vmax.f32 %v2961, %v2973
  %v2994 = vmax.f32 %v2962, %v2975
  %v2995 = vmax.f32 %v2963, %v2977
  %v2996 = vmax.f32 %v2964, %v2979
  %v2997 = vmax.f32 %v2965, %v2981
  %2998 = vrot.lane.b32.xlu0 %v2854, 118
  %v2999 = vpop.permute.xlu0 %2998
  %3000 = vrot.lane.b32.xlu0 %v2855, 118
  %v3001 = vpop.permute.xlu0 %3000
  %3002 = vrot.lane.b32.xlu0 %v2856, 118
  %v3003 = vpop.permute.xlu0 %3002
  %3004 = vrot.lane.b32.xlu0 %v2857, 118
  %v3005 = vpop.permute.xlu0 %3004
  %3006 = vrot.lane.b32.xlu0 %v2858, 118
  %v3007 = vpop.permute.xlu0 %3006
  %3008 = vrot.lane.b32.xlu0 %v2859, 118
  %v3009 = vpop.permute.xlu0 %3008
  %3010 = vrot.lane.b32.xlu0 %v2860, 118
  %v3011 = vpop.permute.xlu0 %3010
  %3012 = vrot.lane.b32.xlu0 %v2861, 118
  %v3013 = vpop.permute.xlu0 %3012
  %v3022 = vmax.f32 %v2990, %v2999
  %v3023 = vmax.f32 %v2991, %v3001
  %v3024 = vmax.f32 %v2992, %v3003
  %v3025 = vmax.f32 %v2993, %v3005
  %v3026 = vmax.f32 %v2994, %v3007
  %v3027 = vmax.f32 %v2995, %v3009
  %v3028 = vmax.f32 %v2996, %v3011
  %v3029 = vmax.f32 %v2997, %v3013
  %3030 = vrot.lane.b32.xlu0 %v2854, 116
  %v3031 = vpop.permute.xlu0 %3030
  %3032 = vrot.lane.b32.xlu0 %v2855, 116
  %v3033 = vpop.permute.xlu0 %3032
  %3034 = vrot.lane.b32.xlu0 %v2856, 116
  %v3035 = vpop.permute.xlu0 %3034
  %3036 = vrot.lane.b32.xlu0 %v2857, 116
  %v3037 = vpop.permute.xlu0 %3036
  %3038 = vrot.lane.b32.xlu0 %v2858, 116
  %v3039 = vpop.permute.xlu0 %3038
  %3040 = vrot.lane.b32.xlu0 %v2859, 116
  %v3041 = vpop.permute.xlu0 %3040
  %3042 = vrot.lane.b32.xlu0 %v2860, 116
  %v3043 = vpop.permute.xlu0 %3042
  %3044 = vrot.lane.b32.xlu0 %v2861, 116
  %v3045 = vpop.permute.xlu0 %3044
  %v3054 = vmax.f32 %v3022, %v3031
  %v3055 = vmax.f32 %v3023, %v3033
  %v3056 = vmax.f32 %v3024, %v3035
  %v3057 = vmax.f32 %v3025, %v3037
  %v3058 = vmax.f32 %v3026, %v3039
  %v3059 = vmax.f32 %v3027, %v3041
  %v3060 = vmax.f32 %v3028, %v3043
  %v3061 = vmax.f32 %v3029, %v3045
  %3062 = vrot.lane.b32.xlu0 %v2854, 114
  %v3063 = vpop.permute.xlu0 %3062
  %3064 = vrot.lane.b32.xlu0 %v2855, 114
  %v3065 = vpop.permute.xlu0 %3064
  %3066 = vrot.lane.b32.xlu0 %v2856, 114
  %v3067 = vpop.permute.xlu0 %3066
  %3068 = vrot.lane.b32.xlu0 %v2857, 114
  %v3069 = vpop.permute.xlu0 %3068
  %3070 = vrot.lane.b32.xlu0 %v2858, 114
  %v3071 = vpop.permute.xlu0 %3070
  %3072 = vrot.lane.b32.xlu0 %v2859, 114
  %v3073 = vpop.permute.xlu0 %3072
  %3074 = vrot.lane.b32.xlu0 %v2860, 114
  %v3075 = vpop.permute.xlu0 %3074
  %3076 = vrot.lane.b32.xlu0 %v2861, 114
  %v3077 = vpop.permute.xlu0 %3076
  %v3086 = vmax.f32 %v3054, %v3063
  %v3087 = vmax.f32 %v3055, %v3065
  %v3088 = vmax.f32 %v3056, %v3067
  %v3089 = vmax.f32 %v3057, %v3069
  %v3090 = vmax.f32 %v3058, %v3071
  %v3091 = vmax.f32 %v3059, %v3073
  %v3092 = vmax.f32 %v3060, %v3075
  %v3093 = vmax.f32 %v3061, %v3077
  %3094 = vrot.lane.b32.xlu0 %v2854, 112
  %v3095 = vpop.permute.xlu0 %3094
  %3096 = vrot.lane.b32.xlu0 %v2855, 112
  %v3097 = vpop.permute.xlu0 %3096
  %3098 = vrot.lane.b32.xlu0 %v2856, 112
  %v3099 = vpop.permute.xlu0 %3098
  %3100 = vrot.lane.b32.xlu0 %v2857, 112
  %v3101 = vpop.permute.xlu0 %3100
  %3102 = vrot.lane.b32.xlu0 %v2858, 112
  %v3103 = vpop.permute.xlu0 %3102
  %3104 = vrot.lane.b32.xlu0 %v2859, 112
  %v3105 = vpop.permute.xlu0 %3104
  %3106 = vrot.lane.b32.xlu0 %v2860, 112
  %v3107 = vpop.permute.xlu0 %3106
  %3108 = vrot.lane.b32.xlu0 %v2861, 112
  %v3109 = vpop.permute.xlu0 %3108
  %v3118 = vmax.f32 %v3086, %v3095
  %v3119 = vmax.f32 %v3087, %v3097
  %v3120 = vmax.f32 %v3088, %v3099
  %v3121 = vmax.f32 %v3089, %v3101
  %v3122 = vmax.f32 %v3090, %v3103
  %v3123 = vmax.f32 %v3091, %v3105
  %v3124 = vmax.f32 %v3092, %v3107
  %v3125 = vmax.f32 %v3093, %v3109
  %3126 = vrot.lane.b32.xlu0 %v2854, 110
  %v3127 = vpop.permute.xlu0 %3126
  %3128 = vrot.lane.b32.xlu0 %v2855, 110
  %v3129 = vpop.permute.xlu0 %3128
  %3130 = vrot.lane.b32.xlu0 %v2856, 110
  %v3131 = vpop.permute.xlu0 %3130
  %3132 = vrot.lane.b32.xlu0 %v2857, 110
  %v3133 = vpop.permute.xlu0 %3132
  %3134 = vrot.lane.b32.xlu0 %v2858, 110
  %v3135 = vpop.permute.xlu0 %3134
  %3136 = vrot.lane.b32.xlu0 %v2859, 110
  %v3137 = vpop.permute.xlu0 %3136
  %3138 = vrot.lane.b32.xlu0 %v2860, 110
  %v3139 = vpop.permute.xlu0 %3138
  %3140 = vrot.lane.b32.xlu0 %v2861, 110
  %v3141 = vpop.permute.xlu0 %3140
  %v3150 = vmax.f32 %v3118, %v3127
  %v3151 = vmax.f32 %v3119, %v3129
  %v3152 = vmax.f32 %v3120, %v3131
  %v3153 = vmax.f32 %v3121, %v3133
  %v3154 = vmax.f32 %v3122, %v3135
  %v3155 = vmax.f32 %v3123, %v3137
  %v3156 = vmax.f32 %v3124, %v3139
  %v3157 = vmax.f32 %v3125, %v3141
  %3158 = vrot.lane.b32.xlu0 %v2854, 108
  %v3159 = vpop.permute.xlu0 %3158
  %3160 = vrot.lane.b32.xlu0 %v2855, 108
  %v3161 = vpop.permute.xlu0 %3160
  %3162 = vrot.lane.b32.xlu0 %v2856, 108
  %v3163 = vpop.permute.xlu0 %3162
  %3164 = vrot.lane.b32.xlu0 %v2857, 108
  %v3165 = vpop.permute.xlu0 %3164
  %3166 = vrot.lane.b32.xlu0 %v2858, 108
  %v3167 = vpop.permute.xlu0 %3166
  %3168 = vrot.lane.b32.xlu0 %v2859, 108
  %v3169 = vpop.permute.xlu0 %3168
  %3170 = vrot.lane.b32.xlu0 %v2860, 108
  %v3171 = vpop.permute.xlu0 %3170
  %3172 = vrot.lane.b32.xlu0 %v2861, 108
  %v3173 = vpop.permute.xlu0 %3172
  %v3182 = vmax.f32 %v3150, %v3159
  %v3183 = vmax.f32 %v3151, %v3161
  %v3184 = vmax.f32 %v3152, %v3163
  %v3185 = vmax.f32 %v3153, %v3165
  %v3186 = vmax.f32 %v3154, %v3167
  %v3187 = vmax.f32 %v3155, %v3169
  %v3188 = vmax.f32 %v3156, %v3171
  %v3189 = vmax.f32 %v3157, %v3173
  %3190 = vrot.lane.b32.xlu0 %v2854, 106
  %v3191 = vpop.permute.xlu0 %3190
  %3192 = vrot.lane.b32.xlu0 %v2855, 106
  %v3193 = vpop.permute.xlu0 %3192
  %3194 = vrot.lane.b32.xlu0 %v2856, 106
  %v3195 = vpop.permute.xlu0 %3194
  %3196 = vrot.lane.b32.xlu0 %v2857, 106
  %v3197 = vpop.permute.xlu0 %3196
  %3198 = vrot.lane.b32.xlu0 %v2858, 106
  %v3199 = vpop.permute.xlu0 %3198
  %3200 = vrot.lane.b32.xlu0 %v2859, 106
  %v3201 = vpop.permute.xlu0 %3200
  %3202 = vrot.lane.b32.xlu0 %v2860, 106
  %v3203 = vpop.permute.xlu0 %3202
  %3204 = vrot.lane.b32.xlu0 %v2861, 106
  %v3205 = vpop.permute.xlu0 %3204
  %v3214 = vmax.f32 %v3182, %v3191
  %v3215 = vmax.f32 %v3183, %v3193
  %v3216 = vmax.f32 %v3184, %v3195
  %v3217 = vmax.f32 %v3185, %v3197
  %v3218 = vmax.f32 %v3186, %v3199
  %v3219 = vmax.f32 %v3187, %v3201
  %v3220 = vmax.f32 %v3188, %v3203
  %v3221 = vmax.f32 %v3189, %v3205
  %3222 = vrot.lane.b32.xlu0 %v2854, 104
  %v3223 = vpop.permute.xlu0 %3222
  %3224 = vrot.lane.b32.xlu0 %v2855, 104
  %v3225 = vpop.permute.xlu0 %3224
  %3226 = vrot.lane.b32.xlu0 %v2856, 104
  %v3227 = vpop.permute.xlu0 %3226
  %3228 = vrot.lane.b32.xlu0 %v2857, 104
  %v3229 = vpop.permute.xlu0 %3228
  %3230 = vrot.lane.b32.xlu0 %v2858, 104
  %v3231 = vpop.permute.xlu0 %3230
  %3232 = vrot.lane.b32.xlu0 %v2859, 104
  %v3233 = vpop.permute.xlu0 %3232
  %3234 = vrot.lane.b32.xlu0 %v2860, 104
  %v3235 = vpop.permute.xlu0 %3234
  %3236 = vrot.lane.b32.xlu0 %v2861, 104
  %v3237 = vpop.permute.xlu0 %3236
  %v3246 = vmax.f32 %v3214, %v3223
  %v3247 = vmax.f32 %v3215, %v3225
  %v3248 = vmax.f32 %v3216, %v3227
  %v3249 = vmax.f32 %v3217, %v3229
  %v3250 = vmax.f32 %v3218, %v3231
  %v3251 = vmax.f32 %v3219, %v3233
  %v3252 = vmax.f32 %v3220, %v3235
  %v3253 = vmax.f32 %v3221, %v3237
  %3254 = vrot.lane.b32.xlu0 %v2854, 102
  %v3255 = vpop.permute.xlu0 %3254
  %3256 = vrot.lane.b32.xlu0 %v2855, 102
  %v3257 = vpop.permute.xlu0 %3256
  %3258 = vrot.lane.b32.xlu0 %v2856, 102
  %v3259 = vpop.permute.xlu0 %3258
  %3260 = vrot.lane.b32.xlu0 %v2857, 102
  %v3261 = vpop.permute.xlu0 %3260
  %3262 = vrot.lane.b32.xlu0 %v2858, 102
  %v3263 = vpop.permute.xlu0 %3262
  %3264 = vrot.lane.b32.xlu0 %v2859, 102
  %v3265 = vpop.permute.xlu0 %3264
  %3266 = vrot.lane.b32.xlu0 %v2860, 102
  %v3267 = vpop.permute.xlu0 %3266
  %3268 = vrot.lane.b32.xlu0 %v2861, 102
  %v3269 = vpop.permute.xlu0 %3268
  %v3278 = vmax.f32 %v3246, %v3255
  %v3279 = vmax.f32 %v3247, %v3257
  %v3280 = vmax.f32 %v3248, %v3259
  %v3281 = vmax.f32 %v3249, %v3261
  %v3282 = vmax.f32 %v3250, %v3263
  %v3283 = vmax.f32 %v3251, %v3265
  %v3284 = vmax.f32 %v3252, %v3267
  %v3285 = vmax.f32 %v3253, %v3269
  %3286 = vrot.lane.b32.xlu0 %v2854, 100
  %v3287 = vpop.permute.xlu0 %3286
  %3288 = vrot.lane.b32.xlu0 %v2855, 100
  %v3289 = vpop.permute.xlu0 %3288
  %3290 = vrot.lane.b32.xlu0 %v2856, 100
  %v3291 = vpop.permute.xlu0 %3290
  %3292 = vrot.lane.b32.xlu0 %v2857, 100
  %v3293 = vpop.permute.xlu0 %3292
  %3294 = vrot.lane.b32.xlu0 %v2858, 100
  %v3295 = vpop.permute.xlu0 %3294
  %3296 = vrot.lane.b32.xlu0 %v2859, 100
  %v3297 = vpop.permute.xlu0 %3296
  %3298 = vrot.lane.b32.xlu0 %v2860, 100
  %v3299 = vpop.permute.xlu0 %3298
  %3300 = vrot.lane.b32.xlu0 %v2861, 100
  %v3301 = vpop.permute.xlu0 %3300
  %v3310 = vmax.f32 %v3278, %v3287
  %v3311 = vmax.f32 %v3279, %v3289
  %v3312 = vmax.f32 %v3280, %v3291
  %v3313 = vmax.f32 %v3281, %v3293
  %v3314 = vmax.f32 %v3282, %v3295
  %v3315 = vmax.f32 %v3283, %v3297
  %v3316 = vmax.f32 %v3284, %v3299
  %v3317 = vmax.f32 %v3285, %v3301
  %3318 = vrot.lane.b32.xlu0 %v2854, 98
  %v3319 = vpop.permute.xlu0 %3318
  %3320 = vrot.lane.b32.xlu0 %v2855, 98
  %v3321 = vpop.permute.xlu0 %3320
  %3322 = vrot.lane.b32.xlu0 %v2856, 98
  %v3323 = vpop.permute.xlu0 %3322
  %3324 = vrot.lane.b32.xlu0 %v2857, 98
  %v3325 = vpop.permute.xlu0 %3324
  %3326 = vrot.lane.b32.xlu0 %v2858, 98
  %v3327 = vpop.permute.xlu0 %3326
  %3328 = vrot.lane.b32.xlu0 %v2859, 98
  %v3329 = vpop.permute.xlu0 %3328
  %3330 = vrot.lane.b32.xlu0 %v2860, 98
  %v3331 = vpop.permute.xlu0 %3330
  %3332 = vrot.lane.b32.xlu0 %v2861, 98
  %v3333 = vpop.permute.xlu0 %3332
  %v3342 = vmax.f32 %v3310, %v3319
  %v3343 = vmax.f32 %v3311, %v3321
  %v3344 = vmax.f32 %v3312, %v3323
  %v3345 = vmax.f32 %v3313, %v3325
  %v3346 = vmax.f32 %v3314, %v3327
  %v3347 = vmax.f32 %v3315, %v3329
  %v3348 = vmax.f32 %v3316, %v3331
  %v3349 = vmax.f32 %v3317, %v3333
  %3350 = vst.msk [vmem:[%s61] sm:$0xff] %vm987, %v3342
  %3351 = vst.msk [vmem:[%s61 + $0x8] sm:$0xff] %vm987, %v3343
  %3352 = vst.msk [vmem:[%s61 + $0x10] sm:$0xff] %vm987, %v3344
  %3353 = vst.msk [vmem:[%s61 + $0x18] sm:$0xff] %vm987, %v3345
  %3354 = vst.msk [vmem:[%s61 + $0x20] sm:$0xff] %vm987, %v3346
  %3355 = vst.msk [vmem:[%s61 + $0x28] sm:$0xff] %vm987, %v3347
  %3356 = vst.msk [vmem:[%s61 + $0x30] sm:$0xff] %vm987, %v3348
  %3357 = vst.msk [vmem:[%s61 + $0x38] sm:$0xff] %vm987, %v3349
  // Predicated region
  $region122: #{pointnet_encoder_forward.1} parent=0 // pred_check
    _
  $region123: #{pointnet_encoder_forward.1} parent=0 // pred_check_branch
    %3359 = sbr.rel (0) target = $region125
  $region124: #{pointnet_encoder_forward.1} parent=0 // pred_region
    _
  $region125: #{pointnet_encoder_forward.1} parent=0 // pred_fallthru
    _
  // Predicated region
  $region126: #{pointnet_encoder_forward.1} parent=0 // pred_check
    _
  $region127: #{pointnet_encoder_forward.1} parent=0 // pred_check_branch
    %3361 = sbr.rel (0) target = $region129
  $region128: #{pointnet_encoder_forward.1} parent=0 // pred_region
    _
  $region129: #{pointnet_encoder_forward.1} parent=0 // pred_fallthru
    _

</llo_original>
